<compile_context>
chip_gen: v5e
topology: v5e:2x2
jax: 0.10.0
libtpu: 0.0.40
codegen_flags: <defaults>
</compile_context>

<pallas_src>
import numpy as np
import jax
import jax.numpy as jnp
from jax.experimental import pallas as pl
from jax.experimental.pallas import tpu as pltpu

# ---------------- problem sizes (small, consistent with the module) ----------------
BATCH      = 2
SEQ        = 8          # sequence_length
D_MODEL    = 32         # d_model
NHEAD      = 4
HEAD_DIM   = D_MODEL // NHEAD
FFN        = 64         # dim_feedforward
NUM_LAYERS = 2          # transformer_encoder_layer_nums
NECK_OUT   = 64         # neck_output
HIDDEN     = 32         # hidden_size
BIN        = 4          # bin_number  -> output dim BIN*BIN = 16
EPS        = 1e-5

ROWS       = BATCH * SEQ    # batch folded into the row (sublane) dimension
PER_LAYER  = 16             # tensors per encoder layer in kernel parameter layout
HEAD_ARGS  = 8              # tensors for neck + classification head


# ---------------- shared numerics ----------------
def _layer_norm(x, gamma, beta):
    # PyTorch LayerNorm over last dim, biased variance, eps=1e-5
    mean = jnp.mean(x, axis=-1, keepdims=True)
    var = jnp.mean((x - mean) ** 2, axis=-1, keepdims=True)
    return (x - mean) * jax.lax.rsqrt(var + EPS) * gamma + beta


# ---------------- fused kernel building blocks (operate on VMEM refs) ----------------
def _encoder_layer_block(x, lp):
    """One TransformerEncoderLayer. x: (ROWS, E) value; lp: 16 VMEM refs."""
    (wq_h, bq_h, wk_h, bk_h, wv_h, bv_h, wo_h, bo,
     ln1g, ln1b, w1_t, b1, w2_t, b2, ln2g, ln2b) = lp

    # ---- multi-head self attention ----
    # Head separation lives in the pre-split weights (H, E, Dh); per head we do one
    # batched (B, S, S) score matmul, and the output projection is accumulated per
    # head -> no lane slicing of computed values, no concatenate.
    attn = bo[...]                                               # (1, E); broadcasts on first add
    for h in range(NHEAD):
        q = (jnp.dot(x, wq_h[h], preferred_element_type=jnp.float32) + bq_h[h]
             ).reshape(BATCH, SEQ, HEAD_DIM)                     # scale already folded in
        k = (jnp.dot(x, wk_h[h], preferred_element_type=jnp.float32) + bk_h[h]
             ).reshape(BATCH, SEQ, HEAD_DIM)
        v = (jnp.dot(x, wv_h[h], preferred_element_type=jnp.float32) + bv_h[h]
             ).reshape(BATCH, SEQ, HEAD_DIM)

        s = jnp.einsum('bqd,bkd->bqk', q, k, preferred_element_type=jnp.float32)   # (B,S,S)
        s = s - jnp.max(s, axis=-1, keepdims=True)
        p = jnp.exp(s)
        p = p * pl.reciprocal(jnp.sum(p, axis=-1, keepdims=True), approx=True)
        o = jnp.einsum('bqk,bkd->bqd', p, v, preferred_element_type=jnp.float32)   # (B,S,Dh)

        attn = attn + jnp.dot(o.reshape(ROWS, HEAD_DIM), wo_h[h],
                              preferred_element_type=jnp.float32)                  # (ROWS,E)

    # residual + norm1
    x1 = _layer_norm(x + attn, ln1g[...], ln1b[...])

    # ---- feed forward ----
    h1 = jnp.maximum(jnp.dot(x1, w1_t[...], preferred_element_type=jnp.float32) + b1[...], 0.0)
    h2 = jnp.dot(h1, w2_t[...], preferred_element_type=jnp.float32) + b2[...]

    # residual + norm2
    return _layer_norm(x1 + h2, ln2g[...], ln2b[...])


def _neck_head_block(x, hp):
    """DHMNeck + DHMClassesHead.  x: (ROWS, E) -> (BATCH, BIN*BIN)."""
    wn3, bn, wm1_t, bm1, wm2_t, bm2, wc_t, bc = hp

    # DHMNeck flattens (S, E) per batch element.  Instead of an in-kernel
    # sublane->lane reshape, decompose the (S*E, NECK_OUT) matmul over sequence
    # positions using the pre-reshaped weight wn3: (S, E, NECK_OUT).
    rows = []
    for b in range(BATCH):
        xb = x[b * SEQ:(b + 1) * SEQ, :]                         # (S, E), aligned row slice
        acc = bn[...]                                            # (1, NECK_OUT)
        for s_idx in range(SEQ):
            acc = acc + jnp.dot(xb[s_idx:s_idx + 1, :], wn3[s_idx],
                                preferred_element_type=jnp.float32)
        rows.append(acc)
    r = jnp.maximum(jnp.concatenate(rows, axis=0), 0.0)          # (B, NECK_OUT), ReLU

    # DHMClassesHead
    h = jnp.maximum(jnp.dot(r, wm1_t[...], preferred_element_type=jnp.float32) + bm1[...], 0.0)
    h = jnp.maximum(jnp.dot(h, wm2_t[...], preferred_element_type=jnp.float32) + bm2[...], 0.0)
    return jnp.dot(h, wc_t[...], preferred_element_type=jnp.float32) + bc[...]


def fused_model_kernel(*refs):
    # refs = (x_ref, <NUM_LAYERS * 16 layer refs>, <8 neck/head refs>, out_ref)
    x_ref, out_ref = refs[0], refs[-1]
    x = x_ref[...]                                               # (ROWS, E)
    pos = 1
    for _ in range(NUM_LAYERS):
        x = _encoder_layer_block(x, refs[pos:pos + PER_LAYER])
        pos += PER_LAYER
    out_ref[...] = _neck_head_block(x, refs[pos:pos + HEAD_ARGS])


# ---------------- single fused pallas_call wrapper ----------------
@jax.jit
def transformer_encoder_v2_forward(src, kparams):
    # (B, S, E) -> (B*S, E): free row-major reshape outside the kernel.
    x2 = src.reshape(ROWS, D_MODEL)
    vmem = pl.BlockSpec(memory_space=pltpu.MemorySpace.VMEM)     # full-array VMEM residency
    n_inputs = 1 + len(kparams)
    return pl.pallas_call(
        fused_model_kernel,
        out_shape=jax.ShapeDtypeStruct((BATCH, BIN * BIN), jnp.float32),
        in_specs=[vmem] * n_inputs,
        out_specs=vmem,
    )(x2, *kparams)


# ---------------- one-time (init-time) parameter repacking for the kernel ----------------
def prepare_kernel_params(enc_params, head_params):
    """Split q/k/v per head, fold the 1/sqrt(head_dim) scale into wq/bq, and
    pre-transpose every weight so the kernel never transposes or lane-slices."""
    scale = 1.0 / float(np.sqrt(HEAD_DIM))

    def heads_w(w, s=1.0):          # w: (out=E, in=E) torch layout
        wt = w.T * s                                             # (E_in, E_out)
        return wt.reshape(D_MODEL, NHEAD, HEAD_DIM).transpose(1, 0, 2)   # (H, E, Dh)

    def heads_b(bvec, s=1.0):       # bvec: (1, E)
        return (bvec * s).reshape(1, NHEAD, HEAD_DIM).transpose(1, 0, 2)  # (H, 1, Dh)

    flat = []
    for p in enc_params:
        wqkv, bqkv, wo, bo, ln1g, ln1b, w1, b1, w2, b2, ln2g, ln2b = p
        wq, wk, wv = wqkv[0:D_MODEL], wqkv[D_MODEL:2 * D_MODEL], wqkv[2 * D_MODEL:]
        bq, bk, bv = bqkv[:, 0:D_MODEL], bqkv[:, D_MODEL:2 * D_MODEL], bqkv[:, 2 * D_MODEL:]
        flat += [heads_w(wq, scale), heads_b(bq, scale),
                 heads_w(wk),        heads_b(bk),
                 heads_w(wv),        heads_b(bv),
                 wo.T.reshape(NHEAD, HEAD_DIM, D_MODEL), bo,
                 ln1g, ln1b, w1.T, b1, w2.T, b2, ln2g, ln2b]

    wn, bn, wm1, bm1, wm2, bm2, wc, bc = head_params
    flat += [wn.T.reshape(SEQ, D_MODEL, NECK_OUT), bn,
             wm1.T, bm1, wm2.T, bm2, wc.T, bc]
    return tuple(jnp.asarray(a, jnp.float32) for a in flat)


# ---------------- pure-JAX reference (for correctness check) ----------------
def ref_forward(src, enc_params, head_params):
    x = src
    B, S, E = x.shape
    for p in enc_params:
        wqkv, bqkv, wo, bo, ln1g, ln1b, w1, b1, w2, b2, ln2g, ln2b = p
        qkv = x @ wqkv.T + bqkv
        q, k, v = jnp.split(qkv, 3, axis=-1)
        sh = lambda t: t.reshape(B, S, NHEAD, HEAD_DIM).transpose(0, 2, 1, 3)
        qh, kh, vh = sh(q), sh(k), sh(v)
        s = jnp.einsum('bhqd,bhkd->bhqk', qh, kh) / np.sqrt(HEAD_DIM)
        a = jax.nn.softmax(s, axis=-1)
        o = jnp.einsum('bhqk,bhkd->bhqd', a, vh).transpose(0, 2, 1, 3).reshape(B, S, E)
        o = o @ wo.T + bo
        x = _layer_norm(x + o, ln1g, ln1b)
        ff = jax.nn.relu(x @ w1.T + b1) @ w2.T + b2
        x = _layer_norm(x + ff, ln2g, ln2b)
    xf = x.reshape(B, -1)
    wn, bn, wm1, bm1, wm2, bm2, wc, bc = head_params
    r = jax.nn.relu(xf @ wn.T + bn)
    h = jax.nn.relu(r @ wm1.T + bm1)
    h = jax.nn.relu(h @ wm2.T + bm2)
    return h @ wc.T + bc


# ---------------- deterministic parameter init (canonical torch-like layout) ----------------
def init_params(key):
    def lin(k, out_f, in_f, scale=0.1):
        k1, k2 = jax.random.split(k)
        w = scale * jax.random.normal(k1, (out_f, in_f), jnp.float32)
        b = scale * jax.random.normal(k2, (1, out_f), jnp.float32)   # biases 2D: (1, out)
        return w, b

    enc_params = []
    for _ in range(NUM_LAYERS):
        key, *ks = jax.random.split(key, 6)
        wqkv, bqkv = lin(ks[0], 3 * D_MODEL, D_MODEL)
        wo, bo = lin(ks[1], D_MODEL, D_MODEL)
        w1, b1 = lin(ks[2], FFN, D_MODEL)
        w2, b2 = lin(ks[3], D_MODEL, FFN)
        ln1g = jnp.ones((1, D_MODEL), jnp.float32)
        ln1b = jnp.zeros((1, D_MODEL), jnp.float32)
        ln2g = jnp.ones((1, D_MODEL), jnp.float32)
        ln2b = jnp.zeros((1, D_MODEL), jnp.float32)
        enc_params.append((wqkv, bqkv, wo, bo, ln1g, ln1b, w1, b1, w2, b2, ln2g, ln2b))

    key, k1, k2, k3, k4 = jax.random.split(key, 5)
    wn, bn = lin(k1, NECK_OUT, D_MODEL * SEQ)
    wm1, bm1 = lin(k2, HIDDEN, NECK_OUT)
    wm2, bm2 = lin(k3, HIDDEN, HIDDEN)
    wc, bc = lin(k4, BIN * BIN, HIDDEN)
    head_params = (wn, bn, wm1, bm1, wm2, bm2, wc, bc)
    return enc_params, head_params


if __name__ == "__main__":
    key = jax.random.PRNGKey(0)
    key, kx, kp = jax.random.split(key, 3)
    src = jax.random.normal(kx, (BATCH, SEQ, D_MODEL), jnp.float32)   # (batch, seq, d_model)
    enc_params, head_params = init_params(kp)
    kparams = prepare_kernel_params(enc_params, head_params)          # done once, at init

    out = transformer_encoder_v2_forward(src, kparams)
    out = jax.block_until_ready(out)
    assert out.shape == (BATCH, BIN * BIN), out.shape

    ref = ref_forward(src, enc_params, head_params)
    # Tolerance slightly looser than 1e-4 because softmax uses the EUP approximate
    # reciprocal (rel. err ~2^-12); outputs are O(0.1-1) so 2e-3 is comfortably tight.
    np.testing.assert_allclose(np.asarray(out), np.asarray(ref), rtol=2e-3, atol=2e-3)

    print("KERNEL_OK")
</pallas_src>

<mosaic_0001>
module attributes {stable_mosaic.version = 11 : i64} {
  func.func @fused_model_kernel(%arg0: memref<16x32xf32, #tpu.memory_space<vmem>>, %arg1: memref<4x32x8xf32, #tpu.memory_space<vmem>>, %arg2: memref<4x1x8xf32, #tpu.memory_space<vmem>>, %arg3: memref<4x32x8xf32, #tpu.memory_space<vmem>>, %arg4: memref<4x1x8xf32, #tpu.memory_space<vmem>>, %arg5: memref<4x32x8xf32, #tpu.memory_space<vmem>>, %arg6: memref<4x1x8xf32, #tpu.memory_space<vmem>>, %arg7: memref<4x8x32xf32, #tpu.memory_space<vmem>>, %arg8: memref<1x32xf32, #tpu.memory_space<vmem>>, %arg9: memref<1x32xf32, #tpu.memory_space<vmem>>, %arg10: memref<1x32xf32, #tpu.memory_space<vmem>>, %arg11: memref<32x64xf32, #tpu.memory_space<vmem>>, %arg12: memref<1x64xf32, #tpu.memory_space<vmem>>, %arg13: memref<64x32xf32, #tpu.memory_space<vmem>>, %arg14: memref<1x32xf32, #tpu.memory_space<vmem>>, %arg15: memref<1x32xf32, #tpu.memory_space<vmem>>, %arg16: memref<1x32xf32, #tpu.memory_space<vmem>>, %arg17: memref<4x32x8xf32, #tpu.memory_space<vmem>>, %arg18: memref<4x1x8xf32, #tpu.memory_space<vmem>>, %arg19: memref<4x32x8xf32, #tpu.memory_space<vmem>>, %arg20: memref<4x1x8xf32, #tpu.memory_space<vmem>>, %arg21: memref<4x32x8xf32, #tpu.memory_space<vmem>>, %arg22: memref<4x1x8xf32, #tpu.memory_space<vmem>>, %arg23: memref<4x8x32xf32, #tpu.memory_space<vmem>>, %arg24: memref<1x32xf32, #tpu.memory_space<vmem>>, %arg25: memref<1x32xf32, #tpu.memory_space<vmem>>, %arg26: memref<1x32xf32, #tpu.memory_space<vmem>>, %arg27: memref<32x64xf32, #tpu.memory_space<vmem>>, %arg28: memref<1x64xf32, #tpu.memory_space<vmem>>, %arg29: memref<64x32xf32, #tpu.memory_space<vmem>>, %arg30: memref<1x32xf32, #tpu.memory_space<vmem>>, %arg31: memref<1x32xf32, #tpu.memory_space<vmem>>, %arg32: memref<1x32xf32, #tpu.memory_space<vmem>>, %arg33: memref<8x32x64xf32, #tpu.memory_space<vmem>>, %arg34: memref<1x64xf32, #tpu.memory_space<vmem>>, %arg35: memref<64x32xf32, #tpu.memory_space<vmem>>, %arg36: memref<1x32xf32, #tpu.memory_space<vmem>>, %arg37: memref<32x32xf32, #tpu.memory_space<vmem>>, %arg38: memref<1x32xf32, #tpu.memory_space<vmem>>, %arg39: memref<32x16xf32, #tpu.memory_space<vmem>>, %arg40: memref<1x16xf32, #tpu.memory_space<vmem>>, %arg41: memref<2x16xf32, #tpu.memory_space<vmem>>) attributes {dimension_semantics = [], scalar_prefetch = 0 : i64, scratch_operands = 0 : i64, tpu.core_type = #tpu.core_type<tc>} {
    %c0 = arith.constant 0 : index
    %c0_0 = arith.constant 0 : index
    %0 = vector.load %arg0[%c0, %c0_0] : memref<16x32xf32, #tpu.memory_space<vmem>>, vector<16x32xf32>
    %c0_1 = arith.constant 0 : index
    %c0_2 = arith.constant 0 : index
    %1 = vector.load %arg8[%c0_1, %c0_2] : memref<1x32xf32, #tpu.memory_space<vmem>>, vector<1x32xf32>
    %c0_3 = arith.constant 0 : index
    %c0_4 = arith.constant 0 : index
    %c0_5 = arith.constant 0 : index
    %2 = vector.load %arg1[%c0_3, %c0_4, %c0_5] : memref<4x32x8xf32, #tpu.memory_space<vmem>>, vector<1x32x8xf32>
    %3 = vector.shape_cast %2 : vector<1x32x8xf32> to vector<32x8xf32>
    %cst = arith.constant dense<0.000000e+00> : vector<16x8xf32>
    %4 = tpu.matmul %0, %3, %cst {dimension_numbers = #tpu.dot_dimension_numbers<[1], [0], [0], [1], [0, 0, 1, 1], [], []>} : vector<16x32xf32>, vector<32x8xf32>, vector<16x8xf32> -> vector<16x8xf32>
    %c0_6 = arith.constant 0 : index
    %c0_7 = arith.constant 0 : index
    %c0_8 = arith.constant 0 : index
    %5 = vector.load %arg2[%c0_6, %c0_7, %c0_8] : memref<4x1x8xf32, #tpu.memory_space<vmem>>, vector<1x1x8xf32>
    %6 = vector.shape_cast %5 : vector<1x1x8xf32> to vector<1x8xf32>
    %7 = vector.broadcast %6 : vector<1x8xf32> to vector<16x8xf32>
    %8 = arith.addf %4, %7 : vector<16x8xf32>
    %9 = vector.shape_cast %8 : vector<16x8xf32> to vector<2x8x8xf32>
    %c0_9 = arith.constant 0 : index
    %c0_10 = arith.constant 0 : index
    %c0_11 = arith.constant 0 : index
    %10 = vector.load %arg3[%c0_9, %c0_10, %c0_11] : memref<4x32x8xf32, #tpu.memory_space<vmem>>, vector<1x32x8xf32>
    %11 = vector.shape_cast %10 : vector<1x32x8xf32> to vector<32x8xf32>
    %cst_12 = arith.constant dense<0.000000e+00> : vector<16x8xf32>
    %12 = tpu.matmul %0, %11, %cst_12 {dimension_numbers = #tpu.dot_dimension_numbers<[1], [0], [0], [1], [0, 0, 1, 1], [], []>} : vector<16x32xf32>, vector<32x8xf32>, vector<16x8xf32> -> vector<16x8xf32>
    %c0_13 = arith.constant 0 : index
    %c0_14 = arith.constant 0 : index
    %c0_15 = arith.constant 0 : index
    %13 = vector.load %arg4[%c0_13, %c0_14, %c0_15] : memref<4x1x8xf32, #tpu.memory_space<vmem>>, vector<1x1x8xf32>
    %14 = vector.shape_cast %13 : vector<1x1x8xf32> to vector<1x8xf32>
    %15 = vector.broadcast %14 : vector<1x8xf32> to vector<16x8xf32>
    %16 = arith.addf %12, %15 : vector<16x8xf32>
    %17 = vector.shape_cast %16 : vector<16x8xf32> to vector<2x8x8xf32>
    %c0_16 = arith.constant 0 : index
    %c0_17 = arith.constant 0 : index
    %c0_18 = arith.constant 0 : index
    %18 = vector.load %arg5[%c0_16, %c0_17, %c0_18] : memref<4x32x8xf32, #tpu.memory_space<vmem>>, vector<1x32x8xf32>
    %19 = vector.shape_cast %18 : vector<1x32x8xf32> to vector<32x8xf32>
    %cst_19 = arith.constant dense<0.000000e+00> : vector<16x8xf32>
    %20 = tpu.matmul %0, %19, %cst_19 {dimension_numbers = #tpu.dot_dimension_numbers<[1], [0], [0], [1], [0, 0, 1, 1], [], []>} : vector<16x32xf32>, vector<32x8xf32>, vector<16x8xf32> -> vector<16x8xf32>
    %c0_20 = arith.constant 0 : index
    %c0_21 = arith.constant 0 : index
    %c0_22 = arith.constant 0 : index
    %21 = vector.load %arg6[%c0_20, %c0_21, %c0_22] : memref<4x1x8xf32, #tpu.memory_space<vmem>>, vector<1x1x8xf32>
    %22 = vector.shape_cast %21 : vector<1x1x8xf32> to vector<1x8xf32>
    %23 = vector.broadcast %22 : vector<1x8xf32> to vector<16x8xf32>
    %24 = arith.addf %20, %23 : vector<16x8xf32>
    %25 = vector.shape_cast %24 : vector<16x8xf32> to vector<2x8x8xf32>
    "tpu.trace_start"() <{level = 10 : i32, message = "bqd,bkd->bqk"}> : () -> ()
    %cst_23 = arith.constant dense<0.000000e+00> : vector<2x8x8xf32>
    %26 = tpu.matmul %9, %17, %cst_23 {dimension_numbers = #tpu.dot_dimension_numbers<[2], [2], [1], [1], [0, 0, 0, 1, 1, 1], [0], [0]>} : vector<2x8x8xf32>, vector<2x8x8xf32>, vector<2x8x8xf32> -> vector<2x8x8xf32>
    "tpu.trace_stop"() : () -> ()
    %cst_24 = arith.constant dense<0xFF800000> : vector<2x8xf32>
    %27 = vector.multi_reduction <maximumf>, %26, %cst_24 [2] : vector<2x8x8xf32> to vector<2x8xf32>
    %28 = vector.shape_cast %27 : vector<2x8xf32> to vector<2x8x1xf32>
    %29 = vector.broadcast %28 : vector<2x8x1xf32> to vector<2x8x8xf32>
    %30 = arith.subf %26, %29 : vector<2x8x8xf32>
    %31 = math.exp %30 : vector<2x8x8xf32>
    %cst_25 = arith.constant dense<0.000000e+00> : vector<2x8xf32>
    %32 = vector.multi_reduction <add>, %31, %cst_25 [2] : vector<2x8x8xf32> to vector<2x8xf32>
    %33 = vector.shape_cast %32 : vector<2x8xf32> to vector<2x8x1xf32>
    %34 = tpu.reciprocal %33 {approx = true} : vector<2x8x1xf32> -> vector<2x8x1xf32>
    %35 = vector.broadcast %34 : vector<2x8x1xf32> to vector<2x8x8xf32>
    %36 = arith.mulf %31, %35 : vector<2x8x8xf32>
    "tpu.trace_start"() <{level = 10 : i32, message = "bqk,bkd->bqd"}> : () -> ()
    %cst_26 = arith.constant dense<0.000000e+00> : vector<2x8x8xf32>
    %37 = tpu.matmul %36, %25, %cst_26 {dimension_numbers = #tpu.dot_dimension_numbers<[2], [1], [1], [2], [0, 0, 0, 1, 1, 2], [0], [0]>} : vector<2x8x8xf32>, vector<2x8x8xf32>, vector<2x8x8xf32> -> vector<2x8x8xf32>
    "tpu.trace_stop"() : () -> ()
    %38 = vector.shape_cast %37 : vector<2x8x8xf32> to vector<16x8xf32>
    %c0_27 = arith.constant 0 : index
    %c0_28 = arith.constant 0 : index
    %c0_29 = arith.constant 0 : index
    %39 = vector.load %arg7[%c0_27, %c0_28, %c0_29] : memref<4x8x32xf32, #tpu.memory_space<vmem>>, vector<1x8x32xf32>
    %40 = vector.shape_cast %39 : vector<1x8x32xf32> to vector<8x32xf32>
    %cst_30 = arith.constant dense<0.000000e+00> : vector<16x32xf32>
    %41 = tpu.matmul %38, %40, %cst_30 {dimension_numbers = #tpu.dot_dimension_numbers<[1], [0], [0], [1], [0, 0, 1, 1], [], []>} : vector<16x8xf32>, vector<8x32xf32>, vector<16x32xf32> -> vector<16x32xf32>
    %42 = vector.broadcast %1 : vector<1x32xf32> to vector<16x32xf32>
    %43 = arith.addf %42, %41 : vector<16x32xf32>
    %c1 = arith.constant 1 : index
    %c0_31 = arith.constant 0 : index
    %c0_32 = arith.constant 0 : index
    %44 = vector.load %arg1[%c1, %c0_31, %c0_32] : memref<4x32x8xf32, #tpu.memory_space<vmem>>, vector<1x32x8xf32>
    %45 = vector.shape_cast %44 : vector<1x32x8xf32> to vector<32x8xf32>
    %cst_33 = arith.constant dense<0.000000e+00> : vector<16x8xf32>
    %46 = tpu.matmul %0, %45, %cst_33 {dimension_numbers = #tpu.dot_dimension_numbers<[1], [0], [0], [1], [0, 0, 1, 1], [], []>} : vector<16x32xf32>, vector<32x8xf32>, vector<16x8xf32> -> vector<16x8xf32>
    %c1_34 = arith.constant 1 : index
    %c0_35 = arith.constant 0 : index
    %c0_36 = arith.constant 0 : index
    %47 = vector.load %arg2[%c1_34, %c0_35, %c0_36] : memref<4x1x8xf32, #tpu.memory_space<vmem>>, vector<1x1x8xf32>
    %48 = vector.shape_cast %47 : vector<1x1x8xf32> to vector<1x8xf32>
    %49 = vector.broadcast %48 : vector<1x8xf32> to vector<16x8xf32>
    %50 = arith.addf %46, %49 : vector<16x8xf32>
    %51 = vector.shape_cast %50 : vector<16x8xf32> to vector<2x8x8xf32>
    %c1_37 = arith.constant 1 : index
    %c0_38 = arith.constant 0 : index
    %c0_39 = arith.constant 0 : index
    %52 = vector.load %arg3[%c1_37, %c0_38, %c0_39] : memref<4x32x8xf32, #tpu.memory_space<vmem>>, vector<1x32x8xf32>
    %53 = vector.shape_cast %52 : vector<1x32x8xf32> to vector<32x8xf32>
    %cst_40 = arith.constant dense<0.000000e+00> : vector<16x8xf32>
    %54 = tpu.matmul %0, %53, %cst_40 {dimension_numbers = #tpu.dot_dimension_numbers<[1], [0], [0], [1], [0, 0, 1, 1], [], []>} : vector<16x32xf32>, vector<32x8xf32>, vector<16x8xf32> -> vector<16x8xf32>
    %c1_41 = arith.constant 1 : index
    %c0_42 = arith.constant 0 : index
    %c0_43 = arith.constant 0 : index
    %55 = vector.load %arg4[%c1_41, %c0_42, %c0_43] : memref<4x1x8xf32, #tpu.memory_space<vmem>>, vector<1x1x8xf32>
    %56 = vector.shape_cast %55 : vector<1x1x8xf32> to vector<1x8xf32>
    %57 = vector.broadcast %56 : vector<1x8xf32> to vector<16x8xf32>
    %58 = arith.addf %54, %57 : vector<16x8xf32>
    %59 = vector.shape_cast %58 : vector<16x8xf32> to vector<2x8x8xf32>
    %c1_44 = arith.constant 1 : index
    %c0_45 = arith.constant 0 : index
    %c0_46 = arith.constant 0 : index
    %60 = vector.load %arg5[%c1_44, %c0_45, %c0_46] : memref<4x32x8xf32, #tpu.memory_space<vmem>>, vector<1x32x8xf32>
    %61 = vector.shape_cast %60 : vector<1x32x8xf32> to vector<32x8xf32>
    %cst_47 = arith.constant dense<0.000000e+00> : vector<16x8xf32>
    %62 = tpu.matmul %0, %61, %cst_47 {dimension_numbers = #tpu.dot_dimension_numbers<[1], [0], [0], [1], [0, 0, 1, 1], [], []>} : vector<16x32xf32>, vector<32x8xf32>, vector<16x8xf32> -> vector<16x8xf32>
    %c1_48 = arith.constant 1 : index
    %c0_49 = arith.constant 0 : index
    %c0_50 = arith.constant 0 : index
    %63 = vector.load %arg6[%c1_48, %c0_49, %c0_50] : memref<4x1x8xf32, #tpu.memory_space<vmem>>, vector<1x1x8xf32>
    %64 = vector.shape_cast %63 : vector<1x1x8xf32> to vector<1x8xf32>
    %65 = vector.broadcast %64 : vector<1x8xf32> to vector<16x8xf32>
    %66 = arith.addf %62, %65 : vector<16x8xf32>
    %67 = vector.shape_cast %66 : vector<16x8xf32> to vector<2x8x8xf32>
    "tpu.trace_start"() <{level = 10 : i32, message = "bqd,bkd->bqk"}> : () -> ()
    %cst_51 = arith.constant dense<0.000000e+00> : vector<2x8x8xf32>
    %68 = tpu.matmul %51, %59, %cst_51 {dimension_numbers = #tpu.dot_dimension_numbers<[2], [2], [1], [1], [0, 0, 0, 1, 1, 1], [0], [0]>} : vector<2x8x8xf32>, vector<2x8x8xf32>, vector<2x8x8xf32> -> vector<2x8x8xf32>
    "tpu.trace_stop"() : () -> ()
    %cst_52 = arith.constant dense<0xFF800000> : vector<2x8xf32>
    %69 = vector.multi_reduction <maximumf>, %68, %cst_52 [2] : vector<2x8x8xf32> to vector<2x8xf32>
    %70 = vector.shape_cast %69 : vector<2x8xf32> to vector<2x8x1xf32>
    %71 = vector.broadcast %70 : vector<2x8x1xf32> to vector<2x8x8xf32>
    %72 = arith.subf %68, %71 : vector<2x8x8xf32>
    %73 = math.exp %72 : vector<2x8x8xf32>
    %cst_53 = arith.constant dense<0.000000e+00> : vector<2x8xf32>
    %74 = vector.multi_reduction <add>, %73, %cst_53 [2] : vector<2x8x8xf32> to vector<2x8xf32>
    %75 = vector.shape_cast %74 : vector<2x8xf32> to vector<2x8x1xf32>
    %76 = tpu.reciprocal %75 {approx = true} : vector<2x8x1xf32> -> vector<2x8x1xf32>
    %77 = vector.broadcast %76 : vector<2x8x1xf32> to vector<2x8x8xf32>
    %78 = arith.mulf %73, %77 : vector<2x8x8xf32>
    "tpu.trace_start"() <{level = 10 : i32, message = "bqk,bkd->bqd"}> : () -> ()
    %cst_54 = arith.constant dense<0.000000e+00> : vector<2x8x8xf32>
    %79 = tpu.matmul %78, %67, %cst_54 {dimension_numbers = #tpu.dot_dimension_numbers<[2], [1], [1], [2], [0, 0, 0, 1, 1, 2], [0], [0]>} : vector<2x8x8xf32>, vector<2x8x8xf32>, vector<2x8x8xf32> -> vector<2x8x8xf32>
    "tpu.trace_stop"() : () -> ()
    %80 = vector.shape_cast %79 : vector<2x8x8xf32> to vector<16x8xf32>
    %c1_55 = arith.constant 1 : index
    %c0_56 = arith.constant 0 : index
    %c0_57 = arith.constant 0 : index
    %81 = vector.load %arg7[%c1_55, %c0_56, %c0_57] : memref<4x8x32xf32, #tpu.memory_space<vmem>>, vector<1x8x32xf32>
    %82 = vector.shape_cast %81 : vector<1x8x32xf32> to vector<8x32xf32>
    %cst_58 = arith.constant dense<0.000000e+00> : vector<16x32xf32>
    %83 = tpu.matmul %80, %82, %cst_58 {dimension_numbers = #tpu.dot_dimension_numbers<[1], [0], [0], [1], [0, 0, 1, 1], [], []>} : vector<16x8xf32>, vector<8x32xf32>, vector<16x32xf32> -> vector<16x32xf32>
    %84 = arith.addf %43, %83 : vector<16x32xf32>
    %c2 = arith.constant 2 : index
    %c0_59 = arith.constant 0 : index
    %c0_60 = arith.constant 0 : index
    %85 = vector.load %arg1[%c2, %c0_59, %c0_60] : memref<4x32x8xf32, #tpu.memory_space<vmem>>, vector<1x32x8xf32>
    %86 = vector.shape_cast %85 : vector<1x32x8xf32> to vector<32x8xf32>
    %cst_61 = arith.constant dense<0.000000e+00> : vector<16x8xf32>
    %87 = tpu.matmul %0, %86, %cst_61 {dimension_numbers = #tpu.dot_dimension_numbers<[1], [0], [0], [1], [0, 0, 1, 1], [], []>} : vector<16x32xf32>, vector<32x8xf32>, vector<16x8xf32> -> vector<16x8xf32>
    %c2_62 = arith.constant 2 : index
    %c0_63 = arith.constant 0 : index
    %c0_64 = arith.constant 0 : index
    %88 = vector.load %arg2[%c2_62, %c0_63, %c0_64] : memref<4x1x8xf32, #tpu.memory_space<vmem>>, vector<1x1x8xf32>
    %89 = vector.shape_cast %88 : vector<1x1x8xf32> to vector<1x8xf32>
    %90 = vector.broadcast %89 : vector<1x8xf32> to vector<16x8xf32>
    %91 = arith.addf %87, %90 : vector<16x8xf32>
    %92 = vector.shape_cast %91 : vector<16x8xf32> to vector<2x8x8xf32>
    %c2_65 = arith.constant 2 : index
    %c0_66 = arith.constant 0 : index
    %c0_67 = arith.constant 0 : index
    %93 = vector.load %arg3[%c2_65, %c0_66, %c0_67] : memref<4x32x8xf32, #tpu.memory_space<vmem>>, vector<1x32x8xf32>
    %94 = vector.shape_cast %93 : vector<1x32x8xf32> to vector<32x8xf32>
    %cst_68 = arith.constant dense<0.000000e+00> : vector<16x8xf32>
    %95 = tpu.matmul %0, %94, %cst_68 {dimension_numbers = #tpu.dot_dimension_numbers<[1], [0], [0], [1], [0, 0, 1, 1], [], []>} : vector<16x32xf32>, vector<32x8xf32>, vector<16x8xf32> -> vector<16x8xf32>
    %c2_69 = arith.constant 2 : index
    %c0_70 = arith.constant 0 : index
    %c0_71 = arith.constant 0 : index
    %96 = vector.load %arg4[%c2_69, %c0_70, %c0_71] : memref<4x1x8xf32, #tpu.memory_space<vmem>>, vector<1x1x8xf32>
    %97 = vector.shape_cast %96 : vector<1x1x8xf32> to vector<1x8xf32>
    %98 = vector.broadcast %97 : vector<1x8xf32> to vector<16x8xf32>
    %99 = arith.addf %95, %98 : vector<16x8xf32>
    %100 = vector.shape_cast %99 : vector<16x8xf32> to vector<2x8x8xf32>
    %c2_72 = arith.constant 2 : index
    %c0_73 = arith.constant 0 : index
    %c0_74 = arith.constant 0 : index
    %101 = vector.load %arg5[%c2_72, %c0_73, %c0_74] : memref<4x32x8xf32, #tpu.memory_space<vmem>>, vector<1x32x8xf32>
    %102 = vector.shape_cast %101 : vector<1x32x8xf32> to vector<32x8xf32>
    %cst_75 = arith.constant dense<0.000000e+00> : vector<16x8xf32>
    %103 = tpu.matmul %0, %102, %cst_75 {dimension_numbers = #tpu.dot_dimension_numbers<[1], [0], [0], [1], [0, 0, 1, 1], [], []>} : vector<16x32xf32>, vector<32x8xf32>, vector<16x8xf32> -> vector<16x8xf32>
    %c2_76 = arith.constant 2 : index
    %c0_77 = arith.constant 0 : index
    %c0_78 = arith.constant 0 : index
    %104 = vector.load %arg6[%c2_76, %c0_77, %c0_78] : memref<4x1x8xf32, #tpu.memory_space<vmem>>, vector<1x1x8xf32>
    %105 = vector.shape_cast %104 : vector<1x1x8xf32> to vector<1x8xf32>
    %106 = vector.broadcast %105 : vector<1x8xf32> to vector<16x8xf32>
    %107 = arith.addf %103, %106 : vector<16x8xf32>
    %108 = vector.shape_cast %107 : vector<16x8xf32> to vector<2x8x8xf32>
    "tpu.trace_start"() <{level = 10 : i32, message = "bqd,bkd->bqk"}> : () -> ()
    %cst_79 = arith.constant dense<0.000000e+00> : vector<2x8x8xf32>
    %109 = tpu.matmul %92, %100, %cst_79 {dimension_numbers = #tpu.dot_dimension_numbers<[2], [2], [1], [1], [0, 0, 0, 1, 1, 1], [0], [0]>} : vector<2x8x8xf32>, vector<2x8x8xf32>, vector<2x8x8xf32> -> vector<2x8x8xf32>
    "tpu.trace_stop"() : () -> ()
    %cst_80 = arith.constant dense<0xFF800000> : vector<2x8xf32>
    %110 = vector.multi_reduction <maximumf>, %109, %cst_80 [2] : vector<2x8x8xf32> to vector<2x8xf32>
    %111 = vector.shape_cast %110 : vector<2x8xf32> to vector<2x8x1xf32>
    %112 = vector.broadcast %111 : vector<2x8x1xf32> to vector<2x8x8xf32>
    %113 = arith.subf %109, %112 : vector<2x8x8xf32>
    %114 = math.exp %113 : vector<2x8x8xf32>
    %cst_81 = arith.constant dense<0.000000e+00> : vector<2x8xf32>
    %115 = vector.multi_reduction <add>, %114, %cst_81 [2] : vector<2x8x8xf32> to vector<2x8xf32>
    %116 = vector.shape_cast %115 : vector<2x8xf32> to vector<2x8x1xf32>
    %117 = tpu.reciprocal %116 {approx = true} : vector<2x8x1xf32> -> vector<2x8x1xf32>
    %118 = vector.broadcast %117 : vector<2x8x1xf32> to vector<2x8x8xf32>
    %119 = arith.mulf %114, %118 : vector<2x8x8xf32>
    "tpu.trace_start"() <{level = 10 : i32, message = "bqk,bkd->bqd"}> : () -> ()
    %cst_82 = arith.constant dense<0.000000e+00> : vector<2x8x8xf32>
    %120 = tpu.matmul %119, %108, %cst_82 {dimension_numbers = #tpu.dot_dimension_numbers<[2], [1], [1], [2], [0, 0, 0, 1, 1, 2], [0], [0]>} : vector<2x8x8xf32>, vector<2x8x8xf32>, vector<2x8x8xf32> -> vector<2x8x8xf32>
    "tpu.trace_stop"() : () -> ()
    %121 = vector.shape_cast %120 : vector<2x8x8xf32> to vector<16x8xf32>
    %c2_83 = arith.constant 2 : index
    %c0_84 = arith.constant 0 : index
    %c0_85 = arith.constant 0 : index
    %122 = vector.load %arg7[%c2_83, %c0_84, %c0_85] : memref<4x8x32xf32, #tpu.memory_space<vmem>>, vector<1x8x32xf32>
    %123 = vector.shape_cast %122 : vector<1x8x32xf32> to vector<8x32xf32>
    %cst_86 = arith.constant dense<0.000000e+00> : vector<16x32xf32>
    %124 = tpu.matmul %121, %123, %cst_86 {dimension_numbers = #tpu.dot_dimension_numbers<[1], [0], [0], [1], [0, 0, 1, 1], [], []>} : vector<16x8xf32>, vector<8x32xf32>, vector<16x32xf32> -> vector<16x32xf32>
    %125 = arith.addf %84, %124 : vector<16x32xf32>
    %c3 = arith.constant 3 : index
    %c0_87 = arith.constant 0 : index
    %c0_88 = arith.constant 0 : index
    %126 = vector.load %arg1[%c3, %c0_87, %c0_88] : memref<4x32x8xf32, #tpu.memory_space<vmem>>, vector<1x32x8xf32>
    %127 = vector.shape_cast %126 : vector<1x32x8xf32> to vector<32x8xf32>
    %cst_89 = arith.constant dense<0.000000e+00> : vector<16x8xf32>
    %128 = tpu.matmul %0, %127, %cst_89 {dimension_numbers = #tpu.dot_dimension_numbers<[1], [0], [0], [1], [0, 0, 1, 1], [], []>} : vector<16x32xf32>, vector<32x8xf32>, vector<16x8xf32> -> vector<16x8xf32>
    %c3_90 = arith.constant 3 : index
    %c0_91 = arith.constant 0 : index
    %c0_92 = arith.constant 0 : index
    %129 = vector.load %arg2[%c3_90, %c0_91, %c0_92] : memref<4x1x8xf32, #tpu.memory_space<vmem>>, vector<1x1x8xf32>
    %130 = vector.shape_cast %129 : vector<1x1x8xf32> to vector<1x8xf32>
    %131 = vector.broadcast %130 : vector<1x8xf32> to vector<16x8xf32>
    %132 = arith.addf %128, %131 : vector<16x8xf32>
    %133 = vector.shape_cast %132 : vector<16x8xf32> to vector<2x8x8xf32>
    %c3_93 = arith.constant 3 : index
    %c0_94 = arith.constant 0 : index
    %c0_95 = arith.constant 0 : index
    %134 = vector.load %arg3[%c3_93, %c0_94, %c0_95] : memref<4x32x8xf32, #tpu.memory_space<vmem>>, vector<1x32x8xf32>
    %135 = vector.shape_cast %134 : vector<1x32x8xf32> to vector<32x8xf32>
    %cst_96 = arith.constant dense<0.000000e+00> : vector<16x8xf32>
    %136 = tpu.matmul %0, %135, %cst_96 {dimension_numbers = #tpu.dot_dimension_numbers<[1], [0], [0], [1], [0, 0, 1, 1], [], []>} : vector<16x32xf32>, vector<32x8xf32>, vector<16x8xf32> -> vector<16x8xf32>
    %c3_97 = arith.constant 3 : index
    %c0_98 = arith.constant 0 : index
    %c0_99 = arith.constant 0 : index
    %137 = vector.load %arg4[%c3_97, %c0_98, %c0_99] : memref<4x1x8xf32, #tpu.memory_space<vmem>>, vector<1x1x8xf32>
    %138 = vector.shape_cast %137 : vector<1x1x8xf32> to vector<1x8xf32>
    %139 = vector.broadcast %138 : vector<1x8xf32> to vector<16x8xf32>
    %140 = arith.addf %136, %139 : vector<16x8xf32>
    %141 = vector.shape_cast %140 : vector<16x8xf32> to vector<2x8x8xf32>
    %c3_100 = arith.constant 3 : index
    %c0_101 = arith.constant 0 : index
    %c0_102 = arith.constant 0 : index
    %142 = vector.load %arg5[%c3_100, %c0_101, %c0_102] : memref<4x32x8xf32, #tpu.memory_space<vmem>>, vector<1x32x8xf32>
    %143 = vector.shape_cast %142 : vector<1x32x8xf32> to vector<32x8xf32>
    %cst_103 = arith.constant dense<0.000000e+00> : vector<16x8xf32>
    %144 = tpu.matmul %0, %143, %cst_103 {dimension_numbers = #tpu.dot_dimension_numbers<[1], [0], [0], [1], [0, 0, 1, 1], [], []>} : vector<16x32xf32>, vector<32x8xf32>, vector<16x8xf32> -> vector<16x8xf32>
    %c3_104 = arith.constant 3 : index
    %c0_105 = arith.constant 0 : index
    %c0_106 = arith.constant 0 : index
    %145 = vector.load %arg6[%c3_104, %c0_105, %c0_106] : memref<4x1x8xf32, #tpu.memory_space<vmem>>, vector<1x1x8xf32>
    %146 = vector.shape_cast %145 : vector<1x1x8xf32> to vector<1x8xf32>
    %147 = vector.broadcast %146 : vector<1x8xf32> to vector<16x8xf32>
    %148 = arith.addf %144, %147 : vector<16x8xf32>
    %149 = vector.shape_cast %148 : vector<16x8xf32> to vector<2x8x8xf32>
    "tpu.trace_start"() <{level = 10 : i32, message = "bqd,bkd->bqk"}> : () -> ()
    %cst_107 = arith.constant dense<0.000000e+00> : vector<2x8x8xf32>
    %150 = tpu.matmul %133, %141, %cst_107 {dimension_numbers = #tpu.dot_dimension_numbers<[2], [2], [1], [1], [0, 0, 0, 1, 1, 1], [0], [0]>} : vector<2x8x8xf32>, vector<2x8x8xf32>, vector<2x8x8xf32> -> vector<2x8x8xf32>
    "tpu.trace_stop"() : () -> ()
    %cst_108 = arith.constant dense<0xFF800000> : vector<2x8xf32>
    %151 = vector.multi_reduction <maximumf>, %150, %cst_108 [2] : vector<2x8x8xf32> to vector<2x8xf32>
    %152 = vector.shape_cast %151 : vector<2x8xf32> to vector<2x8x1xf32>
    %153 = vector.broadcast %152 : vector<2x8x1xf32> to vector<2x8x8xf32>
    %154 = arith.subf %150, %153 : vector<2x8x8xf32>
    %155 = math.exp %154 : vector<2x8x8xf32>
    %cst_109 = arith.constant dense<0.000000e+00> : vector<2x8xf32>
    %156 = vector.multi_reduction <add>, %155, %cst_109 [2] : vector<2x8x8xf32> to vector<2x8xf32>
    %157 = vector.shape_cast %156 : vector<2x8xf32> to vector<2x8x1xf32>
    %158 = tpu.reciprocal %157 {approx = true} : vector<2x8x1xf32> -> vector<2x8x1xf32>
    %159 = vector.broadcast %158 : vector<2x8x1xf32> to vector<2x8x8xf32>
    %160 = arith.mulf %155, %159 : vector<2x8x8xf32>
    "tpu.trace_start"() <{level = 10 : i32, message = "bqk,bkd->bqd"}> : () -> ()
    %cst_110 = arith.constant dense<0.000000e+00> : vector<2x8x8xf32>
    %161 = tpu.matmul %160, %149, %cst_110 {dimension_numbers = #tpu.dot_dimension_numbers<[2], [1], [1], [2], [0, 0, 0, 1, 1, 2], [0], [0]>} : vector<2x8x8xf32>, vector<2x8x8xf32>, vector<2x8x8xf32> -> vector<2x8x8xf32>
    "tpu.trace_stop"() : () -> ()
    %162 = vector.shape_cast %161 : vector<2x8x8xf32> to vector<16x8xf32>
    %c3_111 = arith.constant 3 : index
    %c0_112 = arith.constant 0 : index
    %c0_113 = arith.constant 0 : index
    %163 = vector.load %arg7[%c3_111, %c0_112, %c0_113] : memref<4x8x32xf32, #tpu.memory_space<vmem>>, vector<1x8x32xf32>
    %164 = vector.shape_cast %163 : vector<1x8x32xf32> to vector<8x32xf32>
    %cst_114 = arith.constant dense<0.000000e+00> : vector<16x32xf32>
    %165 = tpu.matmul %162, %164, %cst_114 {dimension_numbers = #tpu.dot_dimension_numbers<[1], [0], [0], [1], [0, 0, 1, 1], [], []>} : vector<16x8xf32>, vector<8x32xf32>, vector<16x32xf32> -> vector<16x32xf32>
    %166 = arith.addf %125, %165 : vector<16x32xf32>
    %167 = arith.addf %0, %166 : vector<16x32xf32>
    %c0_115 = arith.constant 0 : index
    %c0_116 = arith.constant 0 : index
    %168 = vector.load %arg9[%c0_115, %c0_116] : memref<1x32xf32, #tpu.memory_space<vmem>>, vector<1x32xf32>
    %c0_117 = arith.constant 0 : index
    %c0_118 = arith.constant 0 : index
    %169 = vector.load %arg10[%c0_117, %c0_118] : memref<1x32xf32, #tpu.memory_space<vmem>>, vector<1x32xf32>
    %cst_119 = arith.constant dense<0.000000e+00> : vector<16xf32>
    %170 = vector.multi_reduction <add>, %167, %cst_119 [1] : vector<16x32xf32> to vector<16xf32>
    %171 = vector.shape_cast %170 : vector<16xf32> to vector<16x1xf32>
    %cst_120 = arith.constant 3.200000e+01 : f32
    %172 = vector.broadcast %cst_120 : f32 to vector<16x1xf32>
    %173 = arith.divf %171, %172 : vector<16x1xf32>
    %174 = vector.broadcast %173 : vector<16x1xf32> to vector<16x32xf32>
    %175 = arith.subf %167, %174 : vector<16x32xf32>
    %176 = arith.mulf %175, %175 : vector<16x32xf32>
    %cst_121 = arith.constant dense<0.000000e+00> : vector<16xf32>
    %177 = vector.multi_reduction <add>, %176, %cst_121 [1] : vector<16x32xf32> to vector<16xf32>
    %178 = vector.shape_cast %177 : vector<16xf32> to vector<16x1xf32>
    %cst_122 = arith.constant 3.200000e+01 : f32
    %179 = vector.broadcast %cst_122 : f32 to vector<16x1xf32>
    %180 = arith.divf %178, %179 : vector<16x1xf32>
    %181 = vector.broadcast %173 : vector<16x1xf32> to vector<16x32xf32>
    %182 = arith.subf %167, %181 : vector<16x32xf32>
    %cst_123 = arith.constant 9.99999974E-6 : f32
    %183 = vector.broadcast %cst_123 : f32 to vector<16x1xf32>
    %184 = arith.addf %180, %183 : vector<16x1xf32>
    %185 = math.rsqrt %184 : vector<16x1xf32>
    %186 = vector.broadcast %185 : vector<16x1xf32> to vector<16x32xf32>
    %187 = arith.mulf %182, %186 : vector<16x32xf32>
    %188 = vector.broadcast %168 : vector<1x32xf32> to vector<16x32xf32>
    %189 = arith.mulf %187, %188 : vector<16x32xf32>
    %190 = vector.broadcast %169 : vector<1x32xf32> to vector<16x32xf32>
    %191 = arith.addf %189, %190 : vector<16x32xf32>
    %c0_124 = arith.constant 0 : index
    %c0_125 = arith.constant 0 : index
    %192 = vector.load %arg11[%c0_124, %c0_125] : memref<32x64xf32, #tpu.memory_space<vmem>>, vector<32x64xf32>
    %cst_126 = arith.constant dense<0.000000e+00> : vector<16x64xf32>
    %193 = tpu.matmul %191, %192, %cst_126 {dimension_numbers = #tpu.dot_dimension_numbers<[1], [0], [0], [1], [0, 0, 1, 1], [], []>} : vector<16x32xf32>, vector<32x64xf32>, vector<16x64xf32> -> vector<16x64xf32>
    %c0_127 = arith.constant 0 : index
    %c0_128 = arith.constant 0 : index
    %194 = vector.load %arg12[%c0_127, %c0_128] : memref<1x64xf32, #tpu.memory_space<vmem>>, vector<1x64xf32>
    %195 = vector.broadcast %194 : vector<1x64xf32> to vector<16x64xf32>
    %196 = arith.addf %193, %195 : vector<16x64xf32>
    %cst_129 = arith.constant 0.000000e+00 : f32
    %197 = vector.broadcast %cst_129 : f32 to vector<16x64xf32>
    %198 = arith.maximumf %196, %197 : vector<16x64xf32>
    %c0_130 = arith.constant 0 : index
    %c0_131 = arith.constant 0 : index
    %199 = vector.load %arg13[%c0_130, %c0_131] : memref<64x32xf32, #tpu.memory_space<vmem>>, vector<64x32xf32>
    %cst_132 = arith.constant dense<0.000000e+00> : vector<16x32xf32>
    %200 = tpu.matmul %198, %199, %cst_132 {dimension_numbers = #tpu.dot_dimension_numbers<[1], [0], [0], [1], [0, 0, 1, 1], [], []>} : vector<16x64xf32>, vector<64x32xf32>, vector<16x32xf32> -> vector<16x32xf32>
    %c0_133 = arith.constant 0 : index
    %c0_134 = arith.constant 0 : index
    %201 = vector.load %arg14[%c0_133, %c0_134] : memref<1x32xf32, #tpu.memory_space<vmem>>, vector<1x32xf32>
    %202 = vector.broadcast %201 : vector<1x32xf32> to vector<16x32xf32>
    %203 = arith.addf %200, %202 : vector<16x32xf32>
    %204 = arith.addf %191, %203 : vector<16x32xf32>
    %c0_135 = arith.constant 0 : index
    %c0_136 = arith.constant 0 : index
    %205 = vector.load %arg15[%c0_135, %c0_136] : memref<1x32xf32, #tpu.memory_space<vmem>>, vector<1x32xf32>
    %c0_137 = arith.constant 0 : index
    %c0_138 = arith.constant 0 : index
    %206 = vector.load %arg16[%c0_137, %c0_138] : memref<1x32xf32, #tpu.memory_space<vmem>>, vector<1x32xf32>
    %cst_139 = arith.constant dense<0.000000e+00> : vector<16xf32>
    %207 = vector.multi_reduction <add>, %204, %cst_139 [1] : vector<16x32xf32> to vector<16xf32>
    %208 = vector.shape_cast %207 : vector<16xf32> to vector<16x1xf32>
    %cst_140 = arith.constant 3.200000e+01 : f32
    %209 = vector.broadcast %cst_140 : f32 to vector<16x1xf32>
    %210 = arith.divf %208, %209 : vector<16x1xf32>
    %211 = vector.broadcast %210 : vector<16x1xf32> to vector<16x32xf32>
    %212 = arith.subf %204, %211 : vector<16x32xf32>
    %213 = arith.mulf %212, %212 : vector<16x32xf32>
    %cst_141 = arith.constant dense<0.000000e+00> : vector<16xf32>
    %214 = vector.multi_reduction <add>, %213, %cst_141 [1] : vector<16x32xf32> to vector<16xf32>
    %215 = vector.shape_cast %214 : vector<16xf32> to vector<16x1xf32>
    %cst_142 = arith.constant 3.200000e+01 : f32
    %216 = vector.broadcast %cst_142 : f32 to vector<16x1xf32>
    %217 = arith.divf %215, %216 : vector<16x1xf32>
    %218 = vector.broadcast %210 : vector<16x1xf32> to vector<16x32xf32>
    %219 = arith.subf %204, %218 : vector<16x32xf32>
    %cst_143 = arith.constant 9.99999974E-6 : f32
    %220 = vector.broadcast %cst_143 : f32 to vector<16x1xf32>
    %221 = arith.addf %217, %220 : vector<16x1xf32>
    %222 = math.rsqrt %221 : vector<16x1xf32>
    %223 = vector.broadcast %222 : vector<16x1xf32> to vector<16x32xf32>
    %224 = arith.mulf %219, %223 : vector<16x32xf32>
    %225 = vector.broadcast %205 : vector<1x32xf32> to vector<16x32xf32>
    %226 = arith.mulf %224, %225 : vector<16x32xf32>
    %227 = vector.broadcast %206 : vector<1x32xf32> to vector<16x32xf32>
    %228 = arith.addf %226, %227 : vector<16x32xf32>
    %c0_144 = arith.constant 0 : index
    %c0_145 = arith.constant 0 : index
    %229 = vector.load %arg24[%c0_144, %c0_145] : memref<1x32xf32, #tpu.memory_space<vmem>>, vector<1x32xf32>
    %c0_146 = arith.constant 0 : index
    %c0_147 = arith.constant 0 : index
    %c0_148 = arith.constant 0 : index
    %230 = vector.load %arg17[%c0_146, %c0_147, %c0_148] : memref<4x32x8xf32, #tpu.memory_space<vmem>>, vector<1x32x8xf32>
    %231 = vector.shape_cast %230 : vector<1x32x8xf32> to vector<32x8xf32>
    %cst_149 = arith.constant dense<0.000000e+00> : vector<16x8xf32>
    %232 = tpu.matmul %228, %231, %cst_149 {dimension_numbers = #tpu.dot_dimension_numbers<[1], [0], [0], [1], [0, 0, 1, 1], [], []>} : vector<16x32xf32>, vector<32x8xf32>, vector<16x8xf32> -> vector<16x8xf32>
    %c0_150 = arith.constant 0 : index
    %c0_151 = arith.constant 0 : index
    %c0_152 = arith.constant 0 : index
    %233 = vector.load %arg18[%c0_150, %c0_151, %c0_152] : memref<4x1x8xf32, #tpu.memory_space<vmem>>, vector<1x1x8xf32>
    %234 = vector.shape_cast %233 : vector<1x1x8xf32> to vector<1x8xf32>
    %235 = vector.broadcast %234 : vector<1x8xf32> to vector<16x8xf32>
    %236 = arith.addf %232, %235 : vector<16x8xf32>
    %237 = vector.shape_cast %236 : vector<16x8xf32> to vector<2x8x8xf32>
    %c0_153 = arith.constant 0 : index
    %c0_154 = arith.constant 0 : index
    %c0_155 = arith.constant 0 : index
    %238 = vector.load %arg19[%c0_153, %c0_154, %c0_155] : memref<4x32x8xf32, #tpu.memory_space<vmem>>, vector<1x32x8xf32>
    %239 = vector.shape_cast %238 : vector<1x32x8xf32> to vector<32x8xf32>
    %cst_156 = arith.constant dense<0.000000e+00> : vector<16x8xf32>
    %240 = tpu.matmul %228, %239, %cst_156 {dimension_numbers = #tpu.dot_dimension_numbers<[1], [0], [0], [1], [0, 0, 1, 1], [], []>} : vector<16x32xf32>, vector<32x8xf32>, vector<16x8xf32> -> vector<16x8xf32>
    %c0_157 = arith.constant 0 : index
    %c0_158 = arith.constant 0 : index
    %c0_159 = arith.constant 0 : index
    %241 = vector.load %arg20[%c0_157, %c0_158, %c0_159] : memref<4x1x8xf32, #tpu.memory_space<vmem>>, vector<1x1x8xf32>
    %242 = vector.shape_cast %241 : vector<1x1x8xf32> to vector<1x8xf32>
    %243 = vector.broadcast %242 : vector<1x8xf32> to vector<16x8xf32>
    %244 = arith.addf %240, %243 : vector<16x8xf32>
    %245 = vector.shape_cast %244 : vector<16x8xf32> to vector<2x8x8xf32>
    %c0_160 = arith.constant 0 : index
    %c0_161 = arith.constant 0 : index
    %c0_162 = arith.constant 0 : index
    %246 = vector.load %arg21[%c0_160, %c0_161, %c0_162] : memref<4x32x8xf32, #tpu.memory_space<vmem>>, vector<1x32x8xf32>
    %247 = vector.shape_cast %246 : vector<1x32x8xf32> to vector<32x8xf32>
    %cst_163 = arith.constant dense<0.000000e+00> : vector<16x8xf32>
    %248 = tpu.matmul %228, %247, %cst_163 {dimension_numbers = #tpu.dot_dimension_numbers<[1], [0], [0], [1], [0, 0, 1, 1], [], []>} : vector<16x32xf32>, vector<32x8xf32>, vector<16x8xf32> -> vector<16x8xf32>
    %c0_164 = arith.constant 0 : index
    %c0_165 = arith.constant 0 : index
    %c0_166 = arith.constant 0 : index
    %249 = vector.load %arg22[%c0_164, %c0_165, %c0_166] : memref<4x1x8xf32, #tpu.memory_space<vmem>>, vector<1x1x8xf32>
    %250 = vector.shape_cast %249 : vector<1x1x8xf32> to vector<1x8xf32>
    %251 = vector.broadcast %250 : vector<1x8xf32> to vector<16x8xf32>
    %252 = arith.addf %248, %251 : vector<16x8xf32>
    %253 = vector.shape_cast %252 : vector<16x8xf32> to vector<2x8x8xf32>
    "tpu.trace_start"() <{level = 10 : i32, message = "bqd,bkd->bqk"}> : () -> ()
    %cst_167 = arith.constant dense<0.000000e+00> : vector<2x8x8xf32>
    %254 = tpu.matmul %237, %245, %cst_167 {dimension_numbers = #tpu.dot_dimension_numbers<[2], [2], [1], [1], [0, 0, 0, 1, 1, 1], [0], [0]>} : vector<2x8x8xf32>, vector<2x8x8xf32>, vector<2x8x8xf32> -> vector<2x8x8xf32>
    "tpu.trace_stop"() : () -> ()
    %cst_168 = arith.constant dense<0xFF800000> : vector<2x8xf32>
    %255 = vector.multi_reduction <maximumf>, %254, %cst_168 [2] : vector<2x8x8xf32> to vector<2x8xf32>
    %256 = vector.shape_cast %255 : vector<2x8xf32> to vector<2x8x1xf32>
    %257 = vector.broadcast %256 : vector<2x8x1xf32> to vector<2x8x8xf32>
    %258 = arith.subf %254, %257 : vector<2x8x8xf32>
    %259 = math.exp %258 : vector<2x8x8xf32>
    %cst_169 = arith.constant dense<0.000000e+00> : vector<2x8xf32>
    %260 = vector.multi_reduction <add>, %259, %cst_169 [2] : vector<2x8x8xf32> to vector<2x8xf32>
    %261 = vector.shape_cast %260 : vector<2x8xf32> to vector<2x8x1xf32>
    %262 = tpu.reciprocal %261 {approx = true} : vector<2x8x1xf32> -> vector<2x8x1xf32>
    %263 = vector.broadcast %262 : vector<2x8x1xf32> to vector<2x8x8xf32>
    %264 = arith.mulf %259, %263 : vector<2x8x8xf32>
    "tpu.trace_start"() <{level = 10 : i32, message = "bqk,bkd->bqd"}> : () -> ()
    %cst_170 = arith.constant dense<0.000000e+00> : vector<2x8x8xf32>
    %265 = tpu.matmul %264, %253, %cst_170 {dimension_numbers = #tpu.dot_dimension_numbers<[2], [1], [1], [2], [0, 0, 0, 1, 1, 2], [0], [0]>} : vector<2x8x8xf32>, vector<2x8x8xf32>, vector<2x8x8xf32> -> vector<2x8x8xf32>
    "tpu.trace_stop"() : () -> ()
    %266 = vector.shape_cast %265 : vector<2x8x8xf32> to vector<16x8xf32>
    %c0_171 = arith.constant 0 : index
    %c0_172 = arith.constant 0 : index
    %c0_173 = arith.constant 0 : index
    %267 = vector.load %arg23[%c0_171, %c0_172, %c0_173] : memref<4x8x32xf32, #tpu.memory_space<vmem>>, vector<1x8x32xf32>
    %268 = vector.shape_cast %267 : vector<1x8x32xf32> to vector<8x32xf32>
    %cst_174 = arith.constant dense<0.000000e+00> : vector<16x32xf32>
    %269 = tpu.matmul %266, %268, %cst_174 {dimension_numbers = #tpu.dot_dimension_numbers<[1], [0], [0], [1], [0, 0, 1, 1], [], []>} : vector<16x8xf32>, vector<8x32xf32>, vector<16x32xf32> -> vector<16x32xf32>
    %270 = vector.broadcast %229 : vector<1x32xf32> to vector<16x32xf32>
    %271 = arith.addf %270, %269 : vector<16x32xf32>
    %c1_175 = arith.constant 1 : index
    %c0_176 = arith.constant 0 : index
    %c0_177 = arith.constant 0 : index
    %272 = vector.load %arg17[%c1_175, %c0_176, %c0_177] : memref<4x32x8xf32, #tpu.memory_space<vmem>>, vector<1x32x8xf32>
    %273 = vector.shape_cast %272 : vector<1x32x8xf32> to vector<32x8xf32>
    %cst_178 = arith.constant dense<0.000000e+00> : vector<16x8xf32>
    %274 = tpu.matmul %228, %273, %cst_178 {dimension_numbers = #tpu.dot_dimension_numbers<[1], [0], [0], [1], [0, 0, 1, 1], [], []>} : vector<16x32xf32>, vector<32x8xf32>, vector<16x8xf32> -> vector<16x8xf32>
    %c1_179 = arith.constant 1 : index
    %c0_180 = arith.constant 0 : index
    %c0_181 = arith.constant 0 : index
    %275 = vector.load %arg18[%c1_179, %c0_180, %c0_181] : memref<4x1x8xf32, #tpu.memory_space<vmem>>, vector<1x1x8xf32>
    %276 = vector.shape_cast %275 : vector<1x1x8xf32> to vector<1x8xf32>
    %277 = vector.broadcast %276 : vector<1x8xf32> to vector<16x8xf32>
    %278 = arith.addf %274, %277 : vector<16x8xf32>
    %279 = vector.shape_cast %278 : vector<16x8xf32> to vector<2x8x8xf32>
    %c1_182 = arith.constant 1 : index
    %c0_183 = arith.constant 0 : index
    %c0_184 = arith.constant 0 : index
    %280 = vector.load %arg19[%c1_182, %c0_183, %c0_184] : memref<4x32x8xf32, #tpu.memory_space<vmem>>, vector<1x32x8xf32>
    %281 = vector.shape_cast %280 : vector<1x32x8xf32> to vector<32x8xf32>
    %cst_185 = arith.constant dense<0.000000e+00> : vector<16x8xf32>
    %282 = tpu.matmul %228, %281, %cst_185 {dimension_numbers = #tpu.dot_dimension_numbers<[1], [0], [0], [1], [0, 0, 1, 1], [], []>} : vector<16x32xf32>, vector<32x8xf32>, vector<16x8xf32> -> vector<16x8xf32>
    %c1_186 = arith.constant 1 : index
    %c0_187 = arith.constant 0 : index
    %c0_188 = arith.constant 0 : index
    %283 = vector.load %arg20[%c1_186, %c0_187, %c0_188] : memref<4x1x8xf32, #tpu.memory_space<vmem>>, vector<1x1x8xf32>
    %284 = vector.shape_cast %283 : vector<1x1x8xf32> to vector<1x8xf32>
    %285 = vector.broadcast %284 : vector<1x8xf32> to vector<16x8xf32>
    %286 = arith.addf %282, %285 : vector<16x8xf32>
    %287 = vector.shape_cast %286 : vector<16x8xf32> to vector<2x8x8xf32>
    %c1_189 = arith.constant 1 : index
    %c0_190 = arith.constant 0 : index
    %c0_191 = arith.constant 0 : index
    %288 = vector.load %arg21[%c1_189, %c0_190, %c0_191] : memref<4x32x8xf32, #tpu.memory_space<vmem>>, vector<1x32x8xf32>
    %289 = vector.shape_cast %288 : vector<1x32x8xf32> to vector<32x8xf32>
    %cst_192 = arith.constant dense<0.000000e+00> : vector<16x8xf32>
    %290 = tpu.matmul %228, %289, %cst_192 {dimension_numbers = #tpu.dot_dimension_numbers<[1], [0], [0], [1], [0, 0, 1, 1], [], []>} : vector<16x32xf32>, vector<32x8xf32>, vector<16x8xf32> -> vector<16x8xf32>
    %c1_193 = arith.constant 1 : index
    %c0_194 = arith.constant 0 : index
    %c0_195 = arith.constant 0 : index
    %291 = vector.load %arg22[%c1_193, %c0_194, %c0_195] : memref<4x1x8xf32, #tpu.memory_space<vmem>>, vector<1x1x8xf32>
    %292 = vector.shape_cast %291 : vector<1x1x8xf32> to vector<1x8xf32>
    %293 = vector.broadcast %292 : vector<1x8xf32> to vector<16x8xf32>
    %294 = arith.addf %290, %293 : vector<16x8xf32>
    %295 = vector.shape_cast %294 : vector<16x8xf32> to vector<2x8x8xf32>
    "tpu.trace_start"() <{level = 10 : i32, message = "bqd,bkd->bqk"}> : () -> ()
    %cst_196 = arith.constant dense<0.000000e+00> : vector<2x8x8xf32>
    %296 = tpu.matmul %279, %287, %cst_196 {dimension_numbers = #tpu.dot_dimension_numbers<[2], [2], [1], [1], [0, 0, 0, 1, 1, 1], [0], [0]>} : vector<2x8x8xf32>, vector<2x8x8xf32>, vector<2x8x8xf32> -> vector<2x8x8xf32>
    "tpu.trace_stop"() : () -> ()
    %cst_197 = arith.constant dense<0xFF800000> : vector<2x8xf32>
    %297 = vector.multi_reduction <maximumf>, %296, %cst_197 [2] : vector<2x8x8xf32> to vector<2x8xf32>
    %298 = vector.shape_cast %297 : vector<2x8xf32> to vector<2x8x1xf32>
    %299 = vector.broadcast %298 : vector<2x8x1xf32> to vector<2x8x8xf32>
    %300 = arith.subf %296, %299 : vector<2x8x8xf32>
    %301 = math.exp %300 : vector<2x8x8xf32>
    %cst_198 = arith.constant dense<0.000000e+00> : vector<2x8xf32>
    %302 = vector.multi_reduction <add>, %301, %cst_198 [2] : vector<2x8x8xf32> to vector<2x8xf32>
    %303 = vector.shape_cast %302 : vector<2x8xf32> to vector<2x8x1xf32>
    %304 = tpu.reciprocal %303 {approx = true} : vector<2x8x1xf32> -> vector<2x8x1xf32>
    %305 = vector.broadcast %304 : vector<2x8x1xf32> to vector<2x8x8xf32>
    %306 = arith.mulf %301, %305 : vector<2x8x8xf32>
    "tpu.trace_start"() <{level = 10 : i32, message = "bqk,bkd->bqd"}> : () -> ()
    %cst_199 = arith.constant dense<0.000000e+00> : vector<2x8x8xf32>
    %307 = tpu.matmul %306, %295, %cst_199 {dimension_numbers = #tpu.dot_dimension_numbers<[2], [1], [1], [2], [0, 0, 0, 1, 1, 2], [0], [0]>} : vector<2x8x8xf32>, vector<2x8x8xf32>, vector<2x8x8xf32> -> vector<2x8x8xf32>
    "tpu.trace_stop"() : () -> ()
    %308 = vector.shape_cast %307 : vector<2x8x8xf32> to vector<16x8xf32>
    %c1_200 = arith.constant 1 : index
    %c0_201 = arith.constant 0 : index
    %c0_202 = arith.constant 0 : index
    %309 = vector.load %arg23[%c1_200, %c0_201, %c0_202] : memref<4x8x32xf32, #tpu.memory_space<vmem>>, vector<1x8x32xf32>
    %310 = vector.shape_cast %309 : vector<1x8x32xf32> to vector<8x32xf32>
    %cst_203 = arith.constant dense<0.000000e+00> : vector<16x32xf32>
    %311 = tpu.matmul %308, %310, %cst_203 {dimension_numbers = #tpu.dot_dimension_numbers<[1], [0], [0], [1], [0, 0, 1, 1], [], []>} : vector<16x8xf32>, vector<8x32xf32>, vector<16x32xf32> -> vector<16x32xf32>
    %312 = arith.addf %271, %311 : vector<16x32xf32>
    %c2_204 = arith.constant 2 : index
    %c0_205 = arith.constant 0 : index
    %c0_206 = arith.constant 0 : index
    %313 = vector.load %arg17[%c2_204, %c0_205, %c0_206] : memref<4x32x8xf32, #tpu.memory_space<vmem>>, vector<1x32x8xf32>
    %314 = vector.shape_cast %313 : vector<1x32x8xf32> to vector<32x8xf32>
    %cst_207 = arith.constant dense<0.000000e+00> : vector<16x8xf32>
    %315 = tpu.matmul %228, %314, %cst_207 {dimension_numbers = #tpu.dot_dimension_numbers<[1], [0], [0], [1], [0, 0, 1, 1], [], []>} : vector<16x32xf32>, vector<32x8xf32>, vector<16x8xf32> -> vector<16x8xf32>
    %c2_208 = arith.constant 2 : index
    %c0_209 = arith.constant 0 : index
    %c0_210 = arith.constant 0 : index
    %316 = vector.load %arg18[%c2_208, %c0_209, %c0_210] : memref<4x1x8xf32, #tpu.memory_space<vmem>>, vector<1x1x8xf32>
    %317 = vector.shape_cast %316 : vector<1x1x8xf32> to vector<1x8xf32>
    %318 = vector.broadcast %317 : vector<1x8xf32> to vector<16x8xf32>
    %319 = arith.addf %315, %318 : vector<16x8xf32>
    %320 = vector.shape_cast %319 : vector<16x8xf32> to vector<2x8x8xf32>
    %c2_211 = arith.constant 2 : index
    %c0_212 = arith.constant 0 : index
    %c0_213 = arith.constant 0 : index
    %321 = vector.load %arg19[%c2_211, %c0_212, %c0_213] : memref<4x32x8xf32, #tpu.memory_space<vmem>>, vector<1x32x8xf32>
    %322 = vector.shape_cast %321 : vector<1x32x8xf32> to vector<32x8xf32>
    %cst_214 = arith.constant dense<0.000000e+00> : vector<16x8xf32>
    %323 = tpu.matmul %228, %322, %cst_214 {dimension_numbers = #tpu.dot_dimension_numbers<[1], [0], [0], [1], [0, 0, 1, 1], [], []>} : vector<16x32xf32>, vector<32x8xf32>, vector<16x8xf32> -> vector<16x8xf32>
    %c2_215 = arith.constant 2 : index
    %c0_216 = arith.constant 0 : index
    %c0_217 = arith.constant 0 : index
    %324 = vector.load %arg20[%c2_215, %c0_216, %c0_217] : memref<4x1x8xf32, #tpu.memory_space<vmem>>, vector<1x1x8xf32>
    %325 = vector.shape_cast %324 : vector<1x1x8xf32> to vector<1x8xf32>
    %326 = vector.broadcast %325 : vector<1x8xf32> to vector<16x8xf32>
    %327 = arith.addf %323, %326 : vector<16x8xf32>
    %328 = vector.shape_cast %327 : vector<16x8xf32> to vector<2x8x8xf32>
    %c2_218 = arith.constant 2 : index
    %c0_219 = arith.constant 0 : index
    %c0_220 = arith.constant 0 : index
    %329 = vector.load %arg21[%c2_218, %c0_219, %c0_220] : memref<4x32x8xf32, #tpu.memory_space<vmem>>, vector<1x32x8xf32>
    %330 = vector.shape_cast %329 : vector<1x32x8xf32> to vector<32x8xf32>
    %cst_221 = arith.constant dense<0.000000e+00> : vector<16x8xf32>
    %331 = tpu.matmul %228, %330, %cst_221 {dimension_numbers = #tpu.dot_dimension_numbers<[1], [0], [0], [1], [0, 0, 1, 1], [], []>} : vector<16x32xf32>, vector<32x8xf32>, vector<16x8xf32> -> vector<16x8xf32>
    %c2_222 = arith.constant 2 : index
    %c0_223 = arith.constant 0 : index
    %c0_224 = arith.constant 0 : index
    %332 = vector.load %arg22[%c2_222, %c0_223, %c0_224] : memref<4x1x8xf32, #tpu.memory_space<vmem>>, vector<1x1x8xf32>
    %333 = vector.shape_cast %332 : vector<1x1x8xf32> to vector<1x8xf32>
    %334 = vector.broadcast %333 : vector<1x8xf32> to vector<16x8xf32>
    %335 = arith.addf %331, %334 : vector<16x8xf32>
    %336 = vector.shape_cast %335 : vector<16x8xf32> to vector<2x8x8xf32>
    "tpu.trace_start"() <{level = 10 : i32, message = "bqd,bkd->bqk"}> : () -> ()
    %cst_225 = arith.constant dense<0.000000e+00> : vector<2x8x8xf32>
    %337 = tpu.matmul %320, %328, %cst_225 {dimension_numbers = #tpu.dot_dimension_numbers<[2], [2], [1], [1], [0, 0, 0, 1, 1, 1], [0], [0]>} : vector<2x8x8xf32>, vector<2x8x8xf32>, vector<2x8x8xf32> -> vector<2x8x8xf32>
    "tpu.trace_stop"() : () -> ()
    %cst_226 = arith.constant dense<0xFF800000> : vector<2x8xf32>
    %338 = vector.multi_reduction <maximumf>, %337, %cst_226 [2] : vector<2x8x8xf32> to vector<2x8xf32>
    %339 = vector.shape_cast %338 : vector<2x8xf32> to vector<2x8x1xf32>
    %340 = vector.broadcast %339 : vector<2x8x1xf32> to vector<2x8x8xf32>
    %341 = arith.subf %337, %340 : vector<2x8x8xf32>
    %342 = math.exp %341 : vector<2x8x8xf32>
    %cst_227 = arith.constant dense<0.000000e+00> : vector<2x8xf32>
    %343 = vector.multi_reduction <add>, %342, %cst_227 [2] : vector<2x8x8xf32> to vector<2x8xf32>
    %344 = vector.shape_cast %343 : vector<2x8xf32> to vector<2x8x1xf32>
    %345 = tpu.reciprocal %344 {approx = true} : vector<2x8x1xf32> -> vector<2x8x1xf32>
    %346 = vector.broadcast %345 : vector<2x8x1xf32> to vector<2x8x8xf32>
    %347 = arith.mulf %342, %346 : vector<2x8x8xf32>
    "tpu.trace_start"() <{level = 10 : i32, message = "bqk,bkd->bqd"}> : () -> ()
    %cst_228 = arith.constant dense<0.000000e+00> : vector<2x8x8xf32>
    %348 = tpu.matmul %347, %336, %cst_228 {dimension_numbers = #tpu.dot_dimension_numbers<[2], [1], [1], [2], [0, 0, 0, 1, 1, 2], [0], [0]>} : vector<2x8x8xf32>, vector<2x8x8xf32>, vector<2x8x8xf32> -> vector<2x8x8xf32>
    "tpu.trace_stop"() : () -> ()
    %349 = vector.shape_cast %348 : vector<2x8x8xf32> to vector<16x8xf32>
    %c2_229 = arith.constant 2 : index
    %c0_230 = arith.constant 0 : index
    %c0_231 = arith.constant 0 : index
    %350 = vector.load %arg23[%c2_229, %c0_230, %c0_231] : memref<4x8x32xf32, #tpu.memory_space<vmem>>, vector<1x8x32xf32>
    %351 = vector.shape_cast %350 : vector<1x8x32xf32> to vector<8x32xf32>
    %cst_232 = arith.constant dense<0.000000e+00> : vector<16x32xf32>
    %352 = tpu.matmul %349, %351, %cst_232 {dimension_numbers = #tpu.dot_dimension_numbers<[1], [0], [0], [1], [0, 0, 1, 1], [], []>} : vector<16x8xf32>, vector<8x32xf32>, vector<16x32xf32> -> vector<16x32xf32>
    %353 = arith.addf %312, %352 : vector<16x32xf32>
    %c3_233 = arith.constant 3 : index
    %c0_234 = arith.constant 0 : index
    %c0_235 = arith.constant 0 : index
    %354 = vector.load %arg17[%c3_233, %c0_234, %c0_235] : memref<4x32x8xf32, #tpu.memory_space<vmem>>, vector<1x32x8xf32>
    %355 = vector.shape_cast %354 : vector<1x32x8xf32> to vector<32x8xf32>
    %cst_236 = arith.constant dense<0.000000e+00> : vector<16x8xf32>
    %356 = tpu.matmul %228, %355, %cst_236 {dimension_numbers = #tpu.dot_dimension_numbers<[1], [0], [0], [1], [0, 0, 1, 1], [], []>} : vector<16x32xf32>, vector<32x8xf32>, vector<16x8xf32> -> vector<16x8xf32>
    %c3_237 = arith.constant 3 : index
    %c0_238 = arith.constant 0 : index
    %c0_239 = arith.constant 0 : index
    %357 = vector.load %arg18[%c3_237, %c0_238, %c0_239] : memref<4x1x8xf32, #tpu.memory_space<vmem>>, vector<1x1x8xf32>
    %358 = vector.shape_cast %357 : vector<1x1x8xf32> to vector<1x8xf32>
    %359 = vector.broadcast %358 : vector<1x8xf32> to vector<16x8xf32>
    %360 = arith.addf %356, %359 : vector<16x8xf32>
    %361 = vector.shape_cast %360 : vector<16x8xf32> to vector<2x8x8xf32>
    %c3_240 = arith.constant 3 : index
    %c0_241 = arith.constant 0 : index
    %c0_242 = arith.constant 0 : index
    %362 = vector.load %arg19[%c3_240, %c0_241, %c0_242] : memref<4x32x8xf32, #tpu.memory_space<vmem>>, vector<1x32x8xf32>
    %363 = vector.shape_cast %362 : vector<1x32x8xf32> to vector<32x8xf32>
    %cst_243 = arith.constant dense<0.000000e+00> : vector<16x8xf32>
    %364 = tpu.matmul %228, %363, %cst_243 {dimension_numbers = #tpu.dot_dimension_numbers<[1], [0], [0], [1], [0, 0, 1, 1], [], []>} : vector<16x32xf32>, vector<32x8xf32>, vector<16x8xf32> -> vector<16x8xf32>
    %c3_244 = arith.constant 3 : index
    %c0_245 = arith.constant 0 : index
    %c0_246 = arith.constant 0 : index
    %365 = vector.load %arg20[%c3_244, %c0_245, %c0_246] : memref<4x1x8xf32, #tpu.memory_space<vmem>>, vector<1x1x8xf32>
    %366 = vector.shape_cast %365 : vector<1x1x8xf32> to vector<1x8xf32>
    %367 = vector.broadcast %366 : vector<1x8xf32> to vector<16x8xf32>
    %368 = arith.addf %364, %367 : vector<16x8xf32>
    %369 = vector.shape_cast %368 : vector<16x8xf32> to vector<2x8x8xf32>
    %c3_247 = arith.constant 3 : index
    %c0_248 = arith.constant 0 : index
    %c0_249 = arith.constant 0 : index
    %370 = vector.load %arg21[%c3_247, %c0_248, %c0_249] : memref<4x32x8xf32, #tpu.memory_space<vmem>>, vector<1x32x8xf32>
    %371 = vector.shape_cast %370 : vector<1x32x8xf32> to vector<32x8xf32>
    %cst_250 = arith.constant dense<0.000000e+00> : vector<16x8xf32>
    %372 = tpu.matmul %228, %371, %cst_250 {dimension_numbers = #tpu.dot_dimension_numbers<[1], [0], [0], [1], [0, 0, 1, 1], [], []>} : vector<16x32xf32>, vector<32x8xf32>, vector<16x8xf32> -> vector<16x8xf32>
    %c3_251 = arith.constant 3 : index
    %c0_252 = arith.constant 0 : index
    %c0_253 = arith.constant 0 : index
    %373 = vector.load %arg22[%c3_251, %c0_252, %c0_253] : memref<4x1x8xf32, #tpu.memory_space<vmem>>, vector<1x1x8xf32>
    %374 = vector.shape_cast %373 : vector<1x1x8xf32> to vector<1x8xf32>
    %375 = vector.broadcast %374 : vector<1x8xf32> to vector<16x8xf32>
    %376 = arith.addf %372, %375 : vector<16x8xf32>
    %377 = vector.shape_cast %376 : vector<16x8xf32> to vector<2x8x8xf32>
    "tpu.trace_start"() <{level = 10 : i32, message = "bqd,bkd->bqk"}> : () -> ()
    %cst_254 = arith.constant dense<0.000000e+00> : vector<2x8x8xf32>
    %378 = tpu.matmul %361, %369, %cst_254 {dimension_numbers = #tpu.dot_dimension_numbers<[2], [2], [1], [1], [0, 0, 0, 1, 1, 1], [0], [0]>} : vector<2x8x8xf32>, vector<2x8x8xf32>, vector<2x8x8xf32> -> vector<2x8x8xf32>
    "tpu.trace_stop"() : () -> ()
    %cst_255 = arith.constant dense<0xFF800000> : vector<2x8xf32>
    %379 = vector.multi_reduction <maximumf>, %378, %cst_255 [2] : vector<2x8x8xf32> to vector<2x8xf32>
    %380 = vector.shape_cast %379 : vector<2x8xf32> to vector<2x8x1xf32>
    %381 = vector.broadcast %380 : vector<2x8x1xf32> to vector<2x8x8xf32>
    %382 = arith.subf %378, %381 : vector<2x8x8xf32>
    %383 = math.exp %382 : vector<2x8x8xf32>
    %cst_256 = arith.constant dense<0.000000e+00> : vector<2x8xf32>
    %384 = vector.multi_reduction <add>, %383, %cst_256 [2] : vector<2x8x8xf32> to vector<2x8xf32>
    %385 = vector.shape_cast %384 : vector<2x8xf32> to vector<2x8x1xf32>
    %386 = tpu.reciprocal %385 {approx = true} : vector<2x8x1xf32> -> vector<2x8x1xf32>
    %387 = vector.broadcast %386 : vector<2x8x1xf32> to vector<2x8x8xf32>
    %388 = arith.mulf %383, %387 : vector<2x8x8xf32>
    "tpu.trace_start"() <{level = 10 : i32, message = "bqk,bkd->bqd"}> : () -> ()
    %cst_257 = arith.constant dense<0.000000e+00> : vector<2x8x8xf32>
    %389 = tpu.matmul %388, %377, %cst_257 {dimension_numbers = #tpu.dot_dimension_numbers<[2], [1], [1], [2], [0, 0, 0, 1, 1, 2], [0], [0]>} : vector<2x8x8xf32>, vector<2x8x8xf32>, vector<2x8x8xf32> -> vector<2x8x8xf32>
    "tpu.trace_stop"() : () -> ()
    %390 = vector.shape_cast %389 : vector<2x8x8xf32> to vector<16x8xf32>
    %c3_258 = arith.constant 3 : index
    %c0_259 = arith.constant 0 : index
    %c0_260 = arith.constant 0 : index
    %391 = vector.load %arg23[%c3_258, %c0_259, %c0_260] : memref<4x8x32xf32, #tpu.memory_space<vmem>>, vector<1x8x32xf32>
    %392 = vector.shape_cast %391 : vector<1x8x32xf32> to vector<8x32xf32>
    %cst_261 = arith.constant dense<0.000000e+00> : vector<16x32xf32>
    %393 = tpu.matmul %390, %392, %cst_261 {dimension_numbers = #tpu.dot_dimension_numbers<[1], [0], [0], [1], [0, 0, 1, 1], [], []>} : vector<16x8xf32>, vector<8x32xf32>, vector<16x32xf32> -> vector<16x32xf32>
    %394 = arith.addf %353, %393 : vector<16x32xf32>
    %395 = arith.addf %228, %394 : vector<16x32xf32>
    %c0_262 = arith.constant 0 : index
    %c0_263 = arith.constant 0 : index
    %396 = vector.load %arg25[%c0_262, %c0_263] : memref<1x32xf32, #tpu.memory_space<vmem>>, vector<1x32xf32>
    %c0_264 = arith.constant 0 : index
    %c0_265 = arith.constant 0 : index
    %397 = vector.load %arg26[%c0_264, %c0_265] : memref<1x32xf32, #tpu.memory_space<vmem>>, vector<1x32xf32>
    %cst_266 = arith.constant dense<0.000000e+00> : vector<16xf32>
    %398 = vector.multi_reduction <add>, %395, %cst_266 [1] : vector<16x32xf32> to vector<16xf32>
    %399 = vector.shape_cast %398 : vector<16xf32> to vector<16x1xf32>
    %cst_267 = arith.constant 3.200000e+01 : f32
    %400 = vector.broadcast %cst_267 : f32 to vector<16x1xf32>
    %401 = arith.divf %399, %400 : vector<16x1xf32>
    %402 = vector.broadcast %401 : vector<16x1xf32> to vector<16x32xf32>
    %403 = arith.subf %395, %402 : vector<16x32xf32>
    %404 = arith.mulf %403, %403 : vector<16x32xf32>
    %cst_268 = arith.constant dense<0.000000e+00> : vector<16xf32>
    %405 = vector.multi_reduction <add>, %404, %cst_268 [1] : vector<16x32xf32> to vector<16xf32>
    %406 = vector.shape_cast %405 : vector<16xf32> to vector<16x1xf32>
    %cst_269 = arith.constant 3.200000e+01 : f32
    %407 = vector.broadcast %cst_269 : f32 to vector<16x1xf32>
    %408 = arith.divf %406, %407 : vector<16x1xf32>
    %409 = vector.broadcast %401 : vector<16x1xf32> to vector<16x32xf32>
    %410 = arith.subf %395, %409 : vector<16x32xf32>
    %cst_270 = arith.constant 9.99999974E-6 : f32
    %411 = vector.broadcast %cst_270 : f32 to vector<16x1xf32>
    %412 = arith.addf %408, %411 : vector<16x1xf32>
    %413 = math.rsqrt %412 : vector<16x1xf32>
    %414 = vector.broadcast %413 : vector<16x1xf32> to vector<16x32xf32>
    %415 = arith.mulf %410, %414 : vector<16x32xf32>
    %416 = vector.broadcast %396 : vector<1x32xf32> to vector<16x32xf32>
    %417 = arith.mulf %415, %416 : vector<16x32xf32>
    %418 = vector.broadcast %397 : vector<1x32xf32> to vector<16x32xf32>
    %419 = arith.addf %417, %418 : vector<16x32xf32>
    %c0_271 = arith.constant 0 : index
    %c0_272 = arith.constant 0 : index
    %420 = vector.load %arg27[%c0_271, %c0_272] : memref<32x64xf32, #tpu.memory_space<vmem>>, vector<32x64xf32>
    %cst_273 = arith.constant dense<0.000000e+00> : vector<16x64xf32>
    %421 = tpu.matmul %419, %420, %cst_273 {dimension_numbers = #tpu.dot_dimension_numbers<[1], [0], [0], [1], [0, 0, 1, 1], [], []>} : vector<16x32xf32>, vector<32x64xf32>, vector<16x64xf32> -> vector<16x64xf32>
    %c0_274 = arith.constant 0 : index
    %c0_275 = arith.constant 0 : index
    %422 = vector.load %arg28[%c0_274, %c0_275] : memref<1x64xf32, #tpu.memory_space<vmem>>, vector<1x64xf32>
    %423 = vector.broadcast %422 : vector<1x64xf32> to vector<16x64xf32>
    %424 = arith.addf %421, %423 : vector<16x64xf32>
    %cst_276 = arith.constant 0.000000e+00 : f32
    %425 = vector.broadcast %cst_276 : f32 to vector<16x64xf32>
    %426 = arith.maximumf %424, %425 : vector<16x64xf32>
    %c0_277 = arith.constant 0 : index
    %c0_278 = arith.constant 0 : index
    %427 = vector.load %arg29[%c0_277, %c0_278] : memref<64x32xf32, #tpu.memory_space<vmem>>, vector<64x32xf32>
    %cst_279 = arith.constant dense<0.000000e+00> : vector<16x32xf32>
    %428 = tpu.matmul %426, %427, %cst_279 {dimension_numbers = #tpu.dot_dimension_numbers<[1], [0], [0], [1], [0, 0, 1, 1], [], []>} : vector<16x64xf32>, vector<64x32xf32>, vector<16x32xf32> -> vector<16x32xf32>
    %c0_280 = arith.constant 0 : index
    %c0_281 = arith.constant 0 : index
    %429 = vector.load %arg30[%c0_280, %c0_281] : memref<1x32xf32, #tpu.memory_space<vmem>>, vector<1x32xf32>
    %430 = vector.broadcast %429 : vector<1x32xf32> to vector<16x32xf32>
    %431 = arith.addf %428, %430 : vector<16x32xf32>
    %432 = arith.addf %419, %431 : vector<16x32xf32>
    %c0_282 = arith.constant 0 : index
    %c0_283 = arith.constant 0 : index
    %433 = vector.load %arg31[%c0_282, %c0_283] : memref<1x32xf32, #tpu.memory_space<vmem>>, vector<1x32xf32>
    %c0_284 = arith.constant 0 : index
    %c0_285 = arith.constant 0 : index
    %434 = vector.load %arg32[%c0_284, %c0_285] : memref<1x32xf32, #tpu.memory_space<vmem>>, vector<1x32xf32>
    %cst_286 = arith.constant dense<0.000000e+00> : vector<16xf32>
    %435 = vector.multi_reduction <add>, %432, %cst_286 [1] : vector<16x32xf32> to vector<16xf32>
    %436 = vector.shape_cast %435 : vector<16xf32> to vector<16x1xf32>
    %cst_287 = arith.constant 3.200000e+01 : f32
    %437 = vector.broadcast %cst_287 : f32 to vector<16x1xf32>
    %438 = arith.divf %436, %437 : vector<16x1xf32>
    %439 = vector.broadcast %438 : vector<16x1xf32> to vector<16x32xf32>
    %440 = arith.subf %432, %439 : vector<16x32xf32>
    %441 = arith.mulf %440, %440 : vector<16x32xf32>
    %cst_288 = arith.constant dense<0.000000e+00> : vector<16xf32>
    %442 = vector.multi_reduction <add>, %441, %cst_288 [1] : vector<16x32xf32> to vector<16xf32>
    %443 = vector.shape_cast %442 : vector<16xf32> to vector<16x1xf32>
    %cst_289 = arith.constant 3.200000e+01 : f32
    %444 = vector.broadcast %cst_289 : f32 to vector<16x1xf32>
    %445 = arith.divf %443, %444 : vector<16x1xf32>
    %446 = vector.broadcast %438 : vector<16x1xf32> to vector<16x32xf32>
    %447 = arith.subf %432, %446 : vector<16x32xf32>
    %cst_290 = arith.constant 9.99999974E-6 : f32
    %448 = vector.broadcast %cst_290 : f32 to vector<16x1xf32>
    %449 = arith.addf %445, %448 : vector<16x1xf32>
    %450 = math.rsqrt %449 : vector<16x1xf32>
    %451 = vector.broadcast %450 : vector<16x1xf32> to vector<16x32xf32>
    %452 = arith.mulf %447, %451 : vector<16x32xf32>
    %453 = vector.broadcast %433 : vector<1x32xf32> to vector<16x32xf32>
    %454 = arith.mulf %452, %453 : vector<16x32xf32>
    %455 = vector.broadcast %434 : vector<1x32xf32> to vector<16x32xf32>
    %456 = arith.addf %454, %455 : vector<16x32xf32>
    %457 = vector.extract_strided_slice %456 {offsets = [0, 0], sizes = [8, 32], strides = [1, 1]} : vector<16x32xf32> to vector<8x32xf32>
    %c0_291 = arith.constant 0 : index
    %c0_292 = arith.constant 0 : index
    %458 = vector.load %arg34[%c0_291, %c0_292] : memref<1x64xf32, #tpu.memory_space<vmem>>, vector<1x64xf32>
    %459 = vector.extract_strided_slice %457 {offsets = [0, 0], sizes = [1, 32], strides = [1, 1]} : vector<8x32xf32> to vector<1x32xf32>
    %c0_293 = arith.constant 0 : index
    %c0_294 = arith.constant 0 : index
    %c0_295 = arith.constant 0 : index
    %460 = vector.load %arg33[%c0_293, %c0_294, %c0_295] : memref<8x32x64xf32, #tpu.memory_space<vmem>>, vector<1x32x64xf32>
    %461 = vector.shape_cast %460 : vector<1x32x64xf32> to vector<32x64xf32>
    %cst_296 = arith.constant dense<0.000000e+00> : vector<1x64xf32>
    %462 = tpu.matmul %459, %461, %cst_296 {dimension_numbers = #tpu.dot_dimension_numbers<[1], [0], [0], [1], [0, 0, 1, 1], [], []>} : vector<1x32xf32>, vector<32x64xf32>, vector<1x64xf32> -> vector<1x64xf32>
    %463 = arith.addf %458, %462 : vector<1x64xf32>
    %464 = vector.extract_strided_slice %457 {offsets = [1, 0], sizes = [1, 32], strides = [1, 1]} : vector<8x32xf32> to vector<1x32xf32>
    %c1_297 = arith.constant 1 : index
    %c0_298 = arith.constant 0 : index
    %c0_299 = arith.constant 0 : index
    %465 = vector.load %arg33[%c1_297, %c0_298, %c0_299] : memref<8x32x64xf32, #tpu.memory_space<vmem>>, vector<1x32x64xf32>
    %466 = vector.shape_cast %465 : vector<1x32x64xf32> to vector<32x64xf32>
    %cst_300 = arith.constant dense<0.000000e+00> : vector<1x64xf32>
    %467 = tpu.matmul %464, %466, %cst_300 {dimension_numbers = #tpu.dot_dimension_numbers<[1], [0], [0], [1], [0, 0, 1, 1], [], []>} : vector<1x32xf32>, vector<32x64xf32>, vector<1x64xf32> -> vector<1x64xf32>
    %468 = arith.addf %463, %467 : vector<1x64xf32>
    %469 = vector.extract_strided_slice %457 {offsets = [2, 0], sizes = [1, 32], strides = [1, 1]} : vector<8x32xf32> to vector<1x32xf32>
    %c2_301 = arith.constant 2 : index
    %c0_302 = arith.constant 0 : index
    %c0_303 = arith.constant 0 : index
    %470 = vector.load %arg33[%c2_301, %c0_302, %c0_303] : memref<8x32x64xf32, #tpu.memory_space<vmem>>, vector<1x32x64xf32>
    %471 = vector.shape_cast %470 : vector<1x32x64xf32> to vector<32x64xf32>
    %cst_304 = arith.constant dense<0.000000e+00> : vector<1x64xf32>
    %472 = tpu.matmul %469, %471, %cst_304 {dimension_numbers = #tpu.dot_dimension_numbers<[1], [0], [0], [1], [0, 0, 1, 1], [], []>} : vector<1x32xf32>, vector<32x64xf32>, vector<1x64xf32> -> vector<1x64xf32>
    %473 = arith.addf %468, %472 : vector<1x64xf32>
    %474 = vector.extract_strided_slice %457 {offsets = [3, 0], sizes = [1, 32], strides = [1, 1]} : vector<8x32xf32> to vector<1x32xf32>
    %c3_305 = arith.constant 3 : index
    %c0_306 = arith.constant 0 : index
    %c0_307 = arith.constant 0 : index
    %475 = vector.load %arg33[%c3_305, %c0_306, %c0_307] : memref<8x32x64xf32, #tpu.memory_space<vmem>>, vector<1x32x64xf32>
    %476 = vector.shape_cast %475 : vector<1x32x64xf32> to vector<32x64xf32>
    %cst_308 = arith.constant dense<0.000000e+00> : vector<1x64xf32>
    %477 = tpu.matmul %474, %476, %cst_308 {dimension_numbers = #tpu.dot_dimension_numbers<[1], [0], [0], [1], [0, 0, 1, 1], [], []>} : vector<1x32xf32>, vector<32x64xf32>, vector<1x64xf32> -> vector<1x64xf32>
    %478 = arith.addf %473, %477 : vector<1x64xf32>
    %479 = vector.extract_strided_slice %457 {offsets = [4, 0], sizes = [1, 32], strides = [1, 1]} : vector<8x32xf32> to vector<1x32xf32>
    %c4 = arith.constant 4 : index
    %c0_309 = arith.constant 0 : index
    %c0_310 = arith.constant 0 : index
    %480 = vector.load %arg33[%c4, %c0_309, %c0_310] : memref<8x32x64xf32, #tpu.memory_space<vmem>>, vector<1x32x64xf32>
    %481 = vector.shape_cast %480 : vector<1x32x64xf32> to vector<32x64xf32>
    %cst_311 = arith.constant dense<0.000000e+00> : vector<1x64xf32>
    %482 = tpu.matmul %479, %481, %cst_311 {dimension_numbers = #tpu.dot_dimension_numbers<[1], [0], [0], [1], [0, 0, 1, 1], [], []>} : vector<1x32xf32>, vector<32x64xf32>, vector<1x64xf32> -> vector<1x64xf32>
    %483 = arith.addf %478, %482 : vector<1x64xf32>
    %484 = vector.extract_strided_slice %457 {offsets = [5, 0], sizes = [1, 32], strides = [1, 1]} : vector<8x32xf32> to vector<1x32xf32>
    %c5 = arith.constant 5 : index
    %c0_312 = arith.constant 0 : index
    %c0_313 = arith.constant 0 : index
    %485 = vector.load %arg33[%c5, %c0_312, %c0_313] : memref<8x32x64xf32, #tpu.memory_space<vmem>>, vector<1x32x64xf32>
    %486 = vector.shape_cast %485 : vector<1x32x64xf32> to vector<32x64xf32>
    %cst_314 = arith.constant dense<0.000000e+00> : vector<1x64xf32>
    %487 = tpu.matmul %484, %486, %cst_314 {dimension_numbers = #tpu.dot_dimension_numbers<[1], [0], [0], [1], [0, 0, 1, 1], [], []>} : vector<1x32xf32>, vector<32x64xf32>, vector<1x64xf32> -> vector<1x64xf32>
    %488 = arith.addf %483, %487 : vector<1x64xf32>
    %489 = vector.extract_strided_slice %457 {offsets = [6, 0], sizes = [1, 32], strides = [1, 1]} : vector<8x32xf32> to vector<1x32xf32>
    %c6 = arith.constant 6 : index
    %c0_315 = arith.constant 0 : index
    %c0_316 = arith.constant 0 : index
    %490 = vector.load %arg33[%c6, %c0_315, %c0_316] : memref<8x32x64xf32, #tpu.memory_space<vmem>>, vector<1x32x64xf32>
    %491 = vector.shape_cast %490 : vector<1x32x64xf32> to vector<32x64xf32>
    %cst_317 = arith.constant dense<0.000000e+00> : vector<1x64xf32>
    %492 = tpu.matmul %489, %491, %cst_317 {dimension_numbers = #tpu.dot_dimension_numbers<[1], [0], [0], [1], [0, 0, 1, 1], [], []>} : vector<1x32xf32>, vector<32x64xf32>, vector<1x64xf32> -> vector<1x64xf32>
    %493 = arith.addf %488, %492 : vector<1x64xf32>
    %494 = vector.extract_strided_slice %457 {offsets = [7, 0], sizes = [1, 32], strides = [1, 1]} : vector<8x32xf32> to vector<1x32xf32>
    %c7 = arith.constant 7 : index
    %c0_318 = arith.constant 0 : index
    %c0_319 = arith.constant 0 : index
    %495 = vector.load %arg33[%c7, %c0_318, %c0_319] : memref<8x32x64xf32, #tpu.memory_space<vmem>>, vector<1x32x64xf32>
    %496 = vector.shape_cast %495 : vector<1x32x64xf32> to vector<32x64xf32>
    %cst_320 = arith.constant dense<0.000000e+00> : vector<1x64xf32>
    %497 = tpu.matmul %494, %496, %cst_320 {dimension_numbers = #tpu.dot_dimension_numbers<[1], [0], [0], [1], [0, 0, 1, 1], [], []>} : vector<1x32xf32>, vector<32x64xf32>, vector<1x64xf32> -> vector<1x64xf32>
    %498 = arith.addf %493, %497 : vector<1x64xf32>
    %499 = vector.extract_strided_slice %456 {offsets = [8, 0], sizes = [8, 32], strides = [1, 1]} : vector<16x32xf32> to vector<8x32xf32>
    %c0_321 = arith.constant 0 : index
    %c0_322 = arith.constant 0 : index
    %500 = vector.load %arg34[%c0_321, %c0_322] : memref<1x64xf32, #tpu.memory_space<vmem>>, vector<1x64xf32>
    %501 = vector.extract_strided_slice %499 {offsets = [0, 0], sizes = [1, 32], strides = [1, 1]} : vector<8x32xf32> to vector<1x32xf32>
    %c0_323 = arith.constant 0 : index
    %c0_324 = arith.constant 0 : index
    %c0_325 = arith.constant 0 : index
    %502 = vector.load %arg33[%c0_323, %c0_324, %c0_325] : memref<8x32x64xf32, #tpu.memory_space<vmem>>, vector<1x32x64xf32>
    %503 = vector.shape_cast %502 : vector<1x32x64xf32> to vector<32x64xf32>
    %cst_326 = arith.constant dense<0.000000e+00> : vector<1x64xf32>
    %504 = tpu.matmul %501, %503, %cst_326 {dimension_numbers = #tpu.dot_dimension_numbers<[1], [0], [0], [1], [0, 0, 1, 1], [], []>} : vector<1x32xf32>, vector<32x64xf32>, vector<1x64xf32> -> vector<1x64xf32>
    %505 = arith.addf %500, %504 : vector<1x64xf32>
    %506 = vector.extract_strided_slice %499 {offsets = [1, 0], sizes = [1, 32], strides = [1, 1]} : vector<8x32xf32> to vector<1x32xf32>
    %c1_327 = arith.constant 1 : index
    %c0_328 = arith.constant 0 : index
    %c0_329 = arith.constant 0 : index
    %507 = vector.load %arg33[%c1_327, %c0_328, %c0_329] : memref<8x32x64xf32, #tpu.memory_space<vmem>>, vector<1x32x64xf32>
    %508 = vector.shape_cast %507 : vector<1x32x64xf32> to vector<32x64xf32>
    %cst_330 = arith.constant dense<0.000000e+00> : vector<1x64xf32>
    %509 = tpu.matmul %506, %508, %cst_330 {dimension_numbers = #tpu.dot_dimension_numbers<[1], [0], [0], [1], [0, 0, 1, 1], [], []>} : vector<1x32xf32>, vector<32x64xf32>, vector<1x64xf32> -> vector<1x64xf32>
    %510 = arith.addf %505, %509 : vector<1x64xf32>
    %511 = vector.extract_strided_slice %499 {offsets = [2, 0], sizes = [1, 32], strides = [1, 1]} : vector<8x32xf32> to vector<1x32xf32>
    %c2_331 = arith.constant 2 : index
    %c0_332 = arith.constant 0 : index
    %c0_333 = arith.constant 0 : index
    %512 = vector.load %arg33[%c2_331, %c0_332, %c0_333] : memref<8x32x64xf32, #tpu.memory_space<vmem>>, vector<1x32x64xf32>
    %513 = vector.shape_cast %512 : vector<1x32x64xf32> to vector<32x64xf32>
    %cst_334 = arith.constant dense<0.000000e+00> : vector<1x64xf32>
    %514 = tpu.matmul %511, %513, %cst_334 {dimension_numbers = #tpu.dot_dimension_numbers<[1], [0], [0], [1], [0, 0, 1, 1], [], []>} : vector<1x32xf32>, vector<32x64xf32>, vector<1x64xf32> -> vector<1x64xf32>
    %515 = arith.addf %510, %514 : vector<1x64xf32>
    %516 = vector.extract_strided_slice %499 {offsets = [3, 0], sizes = [1, 32], strides = [1, 1]} : vector<8x32xf32> to vector<1x32xf32>
    %c3_335 = arith.constant 3 : index
    %c0_336 = arith.constant 0 : index
    %c0_337 = arith.constant 0 : index
    %517 = vector.load %arg33[%c3_335, %c0_336, %c0_337] : memref<8x32x64xf32, #tpu.memory_space<vmem>>, vector<1x32x64xf32>
    %518 = vector.shape_cast %517 : vector<1x32x64xf32> to vector<32x64xf32>
    %cst_338 = arith.constant dense<0.000000e+00> : vector<1x64xf32>
    %519 = tpu.matmul %516, %518, %cst_338 {dimension_numbers = #tpu.dot_dimension_numbers<[1], [0], [0], [1], [0, 0, 1, 1], [], []>} : vector<1x32xf32>, vector<32x64xf32>, vector<1x64xf32> -> vector<1x64xf32>
    %520 = arith.addf %515, %519 : vector<1x64xf32>
    %521 = vector.extract_strided_slice %499 {offsets = [4, 0], sizes = [1, 32], strides = [1, 1]} : vector<8x32xf32> to vector<1x32xf32>
    %c4_339 = arith.constant 4 : index
    %c0_340 = arith.constant 0 : index
    %c0_341 = arith.constant 0 : index
    %522 = vector.load %arg33[%c4_339, %c0_340, %c0_341] : memref<8x32x64xf32, #tpu.memory_space<vmem>>, vector<1x32x64xf32>
    %523 = vector.shape_cast %522 : vector<1x32x64xf32> to vector<32x64xf32>
    %cst_342 = arith.constant dense<0.000000e+00> : vector<1x64xf32>
    %524 = tpu.matmul %521, %523, %cst_342 {dimension_numbers = #tpu.dot_dimension_numbers<[1], [0], [0], [1], [0, 0, 1, 1], [], []>} : vector<1x32xf32>, vector<32x64xf32>, vector<1x64xf32> -> vector<1x64xf32>
    %525 = arith.addf %520, %524 : vector<1x64xf32>
    %526 = vector.extract_strided_slice %499 {offsets = [5, 0], sizes = [1, 32], strides = [1, 1]} : vector<8x32xf32> to vector<1x32xf32>
    %c5_343 = arith.constant 5 : index
    %c0_344 = arith.constant 0 : index
    %c0_345 = arith.constant 0 : index
    %527 = vector.load %arg33[%c5_343, %c0_344, %c0_345] : memref<8x32x64xf32, #tpu.memory_space<vmem>>, vector<1x32x64xf32>
    %528 = vector.shape_cast %527 : vector<1x32x64xf32> to vector<32x64xf32>
    %cst_346 = arith.constant dense<0.000000e+00> : vector<1x64xf32>
    %529 = tpu.matmul %526, %528, %cst_346 {dimension_numbers = #tpu.dot_dimension_numbers<[1], [0], [0], [1], [0, 0, 1, 1], [], []>} : vector<1x32xf32>, vector<32x64xf32>, vector<1x64xf32> -> vector<1x64xf32>
    %530 = arith.addf %525, %529 : vector<1x64xf32>
    %531 = vector.extract_strided_slice %499 {offsets = [6, 0], sizes = [1, 32], strides = [1, 1]} : vector<8x32xf32> to vector<1x32xf32>
    %c6_347 = arith.constant 6 : index
    %c0_348 = arith.constant 0 : index
    %c0_349 = arith.constant 0 : index
    %532 = vector.load %arg33[%c6_347, %c0_348, %c0_349] : memref<8x32x64xf32, #tpu.memory_space<vmem>>, vector<1x32x64xf32>
    %533 = vector.shape_cast %532 : vector<1x32x64xf32> to vector<32x64xf32>
    %cst_350 = arith.constant dense<0.000000e+00> : vector<1x64xf32>
    %534 = tpu.matmul %531, %533, %cst_350 {dimension_numbers = #tpu.dot_dimension_numbers<[1], [0], [0], [1], [0, 0, 1, 1], [], []>} : vector<1x32xf32>, vector<32x64xf32>, vector<1x64xf32> -> vector<1x64xf32>
    %535 = arith.addf %530, %534 : vector<1x64xf32>
    %536 = vector.extract_strided_slice %499 {offsets = [7, 0], sizes = [1, 32], strides = [1, 1]} : vector<8x32xf32> to vector<1x32xf32>
    %c7_351 = arith.constant 7 : index
    %c0_352 = arith.constant 0 : index
    %c0_353 = arith.constant 0 : index
    %537 = vector.load %arg33[%c7_351, %c0_352, %c0_353] : memref<8x32x64xf32, #tpu.memory_space<vmem>>, vector<1x32x64xf32>
    %538 = vector.shape_cast %537 : vector<1x32x64xf32> to vector<32x64xf32>
    %cst_354 = arith.constant dense<0.000000e+00> : vector<1x64xf32>
    %539 = tpu.matmul %536, %538, %cst_354 {dimension_numbers = #tpu.dot_dimension_numbers<[1], [0], [0], [1], [0, 0, 1, 1], [], []>} : vector<1x32xf32>, vector<32x64xf32>, vector<1x64xf32> -> vector<1x64xf32>
    %540 = arith.addf %535, %539 : vector<1x64xf32>
    %541 = tpu.concatenate %498, %540 in 0 : vector<1x64xf32>, vector<1x64xf32> -> vector<2x64xf32>
    %cst_355 = arith.constant 0.000000e+00 : f32
    %542 = vector.broadcast %cst_355 : f32 to vector<2x64xf32>
    %543 = arith.maximumf %541, %542 : vector<2x64xf32>
    %c0_356 = arith.constant 0 : index
    %c0_357 = arith.constant 0 : index
    %544 = vector.load %arg35[%c0_356, %c0_357] : memref<64x32xf32, #tpu.memory_space<vmem>>, vector<64x32xf32>
    %cst_358 = arith.constant dense<0.000000e+00> : vector<2x32xf32>
    %545 = tpu.matmul %543, %544, %cst_358 {dimension_numbers = #tpu.dot_dimension_numbers<[1], [0], [0], [1], [0, 0, 1, 1], [], []>} : vector<2x64xf32>, vector<64x32xf32>, vector<2x32xf32> -> vector<2x32xf32>
    %c0_359 = arith.constant 0 : index
    %c0_360 = arith.constant 0 : index
    %546 = vector.load %arg36[%c0_359, %c0_360] : memref<1x32xf32, #tpu.memory_space<vmem>>, vector<1x32xf32>
    %547 = vector.broadcast %546 : vector<1x32xf32> to vector<2x32xf32>
    %548 = arith.addf %545, %547 : vector<2x32xf32>
    %cst_361 = arith.constant 0.000000e+00 : f32
    %549 = vector.broadcast %cst_361 : f32 to vector<2x32xf32>
    %550 = arith.maximumf %548, %549 : vector<2x32xf32>
    %c0_362 = arith.constant 0 : index
    %c0_363 = arith.constant 0 : index
    %551 = vector.load %arg37[%c0_362, %c0_363] : memref<32x32xf32, #tpu.memory_space<vmem>>, vector<32x32xf32>
    %cst_364 = arith.constant dense<0.000000e+00> : vector<2x32xf32>
    %552 = tpu.matmul %550, %551, %cst_364 {dimension_numbers = #tpu.dot_dimension_numbers<[1], [0], [0], [1], [0, 0, 1, 1], [], []>} : vector<2x32xf32>, vector<32x32xf32>, vector<2x32xf32> -> vector<2x32xf32>
    %c0_365 = arith.constant 0 : index
    %c0_366 = arith.constant 0 : index
    %553 = vector.load %arg38[%c0_365, %c0_366] : memref<1x32xf32, #tpu.memory_space<vmem>>, vector<1x32xf32>
    %554 = vector.broadcast %553 : vector<1x32xf32> to vector<2x32xf32>
    %555 = arith.addf %552, %554 : vector<2x32xf32>
    %cst_367 = arith.constant 0.000000e+00 : f32
    %556 = vector.broadcast %cst_367 : f32 to vector<2x32xf32>
    %557 = arith.maximumf %555, %556 : vector<2x32xf32>
    %c0_368 = arith.constant 0 : index
    %c0_369 = arith.constant 0 : index
    %558 = vector.load %arg39[%c0_368, %c0_369] : memref<32x16xf32, #tpu.memory_space<vmem>>, vector<32x16xf32>
    %cst_370 = arith.constant dense<0.000000e+00> : vector<2x16xf32>
    %559 = tpu.matmul %557, %558, %cst_370 {dimension_numbers = #tpu.dot_dimension_numbers<[1], [0], [0], [1], [0, 0, 1, 1], [], []>} : vector<2x32xf32>, vector<32x16xf32>, vector<2x16xf32> -> vector<2x16xf32>
    %c0_371 = arith.constant 0 : index
    %c0_372 = arith.constant 0 : index
    %560 = vector.load %arg40[%c0_371, %c0_372] : memref<1x16xf32, #tpu.memory_space<vmem>>, vector<1x16xf32>
    %561 = vector.broadcast %560 : vector<1x16xf32> to vector<2x16xf32>
    %562 = arith.addf %559, %561 : vector<2x16xf32>
    %c0_373 = arith.constant 0 : index
    %c0_374 = arith.constant 0 : index
    %563 = vector.load %arg41[%c0_373, %c0_374] : memref<2x16xf32, #tpu.memory_space<vmem>>, vector<2x16xf32>
    tpu.vector_store %arg41[%c0_373, %c0_374], %562 {strides = array<i32>} : memref<2x16xf32, #tpu.memory_space<vmem>>, vector<2x16xf32>,
    return
  }
}

</mosaic_0001>

<llo_original>
// kernel: transformer_encoder_v2_forward.1
$region0: #{transformer_encoder_v2_forward.1}
  #allocation0 [shape = 'u32[]', space=smem, size = 0x4, offset = 0x4, fixed_abs, tag = 'smem constant byte address 0x4 - core index']
  #allocation1 [shape = 'u32[72,128]{1,0:T(1,128)}', space=vmem, size = 0x9000, scoped, tag = 'internal scratch']
  %s0 = inlined_call_operand.smem [shape: u32[42], index: -1, kind: input, shape index: {}]
  %s1 = sld [smem:[%s0]]
  %s2 = scalar_lea.smem %s0, 1
  %s3 = sld [smem:[%s2]]
  %s4 = scalar_lea.smem %s0, 2
  %s5 = sld [smem:[%s4]]
  %s6 = scalar_lea.smem %s0, 3
  %s7 = sld [smem:[%s6]]
  %s8 = scalar_lea.smem %s0, 4
  %s9 = sld [smem:[%s8]]
  %s10 = scalar_lea.smem %s0, 5
  %s11 = sld [smem:[%s10]]
  %s12 = scalar_lea.smem %s0, 6
  %s13 = sld [smem:[%s12]]
  %s14 = scalar_lea.smem %s0, 7
  %s15 = sld [smem:[%s14]]
  %s16 = scalar_lea.smem %s0, 8
  %s17 = sld [smem:[%s16]]
  %s18 = scalar_lea.smem %s0, 9
  %s19 = sld [smem:[%s18]]
  %s20 = scalar_lea.smem %s0, 10
  %s21 = sld [smem:[%s20]]
  %s22 = scalar_lea.smem %s0, 11
  %s23 = sld [smem:[%s22]]
  %s24 = scalar_lea.smem %s0, 12
  %s25 = sld [smem:[%s24]]
  %s26 = scalar_lea.smem %s0, 13
  %s27 = sld [smem:[%s26]]
  %s28 = scalar_lea.smem %s0, 14
  %s29 = sld [smem:[%s28]]
  %s30 = scalar_lea.smem %s0, 15
  %s31 = sld [smem:[%s30]]
  %s32 = scalar_lea.smem %s0, 16
  %s33 = sld [smem:[%s32]]
  %s34 = scalar_lea.smem %s0, 17
  %s35 = sld [smem:[%s34]]
  %s36 = scalar_lea.smem %s0, 18
  %s37 = sld [smem:[%s36]]
  %s38 = scalar_lea.smem %s0, 19
  %s39 = sld [smem:[%s38]]
  %s40 = scalar_lea.smem %s0, 20
  %s41 = sld [smem:[%s40]]
  %s42 = scalar_lea.smem %s0, 21
  %s43 = sld [smem:[%s42]]
  %s44 = scalar_lea.smem %s0, 22
  %s45 = sld [smem:[%s44]]
  %s46 = scalar_lea.smem %s0, 23
  %s47 = sld [smem:[%s46]]
  %s48 = scalar_lea.smem %s0, 24
  %s49 = sld [smem:[%s48]]
  %s50 = scalar_lea.smem %s0, 25
  %s51 = sld [smem:[%s50]]
  %s52 = scalar_lea.smem %s0, 26
  %s53 = sld [smem:[%s52]]
  %s54 = scalar_lea.smem %s0, 27
  %s55 = sld [smem:[%s54]]
  %s56 = scalar_lea.smem %s0, 28
  %s57 = sld [smem:[%s56]]
  %s58 = scalar_lea.smem %s0, 29
  %s59 = sld [smem:[%s58]]
  %s60 = scalar_lea.smem %s0, 30
  %s61 = sld [smem:[%s60]]
  %s62 = scalar_lea.smem %s0, 31
  %s63 = sld [smem:[%s62]]
  %s64 = scalar_lea.smem %s0, 32
  %s65 = sld [smem:[%s64]]
  %s66 = scalar_lea.smem %s0, 33
  %s67 = sld [smem:[%s66]]
  %s68 = scalar_lea.smem %s0, 34
  %s69 = sld [smem:[%s68]]
  %s70 = scalar_lea.smem %s0, 35
  %s71 = sld [smem:[%s70]]
  %s72 = scalar_lea.smem %s0, 36
  %s73 = sld [smem:[%s72]]
  %s74 = scalar_lea.smem %s0, 37
  %s75 = sld [smem:[%s74]]
  %s76 = scalar_lea.smem %s0, 38
  %s77 = sld [smem:[%s76]]
  %s78 = scalar_lea.smem %s0, 39
  %s79 = sld [smem:[%s78]]
  %s80 = scalar_lea.smem %s0, 40
  %s81 = sld [smem:[%s80]]
  %s82 = scalar_lea.smem %s0, 41
  %s83 = sld [smem:[%s82]]
  %s84 = sld [smem:[#allocation0]]
  $region174: #{transformer_encoder_v2_forward.1} parent=0
    _
  %s86 = ssub.s32 1, %s84
  %s87 = scalar_select 0, %s86, %s84
  $region1: #{transformer_encoder_v2_forward.1} parent=0
    #allocation2 [shape = 'u8[1024]{0}', space=vmem, size = 0x400, scoped, tag = 'output window, operand 0, single buffered']
    #allocation3 [shape = 's32[1]{0}', space=sflag, size = 0x4, scoped, tag = 'scoped memory for transformer_encoder_v2_forward.1']
    %88 = vsyncpa [#allocation3], 0
    // Predicated region
    $region2: #{transformer_encoder_v2_forward.1} parent=1 // pred_check
      _
    $region3: #{transformer_encoder_v2_forward.1} parent=1 // pred_check_branch
      %90 = sbr.rel (0) target = $region5
    $region4: #{transformer_encoder_v2_forward.1} parent=1 // pred_region
      _
    $region5: #{transformer_encoder_v2_forward.1} parent=1 // pred_fallthru
      _
    // Predicated region
    $region6: #{transformer_encoder_v2_forward.1} parent=1 // pred_check
      _
    $region7: #{transformer_encoder_v2_forward.1} parent=1 // pred_check_branch
      %92 = sbr.rel (0) target = $region9
    $region8: #{transformer_encoder_v2_forward.1} parent=1 // pred_region
      _
    $region9: #{transformer_encoder_v2_forward.1} parent=1 // pred_fallthru
      _
    // Predicated region
    $region10: #{transformer_encoder_v2_forward.1} parent=1 // pred_check
      _
    $region11: #{transformer_encoder_v2_forward.1} parent=1 // pred_check_branch
      %94 = sbr.rel (0) target = $region13
    $region12: #{transformer_encoder_v2_forward.1} parent=1 // pred_region
      _
    $region13: #{transformer_encoder_v2_forward.1} parent=1 // pred_fallthru
      _
    // Predicated region
    $region14: #{transformer_encoder_v2_forward.1} parent=1 // pred_check
      _
    $region15: #{transformer_encoder_v2_forward.1} parent=1 // pred_check_branch
      %96 = sbr.rel (0) target = $region17
    $region16: #{transformer_encoder_v2_forward.1} parent=1 // pred_region
      _
    $region17: #{transformer_encoder_v2_forward.1} parent=1 // pred_fallthru
      _
    // Predicated region
    $region18: #{transformer_encoder_v2_forward.1} parent=1 // pred_check
      _
    $region19: #{transformer_encoder_v2_forward.1} parent=1 // pred_check_branch
      %98 = sbr.rel (0) target = $region21
    $region20: #{transformer_encoder_v2_forward.1} parent=1 // pred_region
      _
    $region21: #{transformer_encoder_v2_forward.1} parent=1 // pred_fallthru
      _
    // Predicated region
    $region22: #{transformer_encoder_v2_forward.1} parent=1 // pred_check
      _
    $region23: #{transformer_encoder_v2_forward.1} parent=1 // pred_check_branch
      %100 = sbr.rel (0) target = $region25
    $region24: #{transformer_encoder_v2_forward.1} parent=1 // pred_region
      _
    $region25: #{transformer_encoder_v2_forward.1} parent=1 // pred_fallthru
      _
    // Predicated region
    $region26: #{transformer_encoder_v2_forward.1} parent=1 // pred_check
      _
    $region27: #{transformer_encoder_v2_forward.1} parent=1 // pred_check_branch
      %102 = sbr.rel (0) target = $region29
    $region28: #{transformer_encoder_v2_forward.1} parent=1 // pred_region
      _
    $region29: #{transformer_encoder_v2_forward.1} parent=1 // pred_fallthru
      _
    // Predicated region
    $region30: #{transformer_encoder_v2_forward.1} parent=1 // pred_check
      _
    $region31: #{transformer_encoder_v2_forward.1} parent=1 // pred_check_branch
      %104 = sbr.rel (0) target = $region33
    $region32: #{transformer_encoder_v2_forward.1} parent=1 // pred_region
      _
    $region33: #{transformer_encoder_v2_forward.1} parent=1 // pred_fallthru
      _
    // Predicated region
    $region34: #{transformer_encoder_v2_forward.1} parent=1 // pred_check
      _
    $region35: #{transformer_encoder_v2_forward.1} parent=1 // pred_check_branch
      %106 = sbr.rel (0) target = $region37
    $region36: #{transformer_encoder_v2_forward.1} parent=1 // pred_region
      _
    $region37: #{transformer_encoder_v2_forward.1} parent=1 // pred_fallthru
      _
    // Predicated region
    $region38: #{transformer_encoder_v2_forward.1} parent=1 // pred_check
      _
    $region39: #{transformer_encoder_v2_forward.1} parent=1 // pred_check_branch
      %108 = sbr.rel (0) target = $region41
    $region40: #{transformer_encoder_v2_forward.1} parent=1 // pred_region
      _
    $region41: #{transformer_encoder_v2_forward.1} parent=1 // pred_fallthru
      _
    // Predicated region
    $region42: #{transformer_encoder_v2_forward.1} parent=1 // pred_check
      _
    $region43: #{transformer_encoder_v2_forward.1} parent=1 // pred_check_branch
      %110 = sbr.rel (0) target = $region45
    $region44: #{transformer_encoder_v2_forward.1} parent=1 // pred_region
      _
    $region45: #{transformer_encoder_v2_forward.1} parent=1 // pred_fallthru
      _
    // Predicated region
    $region46: #{transformer_encoder_v2_forward.1} parent=1 // pred_check
      _
    $region47: #{transformer_encoder_v2_forward.1} parent=1 // pred_check_branch
      %112 = sbr.rel (0) target = $region49
    $region48: #{transformer_encoder_v2_forward.1} parent=1 // pred_region
      _
    $region49: #{transformer_encoder_v2_forward.1} parent=1 // pred_fallthru
      _
    // Predicated region
    $region50: #{transformer_encoder_v2_forward.1} parent=1 // pred_check
      _
    $region51: #{transformer_encoder_v2_forward.1} parent=1 // pred_check_branch
      %114 = sbr.rel (0) target = $region53
    $region52: #{transformer_encoder_v2_forward.1} parent=1 // pred_region
      _
    $region53: #{transformer_encoder_v2_forward.1} parent=1 // pred_fallthru
      _
    // Predicated region
    $region54: #{transformer_encoder_v2_forward.1} parent=1 // pred_check
      _
    $region55: #{transformer_encoder_v2_forward.1} parent=1 // pred_check_branch
      %116 = sbr.rel (0) target = $region57
    $region56: #{transformer_encoder_v2_forward.1} parent=1 // pred_region
      _
    $region57: #{transformer_encoder_v2_forward.1} parent=1 // pred_fallthru
      _
    // Predicated region
    $region58: #{transformer_encoder_v2_forward.1} parent=1 // pred_check
      _
    $region59: #{transformer_encoder_v2_forward.1} parent=1 // pred_check_branch
      %118 = sbr.rel (0) target = $region61
    $region60: #{transformer_encoder_v2_forward.1} parent=1 // pred_region
      _
    $region61: #{transformer_encoder_v2_forward.1} parent=1 // pred_fallthru
      _
    // Predicated region
    $region62: #{transformer_encoder_v2_forward.1} parent=1 // pred_check
      _
    $region63: #{transformer_encoder_v2_forward.1} parent=1 // pred_check_branch
      %120 = sbr.rel (0) target = $region65
    $region64: #{transformer_encoder_v2_forward.1} parent=1 // pred_region
      _
    $region65: #{transformer_encoder_v2_forward.1} parent=1 // pred_fallthru
      _
    // Predicated region
    $region66: #{transformer_encoder_v2_forward.1} parent=1 // pred_check
      _
    $region67: #{transformer_encoder_v2_forward.1} parent=1 // pred_check_branch
      %122 = sbr.rel (0) target = $region69
    $region68: #{transformer_encoder_v2_forward.1} parent=1 // pred_region
      _
    $region69: #{transformer_encoder_v2_forward.1} parent=1 // pred_fallthru
      _
    // Predicated region
    $region70: #{transformer_encoder_v2_forward.1} parent=1 // pred_check
      _
    $region71: #{transformer_encoder_v2_forward.1} parent=1 // pred_check_branch
      %124 = sbr.rel (0) target = $region73
    $region72: #{transformer_encoder_v2_forward.1} parent=1 // pred_region
      _
    $region73: #{transformer_encoder_v2_forward.1} parent=1 // pred_fallthru
      _
    // Predicated region
    $region74: #{transformer_encoder_v2_forward.1} parent=1 // pred_check
      _
    $region75: #{transformer_encoder_v2_forward.1} parent=1 // pred_check_branch
      %126 = sbr.rel (0) target = $region77
    $region76: #{transformer_encoder_v2_forward.1} parent=1 // pred_region
      _
    $region77: #{transformer_encoder_v2_forward.1} parent=1 // pred_fallthru
      _
    // Predicated region
    $region78: #{transformer_encoder_v2_forward.1} parent=1 // pred_check
      _
    $region79: #{transformer_encoder_v2_forward.1} parent=1 // pred_check_branch
      %128 = sbr.rel (0) target = $region81
    $region80: #{transformer_encoder_v2_forward.1} parent=1 // pred_region
      _
    $region81: #{transformer_encoder_v2_forward.1} parent=1 // pred_fallthru
      _
    // Predicated region
    $region82: #{transformer_encoder_v2_forward.1} parent=1 // pred_check
      _
    $region83: #{transformer_encoder_v2_forward.1} parent=1 // pred_check_branch
      %130 = sbr.rel (0) target = $region85
    $region84: #{transformer_encoder_v2_forward.1} parent=1 // pred_region
      _
    $region85: #{transformer_encoder_v2_forward.1} parent=1 // pred_fallthru
      _
    // Predicated region
    $region86: #{transformer_encoder_v2_forward.1} parent=1 // pred_check
      _
    $region87: #{transformer_encoder_v2_forward.1} parent=1 // pred_check_branch
      %132 = sbr.rel (0) target = $region89
    $region88: #{transformer_encoder_v2_forward.1} parent=1 // pred_region
      _
    $region89: #{transformer_encoder_v2_forward.1} parent=1 // pred_fallthru
      _
    // Predicated region
    $region90: #{transformer_encoder_v2_forward.1} parent=1 // pred_check
      _
    $region91: #{transformer_encoder_v2_forward.1} parent=1 // pred_check_branch
      %134 = sbr.rel (0) target = $region93
    $region92: #{transformer_encoder_v2_forward.1} parent=1 // pred_region
      _
    $region93: #{transformer_encoder_v2_forward.1} parent=1 // pred_fallthru
      _
    // Predicated region
    $region94: #{transformer_encoder_v2_forward.1} parent=1 // pred_check
      _
    $region95: #{transformer_encoder_v2_forward.1} parent=1 // pred_check_branch
      %136 = sbr.rel (0) target = $region97
    $region96: #{transformer_encoder_v2_forward.1} parent=1 // pred_region
      _
    $region97: #{transformer_encoder_v2_forward.1} parent=1 // pred_fallthru
      _
    // Predicated region
    $region98: #{transformer_encoder_v2_forward.1} parent=1 // pred_check
      _
    $region99: #{transformer_encoder_v2_forward.1} parent=1 // pred_check_branch
      %138 = sbr.rel (0) target = $region101
    $region100: #{transformer_encoder_v2_forward.1} parent=1 // pred_region
      _
    $region101: #{transformer_encoder_v2_forward.1} parent=1 // pred_fallthru
      _
    // Predicated region
    $region102: #{transformer_encoder_v2_forward.1} parent=1 // pred_check
      _
    $region103: #{transformer_encoder_v2_forward.1} parent=1 // pred_check_branch
      %140 = sbr.rel (0) target = $region105
    $region104: #{transformer_encoder_v2_forward.1} parent=1 // pred_region
      _
    $region105: #{transformer_encoder_v2_forward.1} parent=1 // pred_fallthru
      _
    // Predicated region
    $region106: #{transformer_encoder_v2_forward.1} parent=1 // pred_check
      _
    $region107: #{transformer_encoder_v2_forward.1} parent=1 // pred_check_branch
      %142 = sbr.rel (0) target = $region109
    $region108: #{transformer_encoder_v2_forward.1} parent=1 // pred_region
      _
    $region109: #{transformer_encoder_v2_forward.1} parent=1 // pred_fallthru
      _
    // Predicated region
    $region110: #{transformer_encoder_v2_forward.1} parent=1 // pred_check
      _
    $region111: #{transformer_encoder_v2_forward.1} parent=1 // pred_check_branch
      %144 = sbr.rel (0) target = $region113
    $region112: #{transformer_encoder_v2_forward.1} parent=1 // pred_region
      _
    $region113: #{transformer_encoder_v2_forward.1} parent=1 // pred_fallthru
      _
    // Predicated region
    $region114: #{transformer_encoder_v2_forward.1} parent=1 // pred_check
      _
    $region115: #{transformer_encoder_v2_forward.1} parent=1 // pred_check_branch
      %146 = sbr.rel (0) target = $region117
    $region116: #{transformer_encoder_v2_forward.1} parent=1 // pred_region
      _
    $region117: #{transformer_encoder_v2_forward.1} parent=1 // pred_fallthru
      _
    // Predicated region
    $region118: #{transformer_encoder_v2_forward.1} parent=1 // pred_check
      _
    $region119: #{transformer_encoder_v2_forward.1} parent=1 // pred_check_branch
      %148 = sbr.rel (0) target = $region121
    $region120: #{transformer_encoder_v2_forward.1} parent=1 // pred_region
      _
    $region121: #{transformer_encoder_v2_forward.1} parent=1 // pred_fallthru
      _
    // Predicated region
    $region122: #{transformer_encoder_v2_forward.1} parent=1 // pred_check
      _
    $region123: #{transformer_encoder_v2_forward.1} parent=1 // pred_check_branch
      %150 = sbr.rel (0) target = $region125
    $region124: #{transformer_encoder_v2_forward.1} parent=1 // pred_region
      _
    $region125: #{transformer_encoder_v2_forward.1} parent=1 // pred_fallthru
      _
    // Predicated region
    $region126: #{transformer_encoder_v2_forward.1} parent=1 // pred_check
      _
    $region127: #{transformer_encoder_v2_forward.1} parent=1 // pred_check_branch
      %152 = sbr.rel (0) target = $region129
    $region128: #{transformer_encoder_v2_forward.1} parent=1 // pred_region
      _
    $region129: #{transformer_encoder_v2_forward.1} parent=1 // pred_fallthru
      _
    // Predicated region
    $region130: #{transformer_encoder_v2_forward.1} parent=1 // pred_check
      _
    $region131: #{transformer_encoder_v2_forward.1} parent=1 // pred_check_branch
      %154 = sbr.rel (0) target = $region133
    $region132: #{transformer_encoder_v2_forward.1} parent=1 // pred_region
      _
    $region133: #{transformer_encoder_v2_forward.1} parent=1 // pred_fallthru
      _
    // Predicated region
    $region134: #{transformer_encoder_v2_forward.1} parent=1 // pred_check
      _
    $region135: #{transformer_encoder_v2_forward.1} parent=1 // pred_check_branch
      %156 = sbr.rel (0) target = $region137
    $region136: #{transformer_encoder_v2_forward.1} parent=1 // pred_region
      _
    $region137: #{transformer_encoder_v2_forward.1} parent=1 // pred_fallthru
      _
    // Predicated region
    $region138: #{transformer_encoder_v2_forward.1} parent=1 // pred_check
      _
    $region139: #{transformer_encoder_v2_forward.1} parent=1 // pred_check_branch
      %158 = sbr.rel (0) target = $region141
    $region140: #{transformer_encoder_v2_forward.1} parent=1 // pred_region
      _
    $region141: #{transformer_encoder_v2_forward.1} parent=1 // pred_fallthru
      _
    // Predicated region
    $region142: #{transformer_encoder_v2_forward.1} parent=1 // pred_check
      _
    $region143: #{transformer_encoder_v2_forward.1} parent=1 // pred_check_branch
      %160 = sbr.rel (0) target = $region145
    $region144: #{transformer_encoder_v2_forward.1} parent=1 // pred_region
      _
    $region145: #{transformer_encoder_v2_forward.1} parent=1 // pred_fallthru
      _
    // Predicated region
    $region146: #{transformer_encoder_v2_forward.1} parent=1 // pred_check
      _
    $region147: #{transformer_encoder_v2_forward.1} parent=1 // pred_check_branch
      %162 = sbr.rel (0) target = $region149
    $region148: #{transformer_encoder_v2_forward.1} parent=1 // pred_region
      _
    $region149: #{transformer_encoder_v2_forward.1} parent=1 // pred_fallthru
      _
    // Predicated region
    $region150: #{transformer_encoder_v2_forward.1} parent=1 // pred_check
      _
    $region151: #{transformer_encoder_v2_forward.1} parent=1 // pred_check_branch
      %164 = sbr.rel (0) target = $region153
    $region152: #{transformer_encoder_v2_forward.1} parent=1 // pred_region
      _
    $region153: #{transformer_encoder_v2_forward.1} parent=1 // pred_fallthru
      _
    // Predicated region
    $region154: #{transformer_encoder_v2_forward.1} parent=1 // pred_check
      _
    $region155: #{transformer_encoder_v2_forward.1} parent=1 // pred_check_branch
      %166 = sbr.rel (0) target = $region157
    $region156: #{transformer_encoder_v2_forward.1} parent=1 // pred_region
      _
    $region157: #{transformer_encoder_v2_forward.1} parent=1 // pred_fallthru
      _
    // Predicated region
    $region158: #{transformer_encoder_v2_forward.1} parent=1 // pred_check
      _
    $region159: #{transformer_encoder_v2_forward.1} parent=1 // pred_check_branch
      %168 = sbr.rel (0) target = $region161
    $region160: #{transformer_encoder_v2_forward.1} parent=1 // pred_region
      _
    $region161: #{transformer_encoder_v2_forward.1} parent=1 // pred_fallthru
      _
    // Predicated region
    $region162: #{transformer_encoder_v2_forward.1} parent=1 // pred_check
      _
    $region163: #{transformer_encoder_v2_forward.1} parent=1 // pred_check_branch
      %170 = sbr.rel (0) target = $region165
    $region164: #{transformer_encoder_v2_forward.1} parent=1 // pred_region
      _
    $region165: #{transformer_encoder_v2_forward.1} parent=1 // pred_fallthru
      _
    %v171 = vld [vmem:[%s1] sm:$0xff]
    %v172 = vld [vmem:[%s1 + $0x8] sm:$0xff]
    %v173 = vld [vmem:[%s17] sm:$0x1]
    %v174 = vld [vmem:[%s3] sm:$0xff]
    %v175 = vld [vmem:[%s3 + $0x8] sm:$0xff]
    %v176 = vld [vmem:[%s3 + $0x10] sm:$0xff]
    %v177 = vld [vmem:[%s3 + $0x18] sm:$0xff]
    %v178 = vld [vmem:[%s5] sm:$0x1]
    %v180 = vperm.slane %v178, 0
    %vm182 = vcmask 261120
    %v184 = vsel %vm182, %v171, 0
    %v187 = vsel %vm182, %v172, 0
    %189 = vmatpush.msra.mxu0 0.0
    %190 = vmatpush.msra.mxu0 0.0
    %191 = vmatpush.msra.mxu0 0.0
    %192 = vmatpush.msra.mxu0 0.0
    %193 = vmatpush.msra.mxu0 0.0
    %194 = vmatpush.msra.mxu0 0.0
    %195 = vmatpush.msra.mxu0 0.0
    %196 = vmatpush.msra.mxu0 0.0
    %197 = vmatpush.msra.mxu0 0.0
    %198 = vmatpush.msra.mxu0 0.0
    %199 = vmatpush.msra.mxu0 0.0
    %200 = vmatpush.msra.mxu0 0.0
    %201 = vmatpush.msra.mxu0 %v177
    %202 = vmatpush.msra.mxu0 %v176
    %203 = vmatpush.msra.mxu0 %v175
    %204 = vmatpush.msra.mxu0 %v174
    %205 = vmatmul.f32.gmra.mxu0 %v184
    %v206 = vpop.f32.mrf.mxu0
    %v207 = vadd.f32 %v180, %v206
    %208 = vmatmul.f32.gmra.mxu0 %v187
    %v209 = vpop.f32.mrf.mxu0
    %v210 = vadd.f32 %v180, %v209
    %211 = vdwg.mxu0
    %v212 = vld [vmem:[%s7] sm:$0xff]
    %v213 = vld [vmem:[%s7 + $0x8] sm:$0xff]
    %v214 = vld [vmem:[%s7 + $0x10] sm:$0xff]
    %v215 = vld [vmem:[%s7 + $0x18] sm:$0xff]
    %v216 = vld [vmem:[%s9] sm:$0x1]
    %v218 = vperm.slane %v216, 0
    %220 = vmatpush.msra.mxu0 0.0
    %221 = vmatpush.msra.mxu0 0.0
    %222 = vmatpush.msra.mxu0 0.0
    %223 = vmatpush.msra.mxu0 0.0
    %224 = vmatpush.msra.mxu0 0.0
    %225 = vmatpush.msra.mxu0 0.0
    %226 = vmatpush.msra.mxu0 0.0
    %227 = vmatpush.msra.mxu0 0.0
    %228 = vmatpush.msra.mxu0 0.0
    %229 = vmatpush.msra.mxu0 0.0
    %230 = vmatpush.msra.mxu0 0.0
    %231 = vmatpush.msra.mxu0 0.0
    %232 = vmatpush.msra.mxu0 %v215
    %233 = vmatpush.msra.mxu0 %v214
    %234 = vmatpush.msra.mxu0 %v213
    %235 = vmatpush.msra.mxu0 %v212
    %236 = vmatmul.f32.gmra.mxu0 %v184
    %v237 = vpop.f32.mrf.mxu0
    %v238 = vadd.f32 %v218, %v237
    %239 = vmatmul.f32.gmra.mxu0 %v187
    %v240 = vpop.f32.mrf.mxu0
    %v241 = vadd.f32 %v218, %v240
    %242 = vdwg.mxu0
    %v243 = vld [vmem:[%s11] sm:$0xff]
    %v244 = vld [vmem:[%s11 + $0x8] sm:$0xff]
    %v245 = vld [vmem:[%s11 + $0x10] sm:$0xff]
    %v246 = vld [vmem:[%s11 + $0x18] sm:$0xff]
    %v247 = vld [vmem:[%s13] sm:$0x1]
    %v249 = vperm.slane %v247, 0
    %251 = vmatpush.msra.mxu0 0.0
    %252 = vmatpush.msra.mxu0 0.0
    %253 = vmatpush.msra.mxu0 0.0
    %254 = vmatpush.msra.mxu0 0.0
    %255 = vmatpush.msra.mxu0 0.0
    %256 = vmatpush.msra.mxu0 0.0
    %257 = vmatpush.msra.mxu0 0.0
    %258 = vmatpush.msra.mxu0 0.0
    %259 = vmatpush.msra.mxu0 0.0
    %260 = vmatpush.msra.mxu0 0.0
    %261 = vmatpush.msra.mxu0 0.0
    %262 = vmatpush.msra.mxu0 0.0
    %263 = vmatpush.msra.mxu0 %v246
    %264 = vmatpush.msra.mxu0 %v245
    %265 = vmatpush.msra.mxu0 %v244
    %266 = vmatpush.msra.mxu0 %v243
    %267 = vmatmul.f32.gmra.mxu0 %v184
    %v268 = vpop.f32.mrf.mxu0
    %v269 = vadd.f32 %v249, %v268
    %270 = vmatmul.f32.gmra.mxu0 %v187
    %v271 = vpop.f32.mrf.mxu0
    %v272 = vadd.f32 %v249, %v271
    %273 = vdwg.mxu0
    %vm274 = vcmask 64512
    %v276 = vsel %vm274, %v207, 0
    %v279 = vsel %vm274, %v238, 0
    %281 = vmatpush.xpose.msra.mxu0 0.0
    %282 = vmatpush.xpose.msra.mxu0 0.0
    %283 = vmatpush.xpose.msra.mxu0 0.0
    %284 = vmatpush.xpose.msra.mxu0 0.0
    %285 = vmatpush.xpose.msra.mxu0 0.0
    %286 = vmatpush.xpose.msra.mxu0 0.0
    %287 = vmatpush.xpose.msra.mxu0 0.0
    %288 = vmatpush.xpose.msra.mxu0 0.0
    %289 = vmatpush.xpose.msra.mxu0 0.0
    %290 = vmatpush.xpose.msra.mxu0 0.0
    %291 = vmatpush.xpose.msra.mxu0 0.0
    %292 = vmatpush.xpose.msra.mxu0 0.0
    %293 = vmatpush.xpose.msra.mxu0 0.0
    %294 = vmatpush.xpose.msra.mxu0 0.0
    %295 = vmatpush.xpose.msra.mxu0 0.0
    %296 = vmatpush.xpose.msra.mxu0 %v279
    %297 = vmatmul.f32.gmra.mxu0 %v276
    %v298 = vpop.f32.mrf.mxu0
    %v299 = vadd.f32 0.0, %v298
    %300 = vdwg.mxu0
    %v302 = vsel %vm274, %v210, 0
    %v305 = vsel %vm274, %v241, 0
    %307 = vmatpush.xpose.msra.mxu0 0.0
    %308 = vmatpush.xpose.msra.mxu0 0.0
    %309 = vmatpush.xpose.msra.mxu0 0.0
    %310 = vmatpush.xpose.msra.mxu0 0.0
    %311 = vmatpush.xpose.msra.mxu0 0.0
    %312 = vmatpush.xpose.msra.mxu0 0.0
    %313 = vmatpush.xpose.msra.mxu0 0.0
    %314 = vmatpush.xpose.msra.mxu0 0.0
    %315 = vmatpush.xpose.msra.mxu0 0.0
    %316 = vmatpush.xpose.msra.mxu0 0.0
    %317 = vmatpush.xpose.msra.mxu0 0.0
    %318 = vmatpush.xpose.msra.mxu0 0.0
    %319 = vmatpush.xpose.msra.mxu0 0.0
    %320 = vmatpush.xpose.msra.mxu0 0.0
    %321 = vmatpush.xpose.msra.mxu0 0.0
    %322 = vmatpush.xpose.msra.mxu0 %v305
    %323 = vmatmul.f32.gmra.mxu0 %v302
    %v324 = vpop.f32.mrf.mxu0
    %v325 = vadd.f32 0.0, %v324
    %326 = vdwg.mxu0
    %v327 = vsel %vm274, %v299, -inf
    %328 = vmax.xlane.f32.xlu0 %v327
    %v329 = vpop.xlane.xlu0 %328
    %v330 = vsel %vm274, %v325, -inf
    %331 = vmax.xlane.f32.xlu0 %v330
    %v332 = vpop.xlane.xlu0 %331
    %v333 = vsub.f32 %v299, %v329
    %v334 = vsub.f32 %v325, %v332
    %v335 = vmul.f32 %v333, 1.442695
    %v336 = vpow.pop %v335
    %v337 = vmul.f32 %v334, 1.442695
    %v338 = vpow.pop %v337
    %v339 = vsel %vm274, %v336, 0.0
    %340 = vadd.xlane.f32.xlu0 %v339
    %v341 = vpop.xlane.xlu0 %340
    %v342 = vsel %vm274, %v338, 0.0
    %343 = vadd.xlane.f32.xlu0 %v342
    %v344 = vpop.xlane.xlu0 %343
    %v345 = vrcp.pop %v341
    %v346 = vrcp.pop %v344
    %v347 = vmul.f32 %v336, %v345
    %v348 = vmul.f32 %v338, %v346
    %v350 = vsel %vm274, %v347, 0
    %352 = vmatpush.msra.mxu0 0.0
    %353 = vmatpush.msra.mxu0 0.0
    %354 = vmatpush.msra.mxu0 0.0
    %355 = vmatpush.msra.mxu0 0.0
    %356 = vmatpush.msra.mxu0 0.0
    %357 = vmatpush.msra.mxu0 0.0
    %358 = vmatpush.msra.mxu0 0.0
    %359 = vmatpush.msra.mxu0 0.0
    %360 = vmatpush.msra.mxu0 0.0
    %361 = vmatpush.msra.mxu0 0.0
    %362 = vmatpush.msra.mxu0 0.0
    %363 = vmatpush.msra.mxu0 0.0
    %364 = vmatpush.msra.mxu0 0.0
    %365 = vmatpush.msra.mxu0 0.0
    %366 = vmatpush.msra.mxu0 0.0
    %367 = vmatpush.msra.mxu0 %v269
    %368 = vmatmul.f32.gmra.mxu0 %v350
    %v369 = vpop.f32.mrf.mxu0
    %v370 = vadd.f32 0.0, %v369
    %371 = vdwg.mxu0
    %v373 = vsel %vm274, %v348, 0
    %375 = vmatpush.msra.mxu0 0.0
    %376 = vmatpush.msra.mxu0 0.0
    %377 = vmatpush.msra.mxu0 0.0
    %378 = vmatpush.msra.mxu0 0.0
    %379 = vmatpush.msra.mxu0 0.0
    %380 = vmatpush.msra.mxu0 0.0
    %381 = vmatpush.msra.mxu0 0.0
    %382 = vmatpush.msra.mxu0 0.0
    %383 = vmatpush.msra.mxu0 0.0
    %384 = vmatpush.msra.mxu0 0.0
    %385 = vmatpush.msra.mxu0 0.0
    %386 = vmatpush.msra.mxu0 0.0
    %387 = vmatpush.msra.mxu0 0.0
    %388 = vmatpush.msra.mxu0 0.0
    %389 = vmatpush.msra.mxu0 0.0
    %390 = vmatpush.msra.mxu0 %v272
    %391 = vmatmul.f32.gmra.mxu0 %v373
    %v392 = vpop.f32.mrf.mxu0
    %v393 = vadd.f32 0.0, %v392
    %394 = vdwg.mxu0
    %v395 = vld [vmem:[%s15] sm:$0xff]
    %v397 = vsel %vm274, %v370, 0
    %v400 = vsel %vm274, %v393, 0
    %402 = vmatpush.msra.mxu0 0.0
    %403 = vmatpush.msra.mxu0 0.0
    %404 = vmatpush.msra.mxu0 0.0
    %405 = vmatpush.msra.mxu0 0.0
    %406 = vmatpush.msra.mxu0 0.0
    %407 = vmatpush.msra.mxu0 0.0
    %408 = vmatpush.msra.mxu0 0.0
    %409 = vmatpush.msra.mxu0 0.0
    %410 = vmatpush.msra.mxu0 0.0
    %411 = vmatpush.msra.mxu0 0.0
    %412 = vmatpush.msra.mxu0 0.0
    %413 = vmatpush.msra.mxu0 0.0
    %414 = vmatpush.msra.mxu0 0.0
    %415 = vmatpush.msra.mxu0 0.0
    %416 = vmatpush.msra.mxu0 0.0
    %417 = vmatpush.msra.mxu0 %v395
    %418 = vmatmul.f32.gmra.mxu0 %v397
    %v419 = vpop.f32.mrf.mxu0
    %v420 = vadd.f32 0.0, %v419
    %421 = vmatmul.f32.gmra.mxu0 %v400
    %v422 = vpop.f32.mrf.mxu0
    %v423 = vadd.f32 0.0, %v422
    %424 = vdwg.mxu0
    %v426 = vperm.slane %v173, 0
    %v428 = vadd.f32 %v426, %v420
    %v429 = vadd.f32 %v426, %v423
    %s430 = scalar_lea.vmem %s3, 32
    %v431 = vld [vmem:[%s430] sm:$0xff]
    %v432 = vld [vmem:[%s430 + $0x8] sm:$0xff]
    %v433 = vld [vmem:[%s430 + $0x10] sm:$0xff]
    %v434 = vld [vmem:[%s430 + $0x18] sm:$0xff]
    %s435 = scalar_lea.vmem %s5, 1
    %v436 = vld [vmem:[%s435] sm:$0x1]
    %v438 = vperm.slane %v436, 0
    %440 = vmatpush.msra.mxu0 0.0
    %441 = vmatpush.msra.mxu0 0.0
    %442 = vmatpush.msra.mxu0 0.0
    %443 = vmatpush.msra.mxu0 0.0
    %444 = vmatpush.msra.mxu0 0.0
    %445 = vmatpush.msra.mxu0 0.0
    %446 = vmatpush.msra.mxu0 0.0
    %447 = vmatpush.msra.mxu0 0.0
    %448 = vmatpush.msra.mxu0 0.0
    %449 = vmatpush.msra.mxu0 0.0
    %450 = vmatpush.msra.mxu0 0.0
    %451 = vmatpush.msra.mxu0 0.0
    %452 = vmatpush.msra.mxu0 %v434
    %453 = vmatpush.msra.mxu0 %v433
    %454 = vmatpush.msra.mxu0 %v432
    %455 = vmatpush.msra.mxu0 %v431
    %456 = vmatmul.f32.gmra.mxu0 %v184
    %v457 = vpop.f32.mrf.mxu0
    %v458 = vadd.f32 %v438, %v457
    %459 = vmatmul.f32.gmra.mxu0 %v187
    %v460 = vpop.f32.mrf.mxu0
    %v461 = vadd.f32 %v438, %v460
    %462 = vdwg.mxu0
    %s463 = scalar_lea.vmem %s7, 32
    %v464 = vld [vmem:[%s463] sm:$0xff]
    %v465 = vld [vmem:[%s463 + $0x8] sm:$0xff]
    %v466 = vld [vmem:[%s463 + $0x10] sm:$0xff]
    %v467 = vld [vmem:[%s463 + $0x18] sm:$0xff]
    %s468 = scalar_lea.vmem %s9, 1
    %v469 = vld [vmem:[%s468] sm:$0x1]
    %v471 = vperm.slane %v469, 0
    %473 = vmatpush.msra.mxu0 0.0
    %474 = vmatpush.msra.mxu0 0.0
    %475 = vmatpush.msra.mxu0 0.0
    %476 = vmatpush.msra.mxu0 0.0
    %477 = vmatpush.msra.mxu0 0.0
    %478 = vmatpush.msra.mxu0 0.0
    %479 = vmatpush.msra.mxu0 0.0
    %480 = vmatpush.msra.mxu0 0.0
    %481 = vmatpush.msra.mxu0 0.0
    %482 = vmatpush.msra.mxu0 0.0
    %483 = vmatpush.msra.mxu0 0.0
    %484 = vmatpush.msra.mxu0 0.0
    %485 = vmatpush.msra.mxu0 %v467
    %486 = vmatpush.msra.mxu0 %v466
    %487 = vmatpush.msra.mxu0 %v465
    %488 = vmatpush.msra.mxu0 %v464
    %489 = vmatmul.f32.gmra.mxu0 %v184
    %v490 = vpop.f32.mrf.mxu0
    %v491 = vadd.f32 %v471, %v490
    %492 = vmatmul.f32.gmra.mxu0 %v187
    %v493 = vpop.f32.mrf.mxu0
    %v494 = vadd.f32 %v471, %v493
    %495 = vdwg.mxu0
    %s496 = scalar_lea.vmem %s11, 32
    %v497 = vld [vmem:[%s496] sm:$0xff]
    %v498 = vld [vmem:[%s496 + $0x8] sm:$0xff]
    %v499 = vld [vmem:[%s496 + $0x10] sm:$0xff]
    %v500 = vld [vmem:[%s496 + $0x18] sm:$0xff]
    %s501 = scalar_lea.vmem %s13, 1
    %v502 = vld [vmem:[%s501] sm:$0x1]
    %v504 = vperm.slane %v502, 0
    %506 = vmatpush.msra.mxu0 0.0
    %507 = vmatpush.msra.mxu0 0.0
    %508 = vmatpush.msra.mxu0 0.0
    %509 = vmatpush.msra.mxu0 0.0
    %510 = vmatpush.msra.mxu0 0.0
    %511 = vmatpush.msra.mxu0 0.0
    %512 = vmatpush.msra.mxu0 0.0
    %513 = vmatpush.msra.mxu0 0.0
    %514 = vmatpush.msra.mxu0 0.0
    %515 = vmatpush.msra.mxu0 0.0
    %516 = vmatpush.msra.mxu0 0.0
    %517 = vmatpush.msra.mxu0 0.0
    %518 = vmatpush.msra.mxu0 %v500
    %519 = vmatpush.msra.mxu0 %v499
    %520 = vmatpush.msra.mxu0 %v498
    %521 = vmatpush.msra.mxu0 %v497
    %522 = vmatmul.f32.gmra.mxu0 %v184
    %v523 = vpop.f32.mrf.mxu0
    %v524 = vadd.f32 %v504, %v523
    %525 = vmatmul.f32.gmra.mxu0 %v187
    %v526 = vpop.f32.mrf.mxu0
    %v527 = vadd.f32 %v504, %v526
    %528 = vdwg.mxu0
    %v530 = vsel %vm274, %v458, 0
    %v533 = vsel %vm274, %v491, 0
    %535 = vmatpush.xpose.msra.mxu0 0.0
    %536 = vmatpush.xpose.msra.mxu0 0.0
    %537 = vmatpush.xpose.msra.mxu0 0.0
    %538 = vmatpush.xpose.msra.mxu0 0.0
    %539 = vmatpush.xpose.msra.mxu0 0.0
    %540 = vmatpush.xpose.msra.mxu0 0.0
    %541 = vmatpush.xpose.msra.mxu0 0.0
    %542 = vmatpush.xpose.msra.mxu0 0.0
    %543 = vmatpush.xpose.msra.mxu0 0.0
    %544 = vmatpush.xpose.msra.mxu0 0.0
    %545 = vmatpush.xpose.msra.mxu0 0.0
    %546 = vmatpush.xpose.msra.mxu0 0.0
    %547 = vmatpush.xpose.msra.mxu0 0.0
    %548 = vmatpush.xpose.msra.mxu0 0.0
    %549 = vmatpush.xpose.msra.mxu0 0.0
    %550 = vmatpush.xpose.msra.mxu0 %v533
    %551 = vmatmul.f32.gmra.mxu0 %v530
    %v552 = vpop.f32.mrf.mxu0
    %v553 = vadd.f32 0.0, %v552
    %554 = vdwg.mxu0
    %v556 = vsel %vm274, %v461, 0
    %v559 = vsel %vm274, %v494, 0
    %561 = vmatpush.xpose.msra.mxu0 0.0
    %562 = vmatpush.xpose.msra.mxu0 0.0
    %563 = vmatpush.xpose.msra.mxu0 0.0
    %564 = vmatpush.xpose.msra.mxu0 0.0
    %565 = vmatpush.xpose.msra.mxu0 0.0
    %566 = vmatpush.xpose.msra.mxu0 0.0
    %567 = vmatpush.xpose.msra.mxu0 0.0
    %568 = vmatpush.xpose.msra.mxu0 0.0
    %569 = vmatpush.xpose.msra.mxu0 0.0
    %570 = vmatpush.xpose.msra.mxu0 0.0
    %571 = vmatpush.xpose.msra.mxu0 0.0
    %572 = vmatpush.xpose.msra.mxu0 0.0
    %573 = vmatpush.xpose.msra.mxu0 0.0
    %574 = vmatpush.xpose.msra.mxu0 0.0
    %575 = vmatpush.xpose.msra.mxu0 0.0
    %576 = vmatpush.xpose.msra.mxu0 %v559
    %577 = vmatmul.f32.gmra.mxu0 %v556
    %v578 = vpop.f32.mrf.mxu0
    %v579 = vadd.f32 0.0, %v578
    %580 = vdwg.mxu0
    %v581 = vsel %vm274, %v553, -inf
    %582 = vmax.xlane.f32.xlu0 %v581
    %v583 = vpop.xlane.xlu0 %582
    %v584 = vsel %vm274, %v579, -inf
    %585 = vmax.xlane.f32.xlu0 %v584
    %v586 = vpop.xlane.xlu0 %585
    %v587 = vsub.f32 %v553, %v583
    %v588 = vsub.f32 %v579, %v586
    %v589 = vmul.f32 %v587, 1.442695
    %v590 = vpow.pop %v589
    %v591 = vmul.f32 %v588, 1.442695
    %v592 = vpow.pop %v591
    %v593 = vsel %vm274, %v590, 0.0
    %594 = vadd.xlane.f32.xlu0 %v593
    %v595 = vpop.xlane.xlu0 %594
    %v596 = vsel %vm274, %v592, 0.0
    %597 = vadd.xlane.f32.xlu0 %v596
    %v598 = vpop.xlane.xlu0 %597
    %v599 = vrcp.pop %v595
    %v600 = vrcp.pop %v598
    %v601 = vmul.f32 %v590, %v599
    %v602 = vmul.f32 %v592, %v600
    %v604 = vsel %vm274, %v601, 0
    %606 = vmatpush.msra.mxu0 0.0
    %607 = vmatpush.msra.mxu0 0.0
    %608 = vmatpush.msra.mxu0 0.0
    %609 = vmatpush.msra.mxu0 0.0
    %610 = vmatpush.msra.mxu0 0.0
    %611 = vmatpush.msra.mxu0 0.0
    %612 = vmatpush.msra.mxu0 0.0
    %613 = vmatpush.msra.mxu0 0.0
    %614 = vmatpush.msra.mxu0 0.0
    %615 = vmatpush.msra.mxu0 0.0
    %616 = vmatpush.msra.mxu0 0.0
    %617 = vmatpush.msra.mxu0 0.0
    %618 = vmatpush.msra.mxu0 0.0
    %619 = vmatpush.msra.mxu0 0.0
    %620 = vmatpush.msra.mxu0 0.0
    %621 = vmatpush.msra.mxu0 %v524
    %622 = vmatmul.f32.gmra.mxu0 %v604
    %v623 = vpop.f32.mrf.mxu0
    %v624 = vadd.f32 0.0, %v623
    %625 = vdwg.mxu0
    %v627 = vsel %vm274, %v602, 0
    %629 = vmatpush.msra.mxu0 0.0
    %630 = vmatpush.msra.mxu0 0.0
    %631 = vmatpush.msra.mxu0 0.0
    %632 = vmatpush.msra.mxu0 0.0
    %633 = vmatpush.msra.mxu0 0.0
    %634 = vmatpush.msra.mxu0 0.0
    %635 = vmatpush.msra.mxu0 0.0
    %636 = vmatpush.msra.mxu0 0.0
    %637 = vmatpush.msra.mxu0 0.0
    %638 = vmatpush.msra.mxu0 0.0
    %639 = vmatpush.msra.mxu0 0.0
    %640 = vmatpush.msra.mxu0 0.0
    %641 = vmatpush.msra.mxu0 0.0
    %642 = vmatpush.msra.mxu0 0.0
    %643 = vmatpush.msra.mxu0 0.0
    %644 = vmatpush.msra.mxu0 %v527
    %645 = vmatmul.f32.gmra.mxu0 %v627
    %v646 = vpop.f32.mrf.mxu0
    %v647 = vadd.f32 0.0, %v646
    %648 = vdwg.mxu0
    %s649 = scalar_lea.vmem %s15, 8
    %v650 = vld [vmem:[%s649] sm:$0xff]
    %v652 = vsel %vm274, %v624, 0
    %v655 = vsel %vm274, %v647, 0
    %657 = vmatpush.msra.mxu0 0.0
    %658 = vmatpush.msra.mxu0 0.0
    %659 = vmatpush.msra.mxu0 0.0
    %660 = vmatpush.msra.mxu0 0.0
    %661 = vmatpush.msra.mxu0 0.0
    %662 = vmatpush.msra.mxu0 0.0
    %663 = vmatpush.msra.mxu0 0.0
    %664 = vmatpush.msra.mxu0 0.0
    %665 = vmatpush.msra.mxu0 0.0
    %666 = vmatpush.msra.mxu0 0.0
    %667 = vmatpush.msra.mxu0 0.0
    %668 = vmatpush.msra.mxu0 0.0
    %669 = vmatpush.msra.mxu0 0.0
    %670 = vmatpush.msra.mxu0 0.0
    %671 = vmatpush.msra.mxu0 0.0
    %672 = vmatpush.msra.mxu0 %v650
    %673 = vmatmul.f32.gmra.mxu0 %v652
    %v674 = vpop.f32.mrf.mxu0
    %v675 = vadd.f32 0.0, %v674
    %676 = vmatmul.f32.gmra.mxu0 %v655
    %v677 = vpop.f32.mrf.mxu0
    %v678 = vadd.f32 0.0, %v677
    %679 = vdwg.mxu0
    %v680 = vadd.f32 %v428, %v675
    %v681 = vadd.f32 %v429, %v678
    %s682 = scalar_lea.vmem %s3, 64
    %v683 = vld [vmem:[%s682] sm:$0xff]
    %v684 = vld [vmem:[%s682 + $0x8] sm:$0xff]
    %v685 = vld [vmem:[%s682 + $0x10] sm:$0xff]
    %v686 = vld [vmem:[%s682 + $0x18] sm:$0xff]
    %s687 = scalar_lea.vmem %s5, 2
    %v688 = vld [vmem:[%s687] sm:$0x1]
    %v690 = vperm.slane %v688, 0
    %692 = vmatpush.msra.mxu0 0.0
    %693 = vmatpush.msra.mxu0 0.0
    %694 = vmatpush.msra.mxu0 0.0
    %695 = vmatpush.msra.mxu0 0.0
    %696 = vmatpush.msra.mxu0 0.0
    %697 = vmatpush.msra.mxu0 0.0
    %698 = vmatpush.msra.mxu0 0.0
    %699 = vmatpush.msra.mxu0 0.0
    %700 = vmatpush.msra.mxu0 0.0
    %701 = vmatpush.msra.mxu0 0.0
    %702 = vmatpush.msra.mxu0 0.0
    %703 = vmatpush.msra.mxu0 0.0
    %704 = vmatpush.msra.mxu0 %v686
    %705 = vmatpush.msra.mxu0 %v685
    %706 = vmatpush.msra.mxu0 %v684
    %707 = vmatpush.msra.mxu0 %v683
    %708 = vmatmul.f32.gmra.mxu0 %v184
    %v709 = vpop.f32.mrf.mxu0
    %v710 = vadd.f32 %v690, %v709
    %711 = vmatmul.f32.gmra.mxu0 %v187
    %v712 = vpop.f32.mrf.mxu0
    %v713 = vadd.f32 %v690, %v712
    %714 = vdwg.mxu0
    %s715 = scalar_lea.vmem %s7, 64
    %v716 = vld [vmem:[%s715] sm:$0xff]
    %v717 = vld [vmem:[%s715 + $0x8] sm:$0xff]
    %v718 = vld [vmem:[%s715 + $0x10] sm:$0xff]
    %v719 = vld [vmem:[%s715 + $0x18] sm:$0xff]
    %s720 = scalar_lea.vmem %s9, 2
    %v721 = vld [vmem:[%s720] sm:$0x1]
    %v723 = vperm.slane %v721, 0
    %725 = vmatpush.msra.mxu0 0.0
    %726 = vmatpush.msra.mxu0 0.0
    %727 = vmatpush.msra.mxu0 0.0
    %728 = vmatpush.msra.mxu0 0.0
    %729 = vmatpush.msra.mxu0 0.0
    %730 = vmatpush.msra.mxu0 0.0
    %731 = vmatpush.msra.mxu0 0.0
    %732 = vmatpush.msra.mxu0 0.0
    %733 = vmatpush.msra.mxu0 0.0
    %734 = vmatpush.msra.mxu0 0.0
    %735 = vmatpush.msra.mxu0 0.0
    %736 = vmatpush.msra.mxu0 0.0
    %737 = vmatpush.msra.mxu0 %v719
    %738 = vmatpush.msra.mxu0 %v718
    %739 = vmatpush.msra.mxu0 %v717
    %740 = vmatpush.msra.mxu0 %v716
    %741 = vmatmul.f32.gmra.mxu0 %v184
    %v742 = vpop.f32.mrf.mxu0
    %v743 = vadd.f32 %v723, %v742
    %744 = vmatmul.f32.gmra.mxu0 %v187
    %v745 = vpop.f32.mrf.mxu0
    %v746 = vadd.f32 %v723, %v745
    %747 = vdwg.mxu0
    %s748 = scalar_lea.vmem %s11, 64
    %v749 = vld [vmem:[%s748] sm:$0xff]
    %v750 = vld [vmem:[%s748 + $0x8] sm:$0xff]
    %v751 = vld [vmem:[%s748 + $0x10] sm:$0xff]
    %v752 = vld [vmem:[%s748 + $0x18] sm:$0xff]
    %s753 = scalar_lea.vmem %s13, 2
    %v754 = vld [vmem:[%s753] sm:$0x1]
    %v756 = vperm.slane %v754, 0
    %758 = vmatpush.msra.mxu0 0.0
    %759 = vmatpush.msra.mxu0 0.0
    %760 = vmatpush.msra.mxu0 0.0
    %761 = vmatpush.msra.mxu0 0.0
    %762 = vmatpush.msra.mxu0 0.0
    %763 = vmatpush.msra.mxu0 0.0
    %764 = vmatpush.msra.mxu0 0.0
    %765 = vmatpush.msra.mxu0 0.0
    %766 = vmatpush.msra.mxu0 0.0
    %767 = vmatpush.msra.mxu0 0.0
    %768 = vmatpush.msra.mxu0 0.0
    %769 = vmatpush.msra.mxu0 0.0
    %770 = vmatpush.msra.mxu0 %v752
    %771 = vmatpush.msra.mxu0 %v751
    %772 = vmatpush.msra.mxu0 %v750
    %773 = vmatpush.msra.mxu0 %v749
    %774 = vmatmul.f32.gmra.mxu0 %v184
    %v775 = vpop.f32.mrf.mxu0
    %v776 = vadd.f32 %v756, %v775
    %777 = vmatmul.f32.gmra.mxu0 %v187
    %v778 = vpop.f32.mrf.mxu0
    %v779 = vadd.f32 %v756, %v778
    %780 = vdwg.mxu0
    %v782 = vsel %vm274, %v710, 0
    %v785 = vsel %vm274, %v743, 0
    %787 = vmatpush.xpose.msra.mxu0 0.0
    %788 = vmatpush.xpose.msra.mxu0 0.0
    %789 = vmatpush.xpose.msra.mxu0 0.0
    %790 = vmatpush.xpose.msra.mxu0 0.0
    %791 = vmatpush.xpose.msra.mxu0 0.0
    %792 = vmatpush.xpose.msra.mxu0 0.0
    %793 = vmatpush.xpose.msra.mxu0 0.0
    %794 = vmatpush.xpose.msra.mxu0 0.0
    %795 = vmatpush.xpose.msra.mxu0 0.0
    %796 = vmatpush.xpose.msra.mxu0 0.0
    %797 = vmatpush.xpose.msra.mxu0 0.0
    %798 = vmatpush.xpose.msra.mxu0 0.0
    %799 = vmatpush.xpose.msra.mxu0 0.0
    %800 = vmatpush.xpose.msra.mxu0 0.0
    %801 = vmatpush.xpose.msra.mxu0 0.0
    %802 = vmatpush.xpose.msra.mxu0 %v785
    %803 = vmatmul.f32.gmra.mxu0 %v782
    %v804 = vpop.f32.mrf.mxu0
    %v805 = vadd.f32 0.0, %v804
    %806 = vdwg.mxu0
    %v808 = vsel %vm274, %v713, 0
    %v811 = vsel %vm274, %v746, 0
    %813 = vmatpush.xpose.msra.mxu0 0.0
    %814 = vmatpush.xpose.msra.mxu0 0.0
    %815 = vmatpush.xpose.msra.mxu0 0.0
    %816 = vmatpush.xpose.msra.mxu0 0.0
    %817 = vmatpush.xpose.msra.mxu0 0.0
    %818 = vmatpush.xpose.msra.mxu0 0.0
    %819 = vmatpush.xpose.msra.mxu0 0.0
    %820 = vmatpush.xpose.msra.mxu0 0.0
    %821 = vmatpush.xpose.msra.mxu0 0.0
    %822 = vmatpush.xpose.msra.mxu0 0.0
    %823 = vmatpush.xpose.msra.mxu0 0.0
    %824 = vmatpush.xpose.msra.mxu0 0.0
    %825 = vmatpush.xpose.msra.mxu0 0.0
    %826 = vmatpush.xpose.msra.mxu0 0.0
    %827 = vmatpush.xpose.msra.mxu0 0.0
    %828 = vmatpush.xpose.msra.mxu0 %v811
    %829 = vmatmul.f32.gmra.mxu0 %v808
    %v830 = vpop.f32.mrf.mxu0
    %v831 = vadd.f32 0.0, %v830
    %832 = vdwg.mxu0
    %v833 = vsel %vm274, %v805, -inf
    %834 = vmax.xlane.f32.xlu0 %v833
    %v835 = vpop.xlane.xlu0 %834
    %v836 = vsel %vm274, %v831, -inf
    %837 = vmax.xlane.f32.xlu0 %v836
    %v838 = vpop.xlane.xlu0 %837
    %v839 = vsub.f32 %v805, %v835
    %v840 = vsub.f32 %v831, %v838
    %v841 = vmul.f32 %v839, 1.442695
    %v842 = vpow.pop %v841
    %v843 = vmul.f32 %v840, 1.442695
    %v844 = vpow.pop %v843
    %v845 = vsel %vm274, %v842, 0.0
    %846 = vadd.xlane.f32.xlu0 %v845
    %v847 = vpop.xlane.xlu0 %846
    %v848 = vsel %vm274, %v844, 0.0
    %849 = vadd.xlane.f32.xlu0 %v848
    %v850 = vpop.xlane.xlu0 %849
    %v851 = vrcp.pop %v847
    %v852 = vrcp.pop %v850
    %v853 = vmul.f32 %v842, %v851
    %v854 = vmul.f32 %v844, %v852
    %v856 = vsel %vm274, %v853, 0
    %858 = vmatpush.msra.mxu0 0.0
    %859 = vmatpush.msra.mxu0 0.0
    %860 = vmatpush.msra.mxu0 0.0
    %861 = vmatpush.msra.mxu0 0.0
    %862 = vmatpush.msra.mxu0 0.0
    %863 = vmatpush.msra.mxu0 0.0
    %864 = vmatpush.msra.mxu0 0.0
    %865 = vmatpush.msra.mxu0 0.0
    %866 = vmatpush.msra.mxu0 0.0
    %867 = vmatpush.msra.mxu0 0.0
    %868 = vmatpush.msra.mxu0 0.0
    %869 = vmatpush.msra.mxu0 0.0
    %870 = vmatpush.msra.mxu0 0.0
    %871 = vmatpush.msra.mxu0 0.0
    %872 = vmatpush.msra.mxu0 0.0
    %873 = vmatpush.msra.mxu0 %v776
    %874 = vmatmul.f32.gmra.mxu0 %v856
    %v875 = vpop.f32.mrf.mxu0
    %v876 = vadd.f32 0.0, %v875
    %877 = vdwg.mxu0
    %v879 = vsel %vm274, %v854, 0
    %881 = vmatpush.msra.mxu0 0.0
    %882 = vmatpush.msra.mxu0 0.0
    %883 = vmatpush.msra.mxu0 0.0
    %884 = vmatpush.msra.mxu0 0.0
    %885 = vmatpush.msra.mxu0 0.0
    %886 = vmatpush.msra.mxu0 0.0
    %887 = vmatpush.msra.mxu0 0.0
    %888 = vmatpush.msra.mxu0 0.0
    %889 = vmatpush.msra.mxu0 0.0
    %890 = vmatpush.msra.mxu0 0.0
    %891 = vmatpush.msra.mxu0 0.0
    %892 = vmatpush.msra.mxu0 0.0
    %893 = vmatpush.msra.mxu0 0.0
    %894 = vmatpush.msra.mxu0 0.0
    %895 = vmatpush.msra.mxu0 0.0
    %896 = vmatpush.msra.mxu0 %v779
    %897 = vmatmul.f32.gmra.mxu0 %v879
    %v898 = vpop.f32.mrf.mxu0
    %v899 = vadd.f32 0.0, %v898
    %900 = vdwg.mxu0
    %s901 = scalar_lea.vmem %s15, 16
    %v902 = vld [vmem:[%s901] sm:$0xff]
    %v904 = vsel %vm274, %v876, 0
    %v907 = vsel %vm274, %v899, 0
    %909 = vmatpush.msra.mxu0 0.0
    %910 = vmatpush.msra.mxu0 0.0
    %911 = vmatpush.msra.mxu0 0.0
    %912 = vmatpush.msra.mxu0 0.0
    %913 = vmatpush.msra.mxu0 0.0
    %914 = vmatpush.msra.mxu0 0.0
    %915 = vmatpush.msra.mxu0 0.0
    %916 = vmatpush.msra.mxu0 0.0
    %917 = vmatpush.msra.mxu0 0.0
    %918 = vmatpush.msra.mxu0 0.0
    %919 = vmatpush.msra.mxu0 0.0
    %920 = vmatpush.msra.mxu0 0.0
    %921 = vmatpush.msra.mxu0 0.0
    %922 = vmatpush.msra.mxu0 0.0
    %923 = vmatpush.msra.mxu0 0.0
    %924 = vmatpush.msra.mxu0 %v902
    %925 = vmatmul.f32.gmra.mxu0 %v904
    %v926 = vpop.f32.mrf.mxu0
    %v927 = vadd.f32 0.0, %v926
    %928 = vmatmul.f32.gmra.mxu0 %v907
    %v929 = vpop.f32.mrf.mxu0
    %v930 = vadd.f32 0.0, %v929
    %931 = vdwg.mxu0
    %v932 = vadd.f32 %v680, %v927
    %v933 = vadd.f32 %v681, %v930
    %s934 = scalar_lea.vmem %s3, 96
    %v935 = vld [vmem:[%s934] sm:$0xff]
    %v936 = vld [vmem:[%s934 + $0x8] sm:$0xff]
    %v937 = vld [vmem:[%s934 + $0x10] sm:$0xff]
    %v938 = vld [vmem:[%s934 + $0x18] sm:$0xff]
    %s939 = scalar_lea.vmem %s5, 3
    %v940 = vld [vmem:[%s939] sm:$0x1]
    %v942 = vperm.slane %v940, 0
    %944 = vmatpush.msra.mxu0 0.0
    %945 = vmatpush.msra.mxu0 0.0
    %946 = vmatpush.msra.mxu0 0.0
    %947 = vmatpush.msra.mxu0 0.0
    %948 = vmatpush.msra.mxu0 0.0
    %949 = vmatpush.msra.mxu0 0.0
    %950 = vmatpush.msra.mxu0 0.0
    %951 = vmatpush.msra.mxu0 0.0
    %952 = vmatpush.msra.mxu0 0.0
    %953 = vmatpush.msra.mxu0 0.0
    %954 = vmatpush.msra.mxu0 0.0
    %955 = vmatpush.msra.mxu0 0.0
    %956 = vmatpush.msra.mxu0 %v938
    %957 = vmatpush.msra.mxu0 %v937
    %958 = vmatpush.msra.mxu0 %v936
    %959 = vmatpush.msra.mxu0 %v935
    %960 = vmatmul.f32.gmra.mxu0 %v184
    %v961 = vpop.f32.mrf.mxu0
    %v962 = vadd.f32 %v942, %v961
    %963 = vmatmul.f32.gmra.mxu0 %v187
    %v964 = vpop.f32.mrf.mxu0
    %v965 = vadd.f32 %v942, %v964
    %966 = vdwg.mxu0
    %s967 = scalar_lea.vmem %s7, 96
    %v968 = vld [vmem:[%s967] sm:$0xff]
    %v969 = vld [vmem:[%s967 + $0x8] sm:$0xff]
    %v970 = vld [vmem:[%s967 + $0x10] sm:$0xff]
    %v971 = vld [vmem:[%s967 + $0x18] sm:$0xff]
    %s972 = scalar_lea.vmem %s9, 3
    %v973 = vld [vmem:[%s972] sm:$0x1]
    %v975 = vperm.slane %v973, 0
    %977 = vmatpush.msra.mxu0 0.0
    %978 = vmatpush.msra.mxu0 0.0
    %979 = vmatpush.msra.mxu0 0.0
    %980 = vmatpush.msra.mxu0 0.0
    %981 = vmatpush.msra.mxu0 0.0
    %982 = vmatpush.msra.mxu0 0.0
    %983 = vmatpush.msra.mxu0 0.0
    %984 = vmatpush.msra.mxu0 0.0
    %985 = vmatpush.msra.mxu0 0.0
    %986 = vmatpush.msra.mxu0 0.0
    %987 = vmatpush.msra.mxu0 0.0
    %988 = vmatpush.msra.mxu0 0.0
    %989 = vmatpush.msra.mxu0 %v971
    %990 = vmatpush.msra.mxu0 %v970
    %991 = vmatpush.msra.mxu0 %v969
    %992 = vmatpush.msra.mxu0 %v968
    %993 = vmatmul.f32.gmra.mxu0 %v184
    %v994 = vpop.f32.mrf.mxu0
    %v995 = vadd.f32 %v975, %v994
    %996 = vmatmul.f32.gmra.mxu0 %v187
    %v997 = vpop.f32.mrf.mxu0
    %v998 = vadd.f32 %v975, %v997
    %999 = vdwg.mxu0
    %s1000 = scalar_lea.vmem %s11, 96
    %v1001 = vld [vmem:[%s1000] sm:$0xff]
    %v1002 = vld [vmem:[%s1000 + $0x8] sm:$0xff]
    %v1003 = vld [vmem:[%s1000 + $0x10] sm:$0xff]
    %v1004 = vld [vmem:[%s1000 + $0x18] sm:$0xff]
    %s1005 = scalar_lea.vmem %s13, 3
    %v1006 = vld [vmem:[%s1005] sm:$0x1]
    %v1008 = vperm.slane %v1006, 0
    %1010 = vmatpush.msra.mxu0 0.0
    %1011 = vmatpush.msra.mxu0 0.0
    %1012 = vmatpush.msra.mxu0 0.0
    %1013 = vmatpush.msra.mxu0 0.0
    %1014 = vmatpush.msra.mxu0 0.0
    %1015 = vmatpush.msra.mxu0 0.0
    %1016 = vmatpush.msra.mxu0 0.0
    %1017 = vmatpush.msra.mxu0 0.0
    %1018 = vmatpush.msra.mxu0 0.0
    %1019 = vmatpush.msra.mxu0 0.0
    %1020 = vmatpush.msra.mxu0 0.0
    %1021 = vmatpush.msra.mxu0 0.0
    %1022 = vmatpush.msra.mxu0 %v1004
    %1023 = vmatpush.msra.mxu0 %v1003
    %1024 = vmatpush.msra.mxu0 %v1002
    %1025 = vmatpush.msra.mxu0 %v1001
    %1026 = vmatmul.f32.gmra.mxu0 %v184
    %v1027 = vpop.f32.mrf.mxu0
    %v1028 = vadd.f32 %v1008, %v1027
    %1029 = vmatmul.f32.gmra.mxu0 %v187
    %v1030 = vpop.f32.mrf.mxu0
    %v1031 = vadd.f32 %v1008, %v1030
    %1032 = vdwg.mxu0
    %v1034 = vsel %vm274, %v962, 0
    %v1037 = vsel %vm274, %v995, 0
    %1039 = vmatpush.xpose.msra.mxu0 0.0
    %1040 = vmatpush.xpose.msra.mxu0 0.0
    %1041 = vmatpush.xpose.msra.mxu0 0.0
    %1042 = vmatpush.xpose.msra.mxu0 0.0
    %1043 = vmatpush.xpose.msra.mxu0 0.0
    %1044 = vmatpush.xpose.msra.mxu0 0.0
    %1045 = vmatpush.xpose.msra.mxu0 0.0
    %1046 = vmatpush.xpose.msra.mxu0 0.0
    %1047 = vmatpush.xpose.msra.mxu0 0.0
    %1048 = vmatpush.xpose.msra.mxu0 0.0
    %1049 = vmatpush.xpose.msra.mxu0 0.0
    %1050 = vmatpush.xpose.msra.mxu0 0.0
    %1051 = vmatpush.xpose.msra.mxu0 0.0
    %1052 = vmatpush.xpose.msra.mxu0 0.0
    %1053 = vmatpush.xpose.msra.mxu0 0.0
    %1054 = vmatpush.xpose.msra.mxu0 %v1037
    %1055 = vmatmul.f32.gmra.mxu0 %v1034
    %v1056 = vpop.f32.mrf.mxu0
    %v1057 = vadd.f32 0.0, %v1056
    %1058 = vdwg.mxu0
    %v1060 = vsel %vm274, %v965, 0
    %v1063 = vsel %vm274, %v998, 0
    %1065 = vmatpush.xpose.msra.mxu0 0.0
    %1066 = vmatpush.xpose.msra.mxu0 0.0
    %1067 = vmatpush.xpose.msra.mxu0 0.0
    %1068 = vmatpush.xpose.msra.mxu0 0.0
    %1069 = vmatpush.xpose.msra.mxu0 0.0
    %1070 = vmatpush.xpose.msra.mxu0 0.0
    %1071 = vmatpush.xpose.msra.mxu0 0.0
    %1072 = vmatpush.xpose.msra.mxu0 0.0
    %1073 = vmatpush.xpose.msra.mxu0 0.0
    %1074 = vmatpush.xpose.msra.mxu0 0.0
    %1075 = vmatpush.xpose.msra.mxu0 0.0
    %1076 = vmatpush.xpose.msra.mxu0 0.0
    %1077 = vmatpush.xpose.msra.mxu0 0.0
    %1078 = vmatpush.xpose.msra.mxu0 0.0
    %1079 = vmatpush.xpose.msra.mxu0 0.0
    %1080 = vmatpush.xpose.msra.mxu0 %v1063
    %1081 = vmatmul.f32.gmra.mxu0 %v1060
    %v1082 = vpop.f32.mrf.mxu0
    %v1083 = vadd.f32 0.0, %v1082
    %1084 = vdwg.mxu0
    %v1085 = vsel %vm274, %v1057, -inf
    %1086 = vmax.xlane.f32.xlu0 %v1085
    %v1087 = vpop.xlane.xlu0 %1086
    %v1088 = vsel %vm274, %v1083, -inf
    %1089 = vmax.xlane.f32.xlu0 %v1088
    %v1090 = vpop.xlane.xlu0 %1089
    %v1091 = vsub.f32 %v1057, %v1087
    %v1092 = vsub.f32 %v1083, %v1090
    %v1093 = vmul.f32 %v1091, 1.442695
    %v1094 = vpow.pop %v1093
    %v1095 = vmul.f32 %v1092, 1.442695
    %v1096 = vpow.pop %v1095
    %v1097 = vsel %vm274, %v1094, 0.0
    %1098 = vadd.xlane.f32.xlu0 %v1097
    %v1099 = vpop.xlane.xlu0 %1098
    %v1100 = vsel %vm274, %v1096, 0.0
    %1101 = vadd.xlane.f32.xlu0 %v1100
    %v1102 = vpop.xlane.xlu0 %1101
    %v1103 = vrcp.pop %v1099
    %v1104 = vrcp.pop %v1102
    %v1105 = vmul.f32 %v1094, %v1103
    %v1106 = vmul.f32 %v1096, %v1104
    %v1108 = vsel %vm274, %v1105, 0
    %1110 = vmatpush.msra.mxu0 0.0
    %1111 = vmatpush.msra.mxu0 0.0
    %1112 = vmatpush.msra.mxu0 0.0
    %1113 = vmatpush.msra.mxu0 0.0
    %1114 = vmatpush.msra.mxu0 0.0
    %1115 = vmatpush.msra.mxu0 0.0
    %1116 = vmatpush.msra.mxu0 0.0
    %1117 = vmatpush.msra.mxu0 0.0
    %1118 = vmatpush.msra.mxu0 0.0
    %1119 = vmatpush.msra.mxu0 0.0
    %1120 = vmatpush.msra.mxu0 0.0
    %1121 = vmatpush.msra.mxu0 0.0
    %1122 = vmatpush.msra.mxu0 0.0
    %1123 = vmatpush.msra.mxu0 0.0
    %1124 = vmatpush.msra.mxu0 0.0
    %1125 = vmatpush.msra.mxu0 %v1028
    %1126 = vmatmul.f32.gmra.mxu0 %v1108
    %v1127 = vpop.f32.mrf.mxu0
    %v1128 = vadd.f32 0.0, %v1127
    %1129 = vdwg.mxu0
    %v1131 = vsel %vm274, %v1106, 0
    %1133 = vmatpush.msra.mxu0 0.0
    %1134 = vmatpush.msra.mxu0 0.0
    %1135 = vmatpush.msra.mxu0 0.0
    %1136 = vmatpush.msra.mxu0 0.0
    %1137 = vmatpush.msra.mxu0 0.0
    %1138 = vmatpush.msra.mxu0 0.0
    %1139 = vmatpush.msra.mxu0 0.0
    %1140 = vmatpush.msra.mxu0 0.0
    %1141 = vmatpush.msra.mxu0 0.0
    %1142 = vmatpush.msra.mxu0 0.0
    %1143 = vmatpush.msra.mxu0 0.0
    %1144 = vmatpush.msra.mxu0 0.0
    %1145 = vmatpush.msra.mxu0 0.0
    %1146 = vmatpush.msra.mxu0 0.0
    %1147 = vmatpush.msra.mxu0 0.0
    %1148 = vmatpush.msra.mxu0 %v1031
    %1149 = vmatmul.f32.gmra.mxu0 %v1131
    %v1150 = vpop.f32.mrf.mxu0
    %v1151 = vadd.f32 0.0, %v1150
    %1152 = vdwg.mxu0
    %s1153 = scalar_lea.vmem %s15, 24
    %v1154 = vld [vmem:[%s1153] sm:$0xff]
    %v1156 = vsel %vm274, %v1128, 0
    %v1159 = vsel %vm274, %v1151, 0
    %1161 = vmatpush.msra.mxu0 0.0
    %1162 = vmatpush.msra.mxu0 0.0
    %1163 = vmatpush.msra.mxu0 0.0
    %1164 = vmatpush.msra.mxu0 0.0
    %1165 = vmatpush.msra.mxu0 0.0
    %1166 = vmatpush.msra.mxu0 0.0
    %1167 = vmatpush.msra.mxu0 0.0
    %1168 = vmatpush.msra.mxu0 0.0
    %1169 = vmatpush.msra.mxu0 0.0
    %1170 = vmatpush.msra.mxu0 0.0
    %1171 = vmatpush.msra.mxu0 0.0
    %1172 = vmatpush.msra.mxu0 0.0
    %1173 = vmatpush.msra.mxu0 0.0
    %1174 = vmatpush.msra.mxu0 0.0
    %1175 = vmatpush.msra.mxu0 0.0
    %1176 = vmatpush.msra.mxu0 %v1154
    %1177 = vmatmul.f32.gmra.mxu0 %v1156
    %v1178 = vpop.f32.mrf.mxu0
    %v1179 = vadd.f32 0.0, %v1178
    %1180 = vmatmul.f32.gmra.mxu0 %v1159
    %v1181 = vpop.f32.mrf.mxu0
    %v1182 = vadd.f32 0.0, %v1181
    %1183 = vdwg.mxu0
    %v1184 = vadd.f32 %v932, %v1179
    %v1185 = vadd.f32 %v933, %v1182
    %v1186 = vadd.f32 %v171, %v1184
    %v1187 = vadd.f32 %v172, %v1185
    %v1188 = vld [vmem:[%s19] sm:$0x1]
    %v1189 = vld [vmem:[%s21] sm:$0x1]
    %v1190 = vsel %vm182, %v1186, 0.0
    %1191 = vadd.xlane.f32.xlu0 %v1190
    %v1192 = vpop.xlane.xlu0 %1191
    %v1193 = vsel %vm182, %v1187, 0.0
    %1194 = vadd.xlane.f32.xlu0 %v1193
    %v1195 = vpop.xlane.xlu0 %1194
    %v1196 = vrcp.pop 32.0
    %v1197 = vmul.f32 32.0, %v1196
    %v1198 = vsub.f32 1.0, %v1197
    %v1199 = vmul.f32 %v1196, %v1198
    %v1200 = vadd.f32 %v1196, %v1199
    %vm1201 = vweird.f32 %v1196
    %v1202 = vsel %vm1201, %v1196, %v1200
    %v1203 = vmul.f32 %v1192, %v1202
    %v1204 = vmul.f32 %v1195, %v1202
    %v1205 = vsub.f32 %v1186, %v1203
    %v1206 = vsub.f32 %v1187, %v1204
    %v1207 = vmul.f32 %v1205, %v1205
    %v1208 = vmul.f32 %v1206, %v1206
    %v1209 = vsel %vm182, %v1207, 0.0
    %1210 = vadd.xlane.f32.xlu0 %v1209
    %v1211 = vpop.xlane.xlu0 %1210
    %v1212 = vsel %vm182, %v1208, 0.0
    %1213 = vadd.xlane.f32.xlu0 %v1212
    %v1214 = vpop.xlane.xlu0 %1213
    %v1215 = vmul.f32 %v1211, %v1202
    %v1216 = vmul.f32 %v1214, %v1202
    %v1217 = vadd.f32 %v1215, 1e-05
    %v1218 = vadd.f32 %v1216, 1e-05
    %v1219 = vrsqrt.pop %v1217
    %v1220 = vmul.f32 %v1219, %v1217
    %v1221 = vmul.f32 %v1220, %v1219
    %v1222 = vmul.f32 0.5, %v1221
    %v1223 = vsub.f32 1.5, %v1222
    %v1224 = vmul.f32 %v1219, %v1223
    %vm1225 = vweird.f32 %v1217
    %vm1226 = vweird.f32 %v1219
    %vm1227 = vmor %vm1225, %vm1226
    %v1228 = vsel %vm1227, %v1219, %v1224
    %v1229 = vrsqrt.pop %v1218
    %v1230 = vmul.f32 %v1229, %v1218
    %v1231 = vmul.f32 %v1230, %v1229
    %v1232 = vmul.f32 0.5, %v1231
    %v1233 = vsub.f32 1.5, %v1232
    %v1234 = vmul.f32 %v1229, %v1233
    %vm1235 = vweird.f32 %v1218
    %vm1236 = vweird.f32 %v1229
    %vm1237 = vmor %vm1235, %vm1236
    %v1238 = vsel %vm1237, %v1229, %v1234
    %v1239 = vmul.f32 %v1205, %v1228
    %v1240 = vmul.f32 %v1206, %v1238
    %v1242 = vperm.slane %v1188, 0
    %v1244 = vmul.f32 %v1239, %v1242
    %v1245 = vmul.f32 %v1240, %v1242
    %v1247 = vperm.slane %v1189, 0
    %v1249 = vadd.f32 %v1244, %v1247
    %v1250 = vadd.f32 %v1245, %v1247
    %v1251 = vld [vmem:[%s23] sm:$0xff]
    %v1252 = vld [vmem:[%s23 + $0x8] sm:$0xff]
    %v1253 = vld [vmem:[%s23 + $0x10] sm:$0xff]
    %v1254 = vld [vmem:[%s23 + $0x18] sm:$0xff]
    %v1255 = vld [vmem:[%s25] sm:$0x1]
    %v1257 = vperm.slane %v1255, 0
    %v1260 = vsel %vm182, %v1249, 0
    %v1263 = vsel %vm182, %v1250, 0
    %1265 = vmatpush.msra.mxu0 0.0
    %1266 = vmatpush.msra.mxu0 0.0
    %1267 = vmatpush.msra.mxu0 0.0
    %1268 = vmatpush.msra.mxu0 0.0
    %1269 = vmatpush.msra.mxu0 0.0
    %1270 = vmatpush.msra.mxu0 0.0
    %1271 = vmatpush.msra.mxu0 0.0
    %1272 = vmatpush.msra.mxu0 0.0
    %1273 = vmatpush.msra.mxu0 0.0
    %1274 = vmatpush.msra.mxu0 0.0
    %1275 = vmatpush.msra.mxu0 0.0
    %1276 = vmatpush.msra.mxu0 0.0
    %1277 = vmatpush.msra.mxu0 %v1254
    %1278 = vmatpush.msra.mxu0 %v1253
    %1279 = vmatpush.msra.mxu0 %v1252
    %1280 = vmatpush.msra.mxu0 %v1251
    %1281 = vmatmul.f32.gmra.mxu0 %v1260
    %v1282 = vpop.f32.mrf.mxu0
    %v1283 = vadd.f32 %v1257, %v1282
    %1284 = vmatmul.f32.gmra.mxu0 %v1263
    %v1285 = vpop.f32.mrf.mxu0
    %v1286 = vadd.f32 %v1257, %v1285
    %1287 = vdwg.mxu0
    %v1288 = vmax.f32 %v1283, 0.0
    %v1289 = vmax.f32 %v1286, 0.0
    %v1290 = vld [vmem:[%s27] sm:$0xff]
    %v1291 = vld [vmem:[%s27 + $0x8] sm:$0xff]
    %v1292 = vld [vmem:[%s27 + $0x10] sm:$0xff]
    %v1293 = vld [vmem:[%s27 + $0x18] sm:$0xff]
    %v1294 = vld [vmem:[%s27 + $0x20] sm:$0xff]
    %v1295 = vld [vmem:[%s27 + $0x28] sm:$0xff]
    %v1296 = vld [vmem:[%s27 + $0x30] sm:$0xff]
    %v1297 = vld [vmem:[%s27 + $0x38] sm:$0xff]
    %v1298 = vld [vmem:[%s29] sm:$0x1]
    %v1300 = vperm.slane %v1298, 0
    %vm1302 = vcmask 523264
    %v1304 = vsel %vm1302, %v1288, 0
    %v1307 = vsel %vm1302, %v1289, 0
    %1309 = vmatpush.msra.mxu0 0.0
    %1310 = vmatpush.msra.mxu0 0.0
    %1311 = vmatpush.msra.mxu0 0.0
    %1312 = vmatpush.msra.mxu0 0.0
    %1313 = vmatpush.msra.mxu0 0.0
    %1314 = vmatpush.msra.mxu0 0.0
    %1315 = vmatpush.msra.mxu0 0.0
    %1316 = vmatpush.msra.mxu0 0.0
    %1317 = vmatpush.msra.mxu0 %v1297
    %1318 = vmatpush.msra.mxu0 %v1296
    %1319 = vmatpush.msra.mxu0 %v1295
    %1320 = vmatpush.msra.mxu0 %v1294
    %1321 = vmatpush.msra.mxu0 %v1293
    %1322 = vmatpush.msra.mxu0 %v1292
    %1323 = vmatpush.msra.mxu0 %v1291
    %1324 = vmatpush.msra.mxu0 %v1290
    %1325 = vmatmul.f32.gmra.mxu0 %v1304
    %v1326 = vpop.f32.mrf.mxu0
    %v1327 = vadd.f32 %v1300, %v1326
    %1328 = vmatmul.f32.gmra.mxu0 %v1307
    %v1329 = vpop.f32.mrf.mxu0
    %v1330 = vadd.f32 %v1300, %v1329
    %1331 = vdwg.mxu0
    %v1332 = vadd.f32 %v1249, %v1327
    %v1333 = vadd.f32 %v1250, %v1330
    %v1334 = vld [vmem:[%s31] sm:$0x1]
    %v1335 = vld [vmem:[%s33] sm:$0x1]
    %v1336 = vsel %vm182, %v1332, 0.0
    %1337 = vadd.xlane.f32.xlu0 %v1336
    %v1338 = vpop.xlane.xlu0 %1337
    %v1339 = vsel %vm182, %v1333, 0.0
    %1340 = vadd.xlane.f32.xlu0 %v1339
    %v1341 = vpop.xlane.xlu0 %1340
    %v1342 = vmul.f32 %v1338, %v1202
    %v1343 = vmul.f32 %v1341, %v1202
    %v1344 = vsub.f32 %v1332, %v1342
    %v1345 = vsub.f32 %v1333, %v1343
    %v1346 = vmul.f32 %v1344, %v1344
    %v1347 = vmul.f32 %v1345, %v1345
    %v1348 = vsel %vm182, %v1346, 0.0
    %1349 = vadd.xlane.f32.xlu0 %v1348
    %v1350 = vpop.xlane.xlu0 %1349
    %v1351 = vsel %vm182, %v1347, 0.0
    %1352 = vadd.xlane.f32.xlu0 %v1351
    %v1353 = vpop.xlane.xlu0 %1352
    %v1354 = vmul.f32 %v1350, %v1202
    %v1355 = vmul.f32 %v1353, %v1202
    %v1356 = vadd.f32 %v1354, 1e-05
    %v1357 = vadd.f32 %v1355, 1e-05
    %v1358 = vrsqrt.pop %v1356
    %v1359 = vmul.f32 %v1358, %v1356
    %v1360 = vmul.f32 %v1359, %v1358
    %v1361 = vmul.f32 0.5, %v1360
    %v1362 = vsub.f32 1.5, %v1361
    %v1363 = vmul.f32 %v1358, %v1362
    %vm1364 = vweird.f32 %v1356
    %vm1365 = vweird.f32 %v1358
    %vm1366 = vmor %vm1364, %vm1365
    %v1367 = vsel %vm1366, %v1358, %v1363
    %v1368 = vrsqrt.pop %v1357
    %v1369 = vmul.f32 %v1368, %v1357
    %v1370 = vmul.f32 %v1369, %v1368
    %v1371 = vmul.f32 0.5, %v1370
    %v1372 = vsub.f32 1.5, %v1371
    %v1373 = vmul.f32 %v1368, %v1372
    %vm1374 = vweird.f32 %v1357
    %vm1375 = vweird.f32 %v1368
    %vm1376 = vmor %vm1374, %vm1375
    %v1377 = vsel %vm1376, %v1368, %v1373
    %v1378 = vmul.f32 %v1344, %v1367
    %v1379 = vmul.f32 %v1345, %v1377
    %v1381 = vperm.slane %v1334, 0
    %v1383 = vmul.f32 %v1378, %v1381
    %v1384 = vmul.f32 %v1379, %v1381
    %v1386 = vperm.slane %v1335, 0
    %v1388 = vadd.f32 %v1383, %v1386
    %v1389 = vadd.f32 %v1384, %v1386
    %v1390 = vld [vmem:[%s49] sm:$0x1]
    %v1391 = vld [vmem:[%s35] sm:$0xff]
    %v1392 = vld [vmem:[%s35 + $0x8] sm:$0xff]
    %v1393 = vld [vmem:[%s35 + $0x10] sm:$0xff]
    %v1394 = vld [vmem:[%s35 + $0x18] sm:$0xff]
    %v1395 = vld [vmem:[%s37] sm:$0x1]
    %v1397 = vperm.slane %v1395, 0
    %v1400 = vsel %vm182, %v1388, 0
    %v1403 = vsel %vm182, %v1389, 0
    %1405 = vmatpush.msra.mxu0 0.0
    %1406 = vmatpush.msra.mxu0 0.0
    %1407 = vmatpush.msra.mxu0 0.0
    %1408 = vmatpush.msra.mxu0 0.0
    %1409 = vmatpush.msra.mxu0 0.0
    %1410 = vmatpush.msra.mxu0 0.0
    %1411 = vmatpush.msra.mxu0 0.0
    %1412 = vmatpush.msra.mxu0 0.0
    %1413 = vmatpush.msra.mxu0 0.0
    %1414 = vmatpush.msra.mxu0 0.0
    %1415 = vmatpush.msra.mxu0 0.0
    %1416 = vmatpush.msra.mxu0 0.0
    %1417 = vmatpush.msra.mxu0 %v1394
    %1418 = vmatpush.msra.mxu0 %v1393
    %1419 = vmatpush.msra.mxu0 %v1392
    %1420 = vmatpush.msra.mxu0 %v1391
    %1421 = vmatmul.f32.gmra.mxu0 %v1400
    %v1422 = vpop.f32.mrf.mxu0
    %v1423 = vadd.f32 %v1397, %v1422
    %1424 = vmatmul.f32.gmra.mxu0 %v1403
    %v1425 = vpop.f32.mrf.mxu0
    %v1426 = vadd.f32 %v1397, %v1425
    %1427 = vdwg.mxu0
    %v1428 = vld [vmem:[%s39] sm:$0xff]
    %v1429 = vld [vmem:[%s39 + $0x8] sm:$0xff]
    %v1430 = vld [vmem:[%s39 + $0x10] sm:$0xff]
    %v1431 = vld [vmem:[%s39 + $0x18] sm:$0xff]
    %v1432 = vld [vmem:[%s41] sm:$0x1]
    %v1434 = vperm.slane %v1432, 0
    %1436 = vmatpush.msra.mxu0 0.0
    %1437 = vmatpush.msra.mxu0 0.0
    %1438 = vmatpush.msra.mxu0 0.0
    %1439 = vmatpush.msra.mxu0 0.0
    %1440 = vmatpush.msra.mxu0 0.0
    %1441 = vmatpush.msra.mxu0 0.0
    %1442 = vmatpush.msra.mxu0 0.0
    %1443 = vmatpush.msra.mxu0 0.0
    %1444 = vmatpush.msra.mxu0 0.0
    %1445 = vmatpush.msra.mxu0 0.0
    %1446 = vmatpush.msra.mxu0 0.0
    %1447 = vmatpush.msra.mxu0 0.0
    %1448 = vmatpush.msra.mxu0 %v1431
    %1449 = vmatpush.msra.mxu0 %v1430
    %1450 = vmatpush.msra.mxu0 %v1429
    %1451 = vmatpush.msra.mxu0 %v1428
    %1452 = vmatmul.f32.gmra.mxu0 %v1400
    %v1453 = vpop.f32.mrf.mxu0
    %v1454 = vadd.f32 %v1434, %v1453
    %1455 = vmatmul.f32.gmra.mxu0 %v1403
    %v1456 = vpop.f32.mrf.mxu0
    %v1457 = vadd.f32 %v1434, %v1456
    %1458 = vdwg.mxu0
    %v1459 = vld [vmem:[%s43] sm:$0xff]
    %v1460 = vld [vmem:[%s43 + $0x8] sm:$0xff]
    %v1461 = vld [vmem:[%s43 + $0x10] sm:$0xff]
    %v1462 = vld [vmem:[%s43 + $0x18] sm:$0xff]
    %v1463 = vld [vmem:[%s45] sm:$0x1]
    %v1465 = vperm.slane %v1463, 0
    %1467 = vmatpush.msra.mxu0 0.0
    %1468 = vmatpush.msra.mxu0 0.0
    %1469 = vmatpush.msra.mxu0 0.0
    %1470 = vmatpush.msra.mxu0 0.0
    %1471 = vmatpush.msra.mxu0 0.0
    %1472 = vmatpush.msra.mxu0 0.0
    %1473 = vmatpush.msra.mxu0 0.0
    %1474 = vmatpush.msra.mxu0 0.0
    %1475 = vmatpush.msra.mxu0 0.0
    %1476 = vmatpush.msra.mxu0 0.0
    %1477 = vmatpush.msra.mxu0 0.0
    %1478 = vmatpush.msra.mxu0 0.0
    %1479 = vmatpush.msra.mxu0 %v1462
    %1480 = vmatpush.msra.mxu0 %v1461
    %1481 = vmatpush.msra.mxu0 %v1460
    %1482 = vmatpush.msra.mxu0 %v1459
    %1483 = vmatmul.f32.gmra.mxu0 %v1400
    %v1484 = vpop.f32.mrf.mxu0
    %v1485 = vadd.f32 %v1465, %v1484
    %1486 = vmatmul.f32.gmra.mxu0 %v1403
    %v1487 = vpop.f32.mrf.mxu0
    %v1488 = vadd.f32 %v1465, %v1487
    %1489 = vdwg.mxu0
    %v1491 = vsel %vm274, %v1423, 0
    %v1494 = vsel %vm274, %v1454, 0
    %1496 = vmatpush.xpose.msra.mxu0 0.0
    %1497 = vmatpush.xpose.msra.mxu0 0.0
    %1498 = vmatpush.xpose.msra.mxu0 0.0
    %1499 = vmatpush.xpose.msra.mxu0 0.0
    %1500 = vmatpush.xpose.msra.mxu0 0.0
    %1501 = vmatpush.xpose.msra.mxu0 0.0
    %1502 = vmatpush.xpose.msra.mxu0 0.0
    %1503 = vmatpush.xpose.msra.mxu0 0.0
    %1504 = vmatpush.xpose.msra.mxu0 0.0
    %1505 = vmatpush.xpose.msra.mxu0 0.0
    %1506 = vmatpush.xpose.msra.mxu0 0.0
    %1507 = vmatpush.xpose.msra.mxu0 0.0
    %1508 = vmatpush.xpose.msra.mxu0 0.0
    %1509 = vmatpush.xpose.msra.mxu0 0.0
    %1510 = vmatpush.xpose.msra.mxu0 0.0
    %1511 = vmatpush.xpose.msra.mxu0 %v1494
    %1512 = vmatmul.f32.gmra.mxu0 %v1491
    %v1513 = vpop.f32.mrf.mxu0
    %v1514 = vadd.f32 0.0, %v1513
    %1515 = vdwg.mxu0
    %v1517 = vsel %vm274, %v1426, 0
    %v1520 = vsel %vm274, %v1457, 0
    %1522 = vmatpush.xpose.msra.mxu0 0.0
    %1523 = vmatpush.xpose.msra.mxu0 0.0
    %1524 = vmatpush.xpose.msra.mxu0 0.0
    %1525 = vmatpush.xpose.msra.mxu0 0.0
    %1526 = vmatpush.xpose.msra.mxu0 0.0
    %1527 = vmatpush.xpose.msra.mxu0 0.0
    %1528 = vmatpush.xpose.msra.mxu0 0.0
    %1529 = vmatpush.xpose.msra.mxu0 0.0
    %1530 = vmatpush.xpose.msra.mxu0 0.0
    %1531 = vmatpush.xpose.msra.mxu0 0.0
    %1532 = vmatpush.xpose.msra.mxu0 0.0
    %1533 = vmatpush.xpose.msra.mxu0 0.0
    %1534 = vmatpush.xpose.msra.mxu0 0.0
    %1535 = vmatpush.xpose.msra.mxu0 0.0
    %1536 = vmatpush.xpose.msra.mxu0 0.0
    %1537 = vmatpush.xpose.msra.mxu0 %v1520
    %1538 = vmatmul.f32.gmra.mxu0 %v1517
    %v1539 = vpop.f32.mrf.mxu0
    %v1540 = vadd.f32 0.0, %v1539
    %1541 = vdwg.mxu0
    %v1542 = vsel %vm274, %v1514, -inf
    %1543 = vmax.xlane.f32.xlu0 %v1542
    %v1544 = vpop.xlane.xlu0 %1543
    %v1545 = vsel %vm274, %v1540, -inf
    %1546 = vmax.xlane.f32.xlu0 %v1545
    %v1547 = vpop.xlane.xlu0 %1546
    %v1548 = vsub.f32 %v1514, %v1544
    %v1549 = vsub.f32 %v1540, %v1547
    %v1550 = vmul.f32 %v1548, 1.442695
    %v1551 = vpow.pop %v1550
    %v1552 = vmul.f32 %v1549, 1.442695
    %v1553 = vpow.pop %v1552
    %v1554 = vsel %vm274, %v1551, 0.0
    %1555 = vadd.xlane.f32.xlu0 %v1554
    %v1556 = vpop.xlane.xlu0 %1555
    %v1557 = vsel %vm274, %v1553, 0.0
    %1558 = vadd.xlane.f32.xlu0 %v1557
    %v1559 = vpop.xlane.xlu0 %1558
    %v1560 = vrcp.pop %v1556
    %v1561 = vrcp.pop %v1559
    %v1562 = vmul.f32 %v1551, %v1560
    %v1563 = vmul.f32 %v1553, %v1561
    %v1565 = vsel %vm274, %v1562, 0
    %1567 = vmatpush.msra.mxu0 0.0
    %1568 = vmatpush.msra.mxu0 0.0
    %1569 = vmatpush.msra.mxu0 0.0
    %1570 = vmatpush.msra.mxu0 0.0
    %1571 = vmatpush.msra.mxu0 0.0
    %1572 = vmatpush.msra.mxu0 0.0
    %1573 = vmatpush.msra.mxu0 0.0
    %1574 = vmatpush.msra.mxu0 0.0
    %1575 = vmatpush.msra.mxu0 0.0
    %1576 = vmatpush.msra.mxu0 0.0
    %1577 = vmatpush.msra.mxu0 0.0
    %1578 = vmatpush.msra.mxu0 0.0
    %1579 = vmatpush.msra.mxu0 0.0
    %1580 = vmatpush.msra.mxu0 0.0
    %1581 = vmatpush.msra.mxu0 0.0
    %1582 = vmatpush.msra.mxu0 %v1485
    %1583 = vmatmul.f32.gmra.mxu0 %v1565
    %v1584 = vpop.f32.mrf.mxu0
    %v1585 = vadd.f32 0.0, %v1584
    %1586 = vdwg.mxu0
    %v1588 = vsel %vm274, %v1563, 0
    %1590 = vmatpush.msra.mxu0 0.0
    %1591 = vmatpush.msra.mxu0 0.0
    %1592 = vmatpush.msra.mxu0 0.0
    %1593 = vmatpush.msra.mxu0 0.0
    %1594 = vmatpush.msra.mxu0 0.0
    %1595 = vmatpush.msra.mxu0 0.0
    %1596 = vmatpush.msra.mxu0 0.0
    %1597 = vmatpush.msra.mxu0 0.0
    %1598 = vmatpush.msra.mxu0 0.0
    %1599 = vmatpush.msra.mxu0 0.0
    %1600 = vmatpush.msra.mxu0 0.0
    %1601 = vmatpush.msra.mxu0 0.0
    %1602 = vmatpush.msra.mxu0 0.0
    %1603 = vmatpush.msra.mxu0 0.0
    %1604 = vmatpush.msra.mxu0 0.0
    %1605 = vmatpush.msra.mxu0 %v1488
    %1606 = vmatmul.f32.gmra.mxu0 %v1588
    %v1607 = vpop.f32.mrf.mxu0
    %v1608 = vadd.f32 0.0, %v1607
    %1609 = vdwg.mxu0
    %v1610 = vld [vmem:[%s47] sm:$0xff]
    %v1612 = vsel %vm274, %v1585, 0
    %v1615 = vsel %vm274, %v1608, 0
    %1617 = vmatpush.msra.mxu0 0.0
    %1618 = vmatpush.msra.mxu0 0.0
    %1619 = vmatpush.msra.mxu0 0.0
    %1620 = vmatpush.msra.mxu0 0.0
    %1621 = vmatpush.msra.mxu0 0.0
    %1622 = vmatpush.msra.mxu0 0.0
    %1623 = vmatpush.msra.mxu0 0.0
    %1624 = vmatpush.msra.mxu0 0.0
    %1625 = vmatpush.msra.mxu0 0.0
    %1626 = vmatpush.msra.mxu0 0.0
    %1627 = vmatpush.msra.mxu0 0.0
    %1628 = vmatpush.msra.mxu0 0.0
    %1629 = vmatpush.msra.mxu0 0.0
    %1630 = vmatpush.msra.mxu0 0.0
    %1631 = vmatpush.msra.mxu0 0.0
    %1632 = vmatpush.msra.mxu0 %v1610
    %1633 = vmatmul.f32.gmra.mxu0 %v1612
    %v1634 = vpop.f32.mrf.mxu0
    %v1635 = vadd.f32 0.0, %v1634
    %1636 = vmatmul.f32.gmra.mxu0 %v1615
    %v1637 = vpop.f32.mrf.mxu0
    %v1638 = vadd.f32 0.0, %v1637
    %1639 = vdwg.mxu0
    %v1641 = vperm.slane %v1390, 0
    %v1643 = vadd.f32 %v1641, %v1635
    %v1644 = vadd.f32 %v1641, %v1638
    %s1645 = scalar_lea.vmem %s35, 32
    %v1646 = vld [vmem:[%s1645] sm:$0xff]
    %v1647 = vld [vmem:[%s1645 + $0x8] sm:$0xff]
    %v1648 = vld [vmem:[%s1645 + $0x10] sm:$0xff]
    %v1649 = vld [vmem:[%s1645 + $0x18] sm:$0xff]
    %s1650 = scalar_lea.vmem %s37, 1
    %v1651 = vld [vmem:[%s1650] sm:$0x1]
    %v1653 = vperm.slane %v1651, 0
    %1655 = vmatpush.msra.mxu0 0.0
    %1656 = vmatpush.msra.mxu0 0.0
    %1657 = vmatpush.msra.mxu0 0.0
    %1658 = vmatpush.msra.mxu0 0.0
    %1659 = vmatpush.msra.mxu0 0.0
    %1660 = vmatpush.msra.mxu0 0.0
    %1661 = vmatpush.msra.mxu0 0.0
    %1662 = vmatpush.msra.mxu0 0.0
    %1663 = vmatpush.msra.mxu0 0.0
    %1664 = vmatpush.msra.mxu0 0.0
    %1665 = vmatpush.msra.mxu0 0.0
    %1666 = vmatpush.msra.mxu0 0.0
    %1667 = vmatpush.msra.mxu0 %v1649
    %1668 = vmatpush.msra.mxu0 %v1648
    %1669 = vmatpush.msra.mxu0 %v1647
    %1670 = vmatpush.msra.mxu0 %v1646
    %1671 = vmatmul.f32.gmra.mxu0 %v1400
    %v1672 = vpop.f32.mrf.mxu0
    %v1673 = vadd.f32 %v1653, %v1672
    %1674 = vmatmul.f32.gmra.mxu0 %v1403
    %v1675 = vpop.f32.mrf.mxu0
    %v1676 = vadd.f32 %v1653, %v1675
    %1677 = vdwg.mxu0
    %s1678 = scalar_lea.vmem %s39, 32
    %v1679 = vld [vmem:[%s1678] sm:$0xff]
    %v1680 = vld [vmem:[%s1678 + $0x8] sm:$0xff]
    %v1681 = vld [vmem:[%s1678 + $0x10] sm:$0xff]
    %v1682 = vld [vmem:[%s1678 + $0x18] sm:$0xff]
    %s1683 = scalar_lea.vmem %s41, 1
    %v1684 = vld [vmem:[%s1683] sm:$0x1]
    %v1686 = vperm.slane %v1684, 0
    %1688 = vmatpush.msra.mxu0 0.0
    %1689 = vmatpush.msra.mxu0 0.0
    %1690 = vmatpush.msra.mxu0 0.0
    %1691 = vmatpush.msra.mxu0 0.0
    %1692 = vmatpush.msra.mxu0 0.0
    %1693 = vmatpush.msra.mxu0 0.0
    %1694 = vmatpush.msra.mxu0 0.0
    %1695 = vmatpush.msra.mxu0 0.0
    %1696 = vmatpush.msra.mxu0 0.0
    %1697 = vmatpush.msra.mxu0 0.0
    %1698 = vmatpush.msra.mxu0 0.0
    %1699 = vmatpush.msra.mxu0 0.0
    %1700 = vmatpush.msra.mxu0 %v1682
    %1701 = vmatpush.msra.mxu0 %v1681
    %1702 = vmatpush.msra.mxu0 %v1680
    %1703 = vmatpush.msra.mxu0 %v1679
    %1704 = vmatmul.f32.gmra.mxu0 %v1400
    %v1705 = vpop.f32.mrf.mxu0
    %v1706 = vadd.f32 %v1686, %v1705
    %1707 = vmatmul.f32.gmra.mxu0 %v1403
    %v1708 = vpop.f32.mrf.mxu0
    %v1709 = vadd.f32 %v1686, %v1708
    %1710 = vdwg.mxu0
    %s1711 = scalar_lea.vmem %s43, 32
    %v1712 = vld [vmem:[%s1711] sm:$0xff]
    %v1713 = vld [vmem:[%s1711 + $0x8] sm:$0xff]
    %v1714 = vld [vmem:[%s1711 + $0x10] sm:$0xff]
    %v1715 = vld [vmem:[%s1711 + $0x18] sm:$0xff]
    %s1716 = scalar_lea.vmem %s45, 1
    %v1717 = vld [vmem:[%s1716] sm:$0x1]
    %v1719 = vperm.slane %v1717, 0
    %1721 = vmatpush.msra.mxu0 0.0
    %1722 = vmatpush.msra.mxu0 0.0
    %1723 = vmatpush.msra.mxu0 0.0
    %1724 = vmatpush.msra.mxu0 0.0
    %1725 = vmatpush.msra.mxu0 0.0
    %1726 = vmatpush.msra.mxu0 0.0
    %1727 = vmatpush.msra.mxu0 0.0
    %1728 = vmatpush.msra.mxu0 0.0
    %1729 = vmatpush.msra.mxu0 0.0
    %1730 = vmatpush.msra.mxu0 0.0
    %1731 = vmatpush.msra.mxu0 0.0
    %1732 = vmatpush.msra.mxu0 0.0
    %1733 = vmatpush.msra.mxu0 %v1715
    %1734 = vmatpush.msra.mxu0 %v1714
    %1735 = vmatpush.msra.mxu0 %v1713
    %1736 = vmatpush.msra.mxu0 %v1712
    %1737 = vmatmul.f32.gmra.mxu0 %v1400
    %v1738 = vpop.f32.mrf.mxu0
    %v1739 = vadd.f32 %v1719, %v1738
    %1740 = vmatmul.f32.gmra.mxu0 %v1403
    %v1741 = vpop.f32.mrf.mxu0
    %v1742 = vadd.f32 %v1719, %v1741
    %1743 = vdwg.mxu0
    %v1745 = vsel %vm274, %v1673, 0
    %v1748 = vsel %vm274, %v1706, 0
    %1750 = vmatpush.xpose.msra.mxu0 0.0
    %1751 = vmatpush.xpose.msra.mxu0 0.0
    %1752 = vmatpush.xpose.msra.mxu0 0.0
    %1753 = vmatpush.xpose.msra.mxu0 0.0
    %1754 = vmatpush.xpose.msra.mxu0 0.0
    %1755 = vmatpush.xpose.msra.mxu0 0.0
    %1756 = vmatpush.xpose.msra.mxu0 0.0
    %1757 = vmatpush.xpose.msra.mxu0 0.0
    %1758 = vmatpush.xpose.msra.mxu0 0.0
    %1759 = vmatpush.xpose.msra.mxu0 0.0
    %1760 = vmatpush.xpose.msra.mxu0 0.0
    %1761 = vmatpush.xpose.msra.mxu0 0.0
    %1762 = vmatpush.xpose.msra.mxu0 0.0
    %1763 = vmatpush.xpose.msra.mxu0 0.0
    %1764 = vmatpush.xpose.msra.mxu0 0.0
    %1765 = vmatpush.xpose.msra.mxu0 %v1748
    %1766 = vmatmul.f32.gmra.mxu0 %v1745
    %v1767 = vpop.f32.mrf.mxu0
    %v1768 = vadd.f32 0.0, %v1767
    %1769 = vdwg.mxu0
    %v1771 = vsel %vm274, %v1676, 0
    %v1774 = vsel %vm274, %v1709, 0
    %1776 = vmatpush.xpose.msra.mxu0 0.0
    %1777 = vmatpush.xpose.msra.mxu0 0.0
    %1778 = vmatpush.xpose.msra.mxu0 0.0
    %1779 = vmatpush.xpose.msra.mxu0 0.0
    %1780 = vmatpush.xpose.msra.mxu0 0.0
    %1781 = vmatpush.xpose.msra.mxu0 0.0
    %1782 = vmatpush.xpose.msra.mxu0 0.0
    %1783 = vmatpush.xpose.msra.mxu0 0.0
    %1784 = vmatpush.xpose.msra.mxu0 0.0
    %1785 = vmatpush.xpose.msra.mxu0 0.0
    %1786 = vmatpush.xpose.msra.mxu0 0.0
    %1787 = vmatpush.xpose.msra.mxu0 0.0
    %1788 = vmatpush.xpose.msra.mxu0 0.0
    %1789 = vmatpush.xpose.msra.mxu0 0.0
    %1790 = vmatpush.xpose.msra.mxu0 0.0
    %1791 = vmatpush.xpose.msra.mxu0 %v1774
    %1792 = vmatmul.f32.gmra.mxu0 %v1771
    %v1793 = vpop.f32.mrf.mxu0
    %v1794 = vadd.f32 0.0, %v1793
    %1795 = vdwg.mxu0
    %v1796 = vsel %vm274, %v1768, -inf
    %1797 = vmax.xlane.f32.xlu0 %v1796
    %v1798 = vpop.xlane.xlu0 %1797
    %v1799 = vsel %vm274, %v1794, -inf
    %1800 = vmax.xlane.f32.xlu0 %v1799
    %v1801 = vpop.xlane.xlu0 %1800
    %v1802 = vsub.f32 %v1768, %v1798
    %v1803 = vsub.f32 %v1794, %v1801
    %v1804 = vmul.f32 %v1802, 1.442695
    %v1805 = vpow.pop %v1804
    %v1806 = vmul.f32 %v1803, 1.442695
    %v1807 = vpow.pop %v1806
    %v1808 = vsel %vm274, %v1805, 0.0
    %1809 = vadd.xlane.f32.xlu0 %v1808
    %v1810 = vpop.xlane.xlu0 %1809
    %v1811 = vsel %vm274, %v1807, 0.0
    %1812 = vadd.xlane.f32.xlu0 %v1811
    %v1813 = vpop.xlane.xlu0 %1812
    %v1814 = vrcp.pop %v1810
    %v1815 = vrcp.pop %v1813
    %v1816 = vmul.f32 %v1805, %v1814
    %v1817 = vmul.f32 %v1807, %v1815
    %v1819 = vsel %vm274, %v1816, 0
    %1821 = vmatpush.msra.mxu0 0.0
    %1822 = vmatpush.msra.mxu0 0.0
    %1823 = vmatpush.msra.mxu0 0.0
    %1824 = vmatpush.msra.mxu0 0.0
    %1825 = vmatpush.msra.mxu0 0.0
    %1826 = vmatpush.msra.mxu0 0.0
    %1827 = vmatpush.msra.mxu0 0.0
    %1828 = vmatpush.msra.mxu0 0.0
    %1829 = vmatpush.msra.mxu0 0.0
    %1830 = vmatpush.msra.mxu0 0.0
    %1831 = vmatpush.msra.mxu0 0.0
    %1832 = vmatpush.msra.mxu0 0.0
    %1833 = vmatpush.msra.mxu0 0.0
    %1834 = vmatpush.msra.mxu0 0.0
    %1835 = vmatpush.msra.mxu0 0.0
    %1836 = vmatpush.msra.mxu0 %v1739
    %1837 = vmatmul.f32.gmra.mxu0 %v1819
    %v1838 = vpop.f32.mrf.mxu0
    %v1839 = vadd.f32 0.0, %v1838
    %1840 = vdwg.mxu0
    %v1842 = vsel %vm274, %v1817, 0
    %1844 = vmatpush.msra.mxu0 0.0
    %1845 = vmatpush.msra.mxu0 0.0
    %1846 = vmatpush.msra.mxu0 0.0
    %1847 = vmatpush.msra.mxu0 0.0
    %1848 = vmatpush.msra.mxu0 0.0
    %1849 = vmatpush.msra.mxu0 0.0
    %1850 = vmatpush.msra.mxu0 0.0
    %1851 = vmatpush.msra.mxu0 0.0
    %1852 = vmatpush.msra.mxu0 0.0
    %1853 = vmatpush.msra.mxu0 0.0
    %1854 = vmatpush.msra.mxu0 0.0
    %1855 = vmatpush.msra.mxu0 0.0
    %1856 = vmatpush.msra.mxu0 0.0
    %1857 = vmatpush.msra.mxu0 0.0
    %1858 = vmatpush.msra.mxu0 0.0
    %1859 = vmatpush.msra.mxu0 %v1742
    %1860 = vmatmul.f32.gmra.mxu0 %v1842
    %v1861 = vpop.f32.mrf.mxu0
    %v1862 = vadd.f32 0.0, %v1861
    %1863 = vdwg.mxu0
    %s1864 = scalar_lea.vmem %s47, 8
    %v1865 = vld [vmem:[%s1864] sm:$0xff]
    %v1867 = vsel %vm274, %v1839, 0
    %v1870 = vsel %vm274, %v1862, 0
    %1872 = vmatpush.msra.mxu0 0.0
    %1873 = vmatpush.msra.mxu0 0.0
    %1874 = vmatpush.msra.mxu0 0.0
    %1875 = vmatpush.msra.mxu0 0.0
    %1876 = vmatpush.msra.mxu0 0.0
    %1877 = vmatpush.msra.mxu0 0.0
    %1878 = vmatpush.msra.mxu0 0.0
    %1879 = vmatpush.msra.mxu0 0.0
    %1880 = vmatpush.msra.mxu0 0.0
    %1881 = vmatpush.msra.mxu0 0.0
    %1882 = vmatpush.msra.mxu0 0.0
    %1883 = vmatpush.msra.mxu0 0.0
    %1884 = vmatpush.msra.mxu0 0.0
    %1885 = vmatpush.msra.mxu0 0.0
    %1886 = vmatpush.msra.mxu0 0.0
    %1887 = vmatpush.msra.mxu0 %v1865
    %1888 = vmatmul.f32.gmra.mxu0 %v1867
    %v1889 = vpop.f32.mrf.mxu0
    %v1890 = vadd.f32 0.0, %v1889
    %1891 = vmatmul.f32.gmra.mxu0 %v1870
    %v1892 = vpop.f32.mrf.mxu0
    %v1893 = vadd.f32 0.0, %v1892
    %1894 = vdwg.mxu0
    %v1895 = vadd.f32 %v1643, %v1890
    %v1896 = vadd.f32 %v1644, %v1893
    %s1897 = scalar_lea.vmem %s35, 64
    %v1898 = vld [vmem:[%s1897] sm:$0xff]
    %v1899 = vld [vmem:[%s1897 + $0x8] sm:$0xff]
    %v1900 = vld [vmem:[%s1897 + $0x10] sm:$0xff]
    %v1901 = vld [vmem:[%s1897 + $0x18] sm:$0xff]
    %s1902 = scalar_lea.vmem %s37, 2
    %v1903 = vld [vmem:[%s1902] sm:$0x1]
    %v1905 = vperm.slane %v1903, 0
    %1907 = vmatpush.msra.mxu0 0.0
    %1908 = vmatpush.msra.mxu0 0.0
    %1909 = vmatpush.msra.mxu0 0.0
    %1910 = vmatpush.msra.mxu0 0.0
    %1911 = vmatpush.msra.mxu0 0.0
    %1912 = vmatpush.msra.mxu0 0.0
    %1913 = vmatpush.msra.mxu0 0.0
    %1914 = vmatpush.msra.mxu0 0.0
    %1915 = vmatpush.msra.mxu0 0.0
    %1916 = vmatpush.msra.mxu0 0.0
    %1917 = vmatpush.msra.mxu0 0.0
    %1918 = vmatpush.msra.mxu0 0.0
    %1919 = vmatpush.msra.mxu0 %v1901
    %1920 = vmatpush.msra.mxu0 %v1900
    %1921 = vmatpush.msra.mxu0 %v1899
    %1922 = vmatpush.msra.mxu0 %v1898
    %1923 = vmatmul.f32.gmra.mxu0 %v1400
    %v1924 = vpop.f32.mrf.mxu0
    %v1925 = vadd.f32 %v1905, %v1924
    %1926 = vmatmul.f32.gmra.mxu0 %v1403
    %v1927 = vpop.f32.mrf.mxu0
    %v1928 = vadd.f32 %v1905, %v1927
    %1929 = vdwg.mxu0
    %s1930 = scalar_lea.vmem %s39, 64
    %v1931 = vld [vmem:[%s1930] sm:$0xff]
    %v1932 = vld [vmem:[%s1930 + $0x8] sm:$0xff]
    %v1933 = vld [vmem:[%s1930 + $0x10] sm:$0xff]
    %v1934 = vld [vmem:[%s1930 + $0x18] sm:$0xff]
    %s1935 = scalar_lea.vmem %s41, 2
    %v1936 = vld [vmem:[%s1935] sm:$0x1]
    %v1938 = vperm.slane %v1936, 0
    %1940 = vmatpush.msra.mxu0 0.0
    %1941 = vmatpush.msra.mxu0 0.0
    %1942 = vmatpush.msra.mxu0 0.0
    %1943 = vmatpush.msra.mxu0 0.0
    %1944 = vmatpush.msra.mxu0 0.0
    %1945 = vmatpush.msra.mxu0 0.0
    %1946 = vmatpush.msra.mxu0 0.0
    %1947 = vmatpush.msra.mxu0 0.0
    %1948 = vmatpush.msra.mxu0 0.0
    %1949 = vmatpush.msra.mxu0 0.0
    %1950 = vmatpush.msra.mxu0 0.0
    %1951 = vmatpush.msra.mxu0 0.0
    %1952 = vmatpush.msra.mxu0 %v1934
    %1953 = vmatpush.msra.mxu0 %v1933
    %1954 = vmatpush.msra.mxu0 %v1932
    %1955 = vmatpush.msra.mxu0 %v1931
    %1956 = vmatmul.f32.gmra.mxu0 %v1400
    %v1957 = vpop.f32.mrf.mxu0
    %v1958 = vadd.f32 %v1938, %v1957
    %1959 = vmatmul.f32.gmra.mxu0 %v1403
    %v1960 = vpop.f32.mrf.mxu0
    %v1961 = vadd.f32 %v1938, %v1960
    %1962 = vdwg.mxu0
    %s1963 = scalar_lea.vmem %s43, 64
    %v1964 = vld [vmem:[%s1963] sm:$0xff]
    %v1965 = vld [vmem:[%s1963 + $0x8] sm:$0xff]
    %v1966 = vld [vmem:[%s1963 + $0x10] sm:$0xff]
    %v1967 = vld [vmem:[%s1963 + $0x18] sm:$0xff]
    %s1968 = scalar_lea.vmem %s45, 2
    %v1969 = vld [vmem:[%s1968] sm:$0x1]
    %v1971 = vperm.slane %v1969, 0
    %1973 = vmatpush.msra.mxu0 0.0
    %1974 = vmatpush.msra.mxu0 0.0
    %1975 = vmatpush.msra.mxu0 0.0
    %1976 = vmatpush.msra.mxu0 0.0
    %1977 = vmatpush.msra.mxu0 0.0
    %1978 = vmatpush.msra.mxu0 0.0
    %1979 = vmatpush.msra.mxu0 0.0
    %1980 = vmatpush.msra.mxu0 0.0
    %1981 = vmatpush.msra.mxu0 0.0
    %1982 = vmatpush.msra.mxu0 0.0
    %1983 = vmatpush.msra.mxu0 0.0
    %1984 = vmatpush.msra.mxu0 0.0
    %1985 = vmatpush.msra.mxu0 %v1967
    %1986 = vmatpush.msra.mxu0 %v1966
    %1987 = vmatpush.msra.mxu0 %v1965
    %1988 = vmatpush.msra.mxu0 %v1964
    %1989 = vmatmul.f32.gmra.mxu0 %v1400
    %v1990 = vpop.f32.mrf.mxu0
    %v1991 = vadd.f32 %v1971, %v1990
    %1992 = vmatmul.f32.gmra.mxu0 %v1403
    %v1993 = vpop.f32.mrf.mxu0
    %v1994 = vadd.f32 %v1971, %v1993
    %1995 = vdwg.mxu0
    %v1997 = vsel %vm274, %v1925, 0
    %v2000 = vsel %vm274, %v1958, 0
    %2002 = vmatpush.xpose.msra.mxu0 0.0
    %2003 = vmatpush.xpose.msra.mxu0 0.0
    %2004 = vmatpush.xpose.msra.mxu0 0.0
    %2005 = vmatpush.xpose.msra.mxu0 0.0
    %2006 = vmatpush.xpose.msra.mxu0 0.0
    %2007 = vmatpush.xpose.msra.mxu0 0.0
    %2008 = vmatpush.xpose.msra.mxu0 0.0
    %2009 = vmatpush.xpose.msra.mxu0 0.0
    %2010 = vmatpush.xpose.msra.mxu0 0.0
    %2011 = vmatpush.xpose.msra.mxu0 0.0
    %2012 = vmatpush.xpose.msra.mxu0 0.0
    %2013 = vmatpush.xpose.msra.mxu0 0.0
    %2014 = vmatpush.xpose.msra.mxu0 0.0
    %2015 = vmatpush.xpose.msra.mxu0 0.0
    %2016 = vmatpush.xpose.msra.mxu0 0.0
    %2017 = vmatpush.xpose.msra.mxu0 %v2000
    %2018 = vmatmul.f32.gmra.mxu0 %v1997
    %v2019 = vpop.f32.mrf.mxu0
    %v2020 = vadd.f32 0.0, %v2019
    %2021 = vdwg.mxu0
    %v2023 = vsel %vm274, %v1928, 0
    %v2026 = vsel %vm274, %v1961, 0
    %2028 = vmatpush.xpose.msra.mxu0 0.0
    %2029 = vmatpush.xpose.msra.mxu0 0.0
    %2030 = vmatpush.xpose.msra.mxu0 0.0
    %2031 = vmatpush.xpose.msra.mxu0 0.0
    %2032 = vmatpush.xpose.msra.mxu0 0.0
    %2033 = vmatpush.xpose.msra.mxu0 0.0
    %2034 = vmatpush.xpose.msra.mxu0 0.0
    %2035 = vmatpush.xpose.msra.mxu0 0.0
    %2036 = vmatpush.xpose.msra.mxu0 0.0
    %2037 = vmatpush.xpose.msra.mxu0 0.0
    %2038 = vmatpush.xpose.msra.mxu0 0.0
    %2039 = vmatpush.xpose.msra.mxu0 0.0
    %2040 = vmatpush.xpose.msra.mxu0 0.0
    %2041 = vmatpush.xpose.msra.mxu0 0.0
    %2042 = vmatpush.xpose.msra.mxu0 0.0
    %2043 = vmatpush.xpose.msra.mxu0 %v2026
    %2044 = vmatmul.f32.gmra.mxu0 %v2023
    %v2045 = vpop.f32.mrf.mxu0
    %v2046 = vadd.f32 0.0, %v2045
    %2047 = vdwg.mxu0
    %v2048 = vsel %vm274, %v2020, -inf
    %2049 = vmax.xlane.f32.xlu0 %v2048
    %v2050 = vpop.xlane.xlu0 %2049
    %v2051 = vsel %vm274, %v2046, -inf
    %2052 = vmax.xlane.f32.xlu0 %v2051
    %v2053 = vpop.xlane.xlu0 %2052
    %v2054 = vsub.f32 %v2020, %v2050
    %v2055 = vsub.f32 %v2046, %v2053
    %v2056 = vmul.f32 %v2054, 1.442695
    %v2057 = vpow.pop %v2056
    %v2058 = vmul.f32 %v2055, 1.442695
    %v2059 = vpow.pop %v2058
    %v2060 = vsel %vm274, %v2057, 0.0
    %2061 = vadd.xlane.f32.xlu0 %v2060
    %v2062 = vpop.xlane.xlu0 %2061
    %v2063 = vsel %vm274, %v2059, 0.0
    %2064 = vadd.xlane.f32.xlu0 %v2063
    %v2065 = vpop.xlane.xlu0 %2064
    %v2066 = vrcp.pop %v2062
    %v2067 = vrcp.pop %v2065
    %v2068 = vmul.f32 %v2057, %v2066
    %v2069 = vmul.f32 %v2059, %v2067
    %v2071 = vsel %vm274, %v2068, 0
    %2073 = vmatpush.msra.mxu0 0.0
    %2074 = vmatpush.msra.mxu0 0.0
    %2075 = vmatpush.msra.mxu0 0.0
    %2076 = vmatpush.msra.mxu0 0.0
    %2077 = vmatpush.msra.mxu0 0.0
    %2078 = vmatpush.msra.mxu0 0.0
    %2079 = vmatpush.msra.mxu0 0.0
    %2080 = vmatpush.msra.mxu0 0.0
    %2081 = vmatpush.msra.mxu0 0.0
    %2082 = vmatpush.msra.mxu0 0.0
    %2083 = vmatpush.msra.mxu0 0.0
    %2084 = vmatpush.msra.mxu0 0.0
    %2085 = vmatpush.msra.mxu0 0.0
    %2086 = vmatpush.msra.mxu0 0.0
    %2087 = vmatpush.msra.mxu0 0.0
    %2088 = vmatpush.msra.mxu0 %v1991
    %2089 = vmatmul.f32.gmra.mxu0 %v2071
    %v2090 = vpop.f32.mrf.mxu0
    %v2091 = vadd.f32 0.0, %v2090
    %2092 = vdwg.mxu0
    %v2094 = vsel %vm274, %v2069, 0
    %2096 = vmatpush.msra.mxu0 0.0
    %2097 = vmatpush.msra.mxu0 0.0
    %2098 = vmatpush.msra.mxu0 0.0
    %2099 = vmatpush.msra.mxu0 0.0
    %2100 = vmatpush.msra.mxu0 0.0
    %2101 = vmatpush.msra.mxu0 0.0
    %2102 = vmatpush.msra.mxu0 0.0
    %2103 = vmatpush.msra.mxu0 0.0
    %2104 = vmatpush.msra.mxu0 0.0
    %2105 = vmatpush.msra.mxu0 0.0
    %2106 = vmatpush.msra.mxu0 0.0
    %2107 = vmatpush.msra.mxu0 0.0
    %2108 = vmatpush.msra.mxu0 0.0
    %2109 = vmatpush.msra.mxu0 0.0
    %2110 = vmatpush.msra.mxu0 0.0
    %2111 = vmatpush.msra.mxu0 %v1994
    %2112 = vmatmul.f32.gmra.mxu0 %v2094
    %v2113 = vpop.f32.mrf.mxu0
    %v2114 = vadd.f32 0.0, %v2113
    %2115 = vdwg.mxu0
    %s2116 = scalar_lea.vmem %s47, 16
    %v2117 = vld [vmem:[%s2116] sm:$0xff]
    %v2119 = vsel %vm274, %v2091, 0
    %v2122 = vsel %vm274, %v2114, 0
    %2124 = vmatpush.msra.mxu0 0.0
    %2125 = vmatpush.msra.mxu0 0.0
    %2126 = vmatpush.msra.mxu0 0.0
    %2127 = vmatpush.msra.mxu0 0.0
    %2128 = vmatpush.msra.mxu0 0.0
    %2129 = vmatpush.msra.mxu0 0.0
    %2130 = vmatpush.msra.mxu0 0.0
    %2131 = vmatpush.msra.mxu0 0.0
    %2132 = vmatpush.msra.mxu0 0.0
    %2133 = vmatpush.msra.mxu0 0.0
    %2134 = vmatpush.msra.mxu0 0.0
    %2135 = vmatpush.msra.mxu0 0.0
    %2136 = vmatpush.msra.mxu0 0.0
    %2137 = vmatpush.msra.mxu0 0.0
    %2138 = vmatpush.msra.mxu0 0.0
    %2139 = vmatpush.msra.mxu0 %v2117
    %2140 = vmatmul.f32.gmra.mxu0 %v2119
    %v2141 = vpop.f32.mrf.mxu0
    %v2142 = vadd.f32 0.0, %v2141
    %2143 = vmatmul.f32.gmra.mxu0 %v2122
    %v2144 = vpop.f32.mrf.mxu0
    %v2145 = vadd.f32 0.0, %v2144
    %2146 = vdwg.mxu0
    %v2147 = vadd.f32 %v1895, %v2142
    %v2148 = vadd.f32 %v1896, %v2145
    %s2149 = scalar_lea.vmem %s35, 96
    %v2150 = vld [vmem:[%s2149] sm:$0xff]
    %v2151 = vld [vmem:[%s2149 + $0x8] sm:$0xff]
    %v2152 = vld [vmem:[%s2149 + $0x10] sm:$0xff]
    %v2153 = vld [vmem:[%s2149 + $0x18] sm:$0xff]
    %s2154 = scalar_lea.vmem %s37, 3
    %v2155 = vld [vmem:[%s2154] sm:$0x1]
    %v2157 = vperm.slane %v2155, 0
    %2159 = vmatpush.msra.mxu0 0.0
    %2160 = vmatpush.msra.mxu0 0.0
    %2161 = vmatpush.msra.mxu0 0.0
    %2162 = vmatpush.msra.mxu0 0.0
    %2163 = vmatpush.msra.mxu0 0.0
    %2164 = vmatpush.msra.mxu0 0.0
    %2165 = vmatpush.msra.mxu0 0.0
    %2166 = vmatpush.msra.mxu0 0.0
    %2167 = vmatpush.msra.mxu0 0.0
    %2168 = vmatpush.msra.mxu0 0.0
    %2169 = vmatpush.msra.mxu0 0.0
    %2170 = vmatpush.msra.mxu0 0.0
    %2171 = vmatpush.msra.mxu0 %v2153
    %2172 = vmatpush.msra.mxu0 %v2152
    %2173 = vmatpush.msra.mxu0 %v2151
    %2174 = vmatpush.msra.mxu0 %v2150
    %2175 = vmatmul.f32.gmra.mxu0 %v1400
    %v2176 = vpop.f32.mrf.mxu0
    %v2177 = vadd.f32 %v2157, %v2176
    %2178 = vmatmul.f32.gmra.mxu0 %v1403
    %v2179 = vpop.f32.mrf.mxu0
    %v2180 = vadd.f32 %v2157, %v2179
    %2181 = vdwg.mxu0
    %s2182 = scalar_lea.vmem %s39, 96
    %v2183 = vld [vmem:[%s2182] sm:$0xff]
    %v2184 = vld [vmem:[%s2182 + $0x8] sm:$0xff]
    %v2185 = vld [vmem:[%s2182 + $0x10] sm:$0xff]
    %v2186 = vld [vmem:[%s2182 + $0x18] sm:$0xff]
    %s2187 = scalar_lea.vmem %s41, 3
    %v2188 = vld [vmem:[%s2187] sm:$0x1]
    %v2190 = vperm.slane %v2188, 0
    %2192 = vmatpush.msra.mxu0 0.0
    %2193 = vmatpush.msra.mxu0 0.0
    %2194 = vmatpush.msra.mxu0 0.0
    %2195 = vmatpush.msra.mxu0 0.0
    %2196 = vmatpush.msra.mxu0 0.0
    %2197 = vmatpush.msra.mxu0 0.0
    %2198 = vmatpush.msra.mxu0 0.0
    %2199 = vmatpush.msra.mxu0 0.0
    %2200 = vmatpush.msra.mxu0 0.0
    %2201 = vmatpush.msra.mxu0 0.0
    %2202 = vmatpush.msra.mxu0 0.0
    %2203 = vmatpush.msra.mxu0 0.0
    %2204 = vmatpush.msra.mxu0 %v2186
    %2205 = vmatpush.msra.mxu0 %v2185
    %2206 = vmatpush.msra.mxu0 %v2184
    %2207 = vmatpush.msra.mxu0 %v2183
    %2208 = vmatmul.f32.gmra.mxu0 %v1400
    %v2209 = vpop.f32.mrf.mxu0
    %v2210 = vadd.f32 %v2190, %v2209
    %2211 = vmatmul.f32.gmra.mxu0 %v1403
    %v2212 = vpop.f32.mrf.mxu0
    %v2213 = vadd.f32 %v2190, %v2212
    %2214 = vdwg.mxu0
    %s2215 = scalar_lea.vmem %s43, 96
    %v2216 = vld [vmem:[%s2215] sm:$0xff]
    %v2217 = vld [vmem:[%s2215 + $0x8] sm:$0xff]
    %v2218 = vld [vmem:[%s2215 + $0x10] sm:$0xff]
    %v2219 = vld [vmem:[%s2215 + $0x18] sm:$0xff]
    %s2220 = scalar_lea.vmem %s45, 3
    %v2221 = vld [vmem:[%s2220] sm:$0x1]
    %v2223 = vperm.slane %v2221, 0
    %2225 = vmatpush.msra.mxu0 0.0
    %2226 = vmatpush.msra.mxu0 0.0
    %2227 = vmatpush.msra.mxu0 0.0
    %2228 = vmatpush.msra.mxu0 0.0
    %2229 = vmatpush.msra.mxu0 0.0
    %2230 = vmatpush.msra.mxu0 0.0
    %2231 = vmatpush.msra.mxu0 0.0
    %2232 = vmatpush.msra.mxu0 0.0
    %2233 = vmatpush.msra.mxu0 0.0
    %2234 = vmatpush.msra.mxu0 0.0
    %2235 = vmatpush.msra.mxu0 0.0
    %2236 = vmatpush.msra.mxu0 0.0
    %2237 = vmatpush.msra.mxu0 %v2219
    %2238 = vmatpush.msra.mxu0 %v2218
    %2239 = vmatpush.msra.mxu0 %v2217
    %2240 = vmatpush.msra.mxu0 %v2216
    %2241 = vmatmul.f32.gmra.mxu0 %v1400
    %v2242 = vpop.f32.mrf.mxu0
    %v2243 = vadd.f32 %v2223, %v2242
    %2244 = vmatmul.f32.gmra.mxu0 %v1403
    %v2245 = vpop.f32.mrf.mxu0
    %v2246 = vadd.f32 %v2223, %v2245
    %2247 = vdwg.mxu0
    %v2249 = vsel %vm274, %v2177, 0
    %v2252 = vsel %vm274, %v2210, 0
    %2254 = vmatpush.xpose.msra.mxu0 0.0
    %2255 = vmatpush.xpose.msra.mxu0 0.0
    %2256 = vmatpush.xpose.msra.mxu0 0.0
    %2257 = vmatpush.xpose.msra.mxu0 0.0
    %2258 = vmatpush.xpose.msra.mxu0 0.0
    %2259 = vmatpush.xpose.msra.mxu0 0.0
    %2260 = vmatpush.xpose.msra.mxu0 0.0
    %2261 = vmatpush.xpose.msra.mxu0 0.0
    %2262 = vmatpush.xpose.msra.mxu0 0.0
    %2263 = vmatpush.xpose.msra.mxu0 0.0
    %2264 = vmatpush.xpose.msra.mxu0 0.0
    %2265 = vmatpush.xpose.msra.mxu0 0.0
    %2266 = vmatpush.xpose.msra.mxu0 0.0
    %2267 = vmatpush.xpose.msra.mxu0 0.0
    %2268 = vmatpush.xpose.msra.mxu0 0.0
    %2269 = vmatpush.xpose.msra.mxu0 %v2252
    %2270 = vmatmul.f32.gmra.mxu0 %v2249
    %v2271 = vpop.f32.mrf.mxu0
    %v2272 = vadd.f32 0.0, %v2271
    %2273 = vdwg.mxu0
    %v2275 = vsel %vm274, %v2180, 0
    %v2278 = vsel %vm274, %v2213, 0
    %2280 = vmatpush.xpose.msra.mxu0 0.0
    %2281 = vmatpush.xpose.msra.mxu0 0.0
    %2282 = vmatpush.xpose.msra.mxu0 0.0
    %2283 = vmatpush.xpose.msra.mxu0 0.0
    %2284 = vmatpush.xpose.msra.mxu0 0.0
    %2285 = vmatpush.xpose.msra.mxu0 0.0
    %2286 = vmatpush.xpose.msra.mxu0 0.0
    %2287 = vmatpush.xpose.msra.mxu0 0.0
    %2288 = vmatpush.xpose.msra.mxu0 0.0
    %2289 = vmatpush.xpose.msra.mxu0 0.0
    %2290 = vmatpush.xpose.msra.mxu0 0.0
    %2291 = vmatpush.xpose.msra.mxu0 0.0
    %2292 = vmatpush.xpose.msra.mxu0 0.0
    %2293 = vmatpush.xpose.msra.mxu0 0.0
    %2294 = vmatpush.xpose.msra.mxu0 0.0
    %2295 = vmatpush.xpose.msra.mxu0 %v2278
    %2296 = vmatmul.f32.gmra.mxu0 %v2275
    %v2297 = vpop.f32.mrf.mxu0
    %v2298 = vadd.f32 0.0, %v2297
    %2299 = vdwg.mxu0
    %v2300 = vsel %vm274, %v2272, -inf
    %2301 = vmax.xlane.f32.xlu0 %v2300
    %v2302 = vpop.xlane.xlu0 %2301
    %v2303 = vsel %vm274, %v2298, -inf
    %2304 = vmax.xlane.f32.xlu0 %v2303
    %v2305 = vpop.xlane.xlu0 %2304
    %v2306 = vsub.f32 %v2272, %v2302
    %v2307 = vsub.f32 %v2298, %v2305
    %v2308 = vmul.f32 %v2306, 1.442695
    %v2309 = vpow.pop %v2308
    %v2310 = vmul.f32 %v2307, 1.442695
    %v2311 = vpow.pop %v2310
    %v2312 = vsel %vm274, %v2309, 0.0
    %2313 = vadd.xlane.f32.xlu0 %v2312
    %v2314 = vpop.xlane.xlu0 %2313
    %v2315 = vsel %vm274, %v2311, 0.0
    %2316 = vadd.xlane.f32.xlu0 %v2315
    %v2317 = vpop.xlane.xlu0 %2316
    %v2318 = vrcp.pop %v2314
    %v2319 = vrcp.pop %v2317
    %v2320 = vmul.f32 %v2309, %v2318
    %v2321 = vmul.f32 %v2311, %v2319
    %v2323 = vsel %vm274, %v2320, 0
    %2325 = vmatpush.msra.mxu0 0.0
    %2326 = vmatpush.msra.mxu0 0.0
    %2327 = vmatpush.msra.mxu0 0.0
    %2328 = vmatpush.msra.mxu0 0.0
    %2329 = vmatpush.msra.mxu0 0.0
    %2330 = vmatpush.msra.mxu0 0.0
    %2331 = vmatpush.msra.mxu0 0.0
    %2332 = vmatpush.msra.mxu0 0.0
    %2333 = vmatpush.msra.mxu0 0.0
    %2334 = vmatpush.msra.mxu0 0.0
    %2335 = vmatpush.msra.mxu0 0.0
    %2336 = vmatpush.msra.mxu0 0.0
    %2337 = vmatpush.msra.mxu0 0.0
    %2338 = vmatpush.msra.mxu0 0.0
    %2339 = vmatpush.msra.mxu0 0.0
    %2340 = vmatpush.msra.mxu0 %v2243
    %2341 = vmatmul.f32.gmra.mxu0 %v2323
    %v2342 = vpop.f32.mrf.mxu0
    %v2343 = vadd.f32 0.0, %v2342
    %2344 = vdwg.mxu0
    %v2346 = vsel %vm274, %v2321, 0
    %2348 = vmatpush.msra.mxu0 0.0
    %2349 = vmatpush.msra.mxu0 0.0
    %2350 = vmatpush.msra.mxu0 0.0
    %2351 = vmatpush.msra.mxu0 0.0
    %2352 = vmatpush.msra.mxu0 0.0
    %2353 = vmatpush.msra.mxu0 0.0
    %2354 = vmatpush.msra.mxu0 0.0
    %2355 = vmatpush.msra.mxu0 0.0
    %2356 = vmatpush.msra.mxu0 0.0
    %2357 = vmatpush.msra.mxu0 0.0
    %2358 = vmatpush.msra.mxu0 0.0
    %2359 = vmatpush.msra.mxu0 0.0
    %2360 = vmatpush.msra.mxu0 0.0
    %2361 = vmatpush.msra.mxu0 0.0
    %2362 = vmatpush.msra.mxu0 0.0
    %2363 = vmatpush.msra.mxu0 %v2246
    %2364 = vmatmul.f32.gmra.mxu0 %v2346
    %v2365 = vpop.f32.mrf.mxu0
    %v2366 = vadd.f32 0.0, %v2365
    %2367 = vdwg.mxu0
    %s2368 = scalar_lea.vmem %s47, 24
    %v2369 = vld [vmem:[%s2368] sm:$0xff]
    %v2371 = vsel %vm274, %v2343, 0
    %v2374 = vsel %vm274, %v2366, 0
    %2376 = vmatpush.msra.mxu0 0.0
    %2377 = vmatpush.msra.mxu0 0.0
    %2378 = vmatpush.msra.mxu0 0.0
    %2379 = vmatpush.msra.mxu0 0.0
    %2380 = vmatpush.msra.mxu0 0.0
    %2381 = vmatpush.msra.mxu0 0.0
    %2382 = vmatpush.msra.mxu0 0.0
    %2383 = vmatpush.msra.mxu0 0.0
    %2384 = vmatpush.msra.mxu0 0.0
    %2385 = vmatpush.msra.mxu0 0.0
    %2386 = vmatpush.msra.mxu0 0.0
    %2387 = vmatpush.msra.mxu0 0.0
    %2388 = vmatpush.msra.mxu0 0.0
    %2389 = vmatpush.msra.mxu0 0.0
    %2390 = vmatpush.msra.mxu0 0.0
    %2391 = vmatpush.msra.mxu0 %v2369
    %2392 = vmatmul.f32.gmra.mxu0 %v2371
    %v2393 = vpop.f32.mrf.mxu0
    %v2394 = vadd.f32 0.0, %v2393
    %2395 = vmatmul.f32.gmra.mxu0 %v2374
    %v2396 = vpop.f32.mrf.mxu0
    %v2397 = vadd.f32 0.0, %v2396
    %2398 = vdwg.mxu0
    %v2399 = vadd.f32 %v2147, %v2394
    %v2400 = vadd.f32 %v2148, %v2397
    %v2401 = vadd.f32 %v1388, %v2399
    %v2402 = vadd.f32 %v1389, %v2400
    %v2403 = vld [vmem:[%s51] sm:$0x1]
    %v2404 = vld [vmem:[%s53] sm:$0x1]
    %v2405 = vsel %vm182, %v2401, 0.0
    %2406 = vadd.xlane.f32.xlu0 %v2405
    %v2407 = vpop.xlane.xlu0 %2406
    %v2408 = vsel %vm182, %v2402, 0.0
    %2409 = vadd.xlane.f32.xlu0 %v2408
    %v2410 = vpop.xlane.xlu0 %2409
    %v2411 = vmul.f32 %v2407, %v1202
    %v2412 = vmul.f32 %v2410, %v1202
    %v2413 = vsub.f32 %v2401, %v2411
    %v2414 = vsub.f32 %v2402, %v2412
    %v2415 = vmul.f32 %v2413, %v2413
    %v2416 = vmul.f32 %v2414, %v2414
    %v2417 = vsel %vm182, %v2415, 0.0
    %2418 = vadd.xlane.f32.xlu0 %v2417
    %v2419 = vpop.xlane.xlu0 %2418
    %v2420 = vsel %vm182, %v2416, 0.0
    %2421 = vadd.xlane.f32.xlu0 %v2420
    %v2422 = vpop.xlane.xlu0 %2421
    %v2423 = vmul.f32 %v2419, %v1202
    %v2424 = vmul.f32 %v2422, %v1202
    %v2425 = vadd.f32 %v2423, 1e-05
    %v2426 = vadd.f32 %v2424, 1e-05
    %v2427 = vrsqrt.pop %v2425
    %v2428 = vmul.f32 %v2427, %v2425
    %v2429 = vmul.f32 %v2428, %v2427
    %v2430 = vmul.f32 0.5, %v2429
    %v2431 = vsub.f32 1.5, %v2430
    %v2432 = vmul.f32 %v2427, %v2431
    %vm2433 = vweird.f32 %v2425
    %vm2434 = vweird.f32 %v2427
    %vm2435 = vmor %vm2433, %vm2434
    %v2436 = vsel %vm2435, %v2427, %v2432
    %v2437 = vrsqrt.pop %v2426
    %v2438 = vmul.f32 %v2437, %v2426
    %v2439 = vmul.f32 %v2438, %v2437
    %v2440 = vmul.f32 0.5, %v2439
    %v2441 = vsub.f32 1.5, %v2440
    %v2442 = vmul.f32 %v2437, %v2441
    %vm2443 = vweird.f32 %v2426
    %vm2444 = vweird.f32 %v2437
    %vm2445 = vmor %vm2443, %vm2444
    %v2446 = vsel %vm2445, %v2437, %v2442
    %v2447 = vmul.f32 %v2413, %v2436
    %v2448 = vmul.f32 %v2414, %v2446
    %v2450 = vperm.slane %v2403, 0
    %v2452 = vmul.f32 %v2447, %v2450
    %v2453 = vmul.f32 %v2448, %v2450
    %v2455 = vperm.slane %v2404, 0
    %v2457 = vadd.f32 %v2452, %v2455
    %v2458 = vadd.f32 %v2453, %v2455
    %v2459 = vld [vmem:[%s55] sm:$0xff]
    %v2460 = vld [vmem:[%s55 + $0x8] sm:$0xff]
    %v2461 = vld [vmem:[%s55 + $0x10] sm:$0xff]
    %v2462 = vld [vmem:[%s55 + $0x18] sm:$0xff]
    %v2463 = vld [vmem:[%s57] sm:$0x1]
    %v2465 = vperm.slane %v2463, 0
    %v2468 = vsel %vm182, %v2457, 0
    %v2471 = vsel %vm182, %v2458, 0
    %2473 = vmatpush.msra.mxu0 0.0
    %2474 = vmatpush.msra.mxu0 0.0
    %2475 = vmatpush.msra.mxu0 0.0
    %2476 = vmatpush.msra.mxu0 0.0
    %2477 = vmatpush.msra.mxu0 0.0
    %2478 = vmatpush.msra.mxu0 0.0
    %2479 = vmatpush.msra.mxu0 0.0
    %2480 = vmatpush.msra.mxu0 0.0
    %2481 = vmatpush.msra.mxu0 0.0
    %2482 = vmatpush.msra.mxu0 0.0
    %2483 = vmatpush.msra.mxu0 0.0
    %2484 = vmatpush.msra.mxu0 0.0
    %2485 = vmatpush.msra.mxu0 %v2462
    %2486 = vmatpush.msra.mxu0 %v2461
    %2487 = vmatpush.msra.mxu0 %v2460
    %2488 = vmatpush.msra.mxu0 %v2459
    %2489 = vmatmul.f32.gmra.mxu0 %v2468
    %v2490 = vpop.f32.mrf.mxu0
    %v2491 = vadd.f32 %v2465, %v2490
    %2492 = vmatmul.f32.gmra.mxu0 %v2471
    %v2493 = vpop.f32.mrf.mxu0
    %v2494 = vadd.f32 %v2465, %v2493
    %2495 = vdwg.mxu0
    %v2496 = vmax.f32 %v2491, 0.0
    %v2497 = vmax.f32 %v2494, 0.0
    %v2498 = vld [vmem:[%s59] sm:$0xff]
    %v2499 = vld [vmem:[%s59 + $0x8] sm:$0xff]
    %v2500 = vld [vmem:[%s59 + $0x10] sm:$0xff]
    %v2501 = vld [vmem:[%s59 + $0x18] sm:$0xff]
    %v2502 = vld [vmem:[%s59 + $0x20] sm:$0xff]
    %v2503 = vld [vmem:[%s59 + $0x28] sm:$0xff]
    %v2504 = vld [vmem:[%s59 + $0x30] sm:$0xff]
    %v2505 = vld [vmem:[%s59 + $0x38] sm:$0xff]
    %v2506 = vld [vmem:[%s61] sm:$0x1]
    %v2508 = vperm.slane %v2506, 0
    %v2511 = vsel %vm1302, %v2496, 0
    %v2514 = vsel %vm1302, %v2497, 0
    %2516 = vmatpush.msra.mxu0 0.0
    %2517 = vmatpush.msra.mxu0 0.0
    %2518 = vmatpush.msra.mxu0 0.0
    %2519 = vmatpush.msra.mxu0 0.0
    %2520 = vmatpush.msra.mxu0 0.0
    %2521 = vmatpush.msra.mxu0 0.0
    %2522 = vmatpush.msra.mxu0 0.0
    %2523 = vmatpush.msra.mxu0 0.0
    %2524 = vmatpush.msra.mxu0 %v2505
    %2525 = vmatpush.msra.mxu0 %v2504
    %2526 = vmatpush.msra.mxu0 %v2503
    %2527 = vmatpush.msra.mxu0 %v2502
    %2528 = vmatpush.msra.mxu0 %v2501
    %2529 = vmatpush.msra.mxu0 %v2500
    %2530 = vmatpush.msra.mxu0 %v2499
    %2531 = vmatpush.msra.mxu0 %v2498
    %2532 = vmatmul.f32.gmra.mxu0 %v2511
    %v2533 = vpop.f32.mrf.mxu0
    %v2534 = vadd.f32 %v2508, %v2533
    %2535 = vmatmul.f32.gmra.mxu0 %v2514
    %v2536 = vpop.f32.mrf.mxu0
    %v2537 = vadd.f32 %v2508, %v2536
    %2538 = vdwg.mxu0
    %v2539 = vadd.f32 %v2457, %v2534
    %v2540 = vadd.f32 %v2458, %v2537
    %v2541 = vld [vmem:[%s63] sm:$0x1]
    %v2542 = vld [vmem:[%s65] sm:$0x1]
    %v2543 = vsel %vm182, %v2539, 0.0
    %2544 = vadd.xlane.f32.xlu0 %v2543
    %v2545 = vpop.xlane.xlu0 %2544
    %v2546 = vsel %vm182, %v2540, 0.0
    %2547 = vadd.xlane.f32.xlu0 %v2546
    %v2548 = vpop.xlane.xlu0 %2547
    %v2549 = vmul.f32 %v2545, %v1202
    %v2550 = vmul.f32 %v2548, %v1202
    %v2551 = vsub.f32 %v2539, %v2549
    %v2552 = vsub.f32 %v2540, %v2550
    %v2553 = vmul.f32 %v2551, %v2551
    %v2554 = vmul.f32 %v2552, %v2552
    %v2555 = vsel %vm182, %v2553, 0.0
    %2556 = vadd.xlane.f32.xlu0 %v2555
    %v2557 = vpop.xlane.xlu0 %2556
    %v2558 = vsel %vm182, %v2554, 0.0
    %2559 = vadd.xlane.f32.xlu0 %v2558
    %v2560 = vpop.xlane.xlu0 %2559
    %v2561 = vmul.f32 %v2557, %v1202
    %v2562 = vmul.f32 %v2560, %v1202
    %v2563 = vadd.f32 %v2561, 1e-05
    %v2564 = vadd.f32 %v2562, 1e-05
    %v2565 = vrsqrt.pop %v2563
    %v2566 = vmul.f32 %v2565, %v2563
    %v2567 = vmul.f32 %v2566, %v2565
    %v2568 = vmul.f32 0.5, %v2567
    %v2569 = vsub.f32 1.5, %v2568
    %v2570 = vmul.f32 %v2565, %v2569
    %vm2571 = vweird.f32 %v2563
    %vm2572 = vweird.f32 %v2565
    %vm2573 = vmor %vm2571, %vm2572
    %v2574 = vsel %vm2573, %v2565, %v2570
    %v2575 = vrsqrt.pop %v2564
    %v2576 = vmul.f32 %v2575, %v2564
    %v2577 = vmul.f32 %v2576, %v2575
    %v2578 = vmul.f32 0.5, %v2577
    %v2579 = vsub.f32 1.5, %v2578
    %v2580 = vmul.f32 %v2575, %v2579
    %vm2581 = vweird.f32 %v2564
    %vm2582 = vweird.f32 %v2575
    %vm2583 = vmor %vm2581, %vm2582
    %v2584 = vsel %vm2583, %v2575, %v2580
    %v2585 = vmul.f32 %v2551, %v2574
    %v2586 = vmul.f32 %v2552, %v2584
    %v2588 = vperm.slane %v2541, 0
    %v2590 = vmul.f32 %v2585, %v2588
    %v2591 = vmul.f32 %v2586, %v2588
    %v2593 = vperm.slane %v2542, 0
    %v2595 = vadd.f32 %v2590, %v2593
    %v2596 = vadd.f32 %v2591, %v2593
    %v2597 = vld [vmem:[%s69] sm:$0x1]
    %v2598 = vld [vmem:[%s67] sm:$0xff]
    %v2599 = vld [vmem:[%s67 + $0x8] sm:$0xff]
    %v2600 = vld [vmem:[%s67 + $0x10] sm:$0xff]
    %v2601 = vld [vmem:[%s67 + $0x18] sm:$0xff]
    %v2603 = vsel %vm182, %v2595, 0
    %2605 = vmatpush.msra.mxu0 0.0
    %2606 = vmatpush.msra.mxu0 0.0
    %2607 = vmatpush.msra.mxu0 0.0
    %2608 = vmatpush.msra.mxu0 0.0
    %2609 = vmatpush.msra.mxu0 0.0
    %2610 = vmatpush.msra.mxu0 0.0
    %2611 = vmatpush.msra.mxu0 0.0
    %2612 = vmatpush.msra.mxu0 0.0
    %2613 = vmatpush.msra.mxu0 0.0
    %2614 = vmatpush.msra.mxu0 0.0
    %2615 = vmatpush.msra.mxu0 0.0
    %2616 = vmatpush.msra.mxu0 0.0
    %2617 = vmatpush.msra.mxu0 %v2601
    %2618 = vmatpush.msra.mxu0 %v2600
    %2619 = vmatpush.msra.mxu0 %v2599
    %2620 = vmatpush.msra.mxu0 %v2598
    %2621 = vmatmul.f32.gmra.mxu0 %v2603
    %v2622 = vpop.f32.mrf.mxu0
    %v2623 = vadd.f32 0.0, %v2622
    %2624 = vdwg.mxu0
    %v2625 = vadd.f32 %v2597, %v2623
    %s2626 = scalar_lea.vmem %s67, 32
    %v2627 = vld [vmem:[%s2626] sm:$0xff]
    %v2628 = vld [vmem:[%s2626 + $0x8] sm:$0xff]
    %v2629 = vld [vmem:[%s2626 + $0x10] sm:$0xff]
    %v2630 = vld [vmem:[%s2626 + $0x18] sm:$0xff]
    %v2631 = vrot.slane %v2595, 1
    %v2632 = vsel %vm182, %v2631, 0
    %2634 = vmatpush.msra.mxu0 0.0
    %2635 = vmatpush.msra.mxu0 0.0
    %2636 = vmatpush.msra.mxu0 0.0
    %2637 = vmatpush.msra.mxu0 0.0
    %2638 = vmatpush.msra.mxu0 0.0
    %2639 = vmatpush.msra.mxu0 0.0
    %2640 = vmatpush.msra.mxu0 0.0
    %2641 = vmatpush.msra.mxu0 0.0
    %2642 = vmatpush.msra.mxu0 0.0
    %2643 = vmatpush.msra.mxu0 0.0
    %2644 = vmatpush.msra.mxu0 0.0
    %2645 = vmatpush.msra.mxu0 0.0
    %2646 = vmatpush.msra.mxu0 %v2630
    %2647 = vmatpush.msra.mxu0 %v2629
    %2648 = vmatpush.msra.mxu0 %v2628
    %2649 = vmatpush.msra.mxu0 %v2627
    %2650 = vmatmul.f32.gmra.mxu0 %v2632
    %v2651 = vpop.f32.mrf.mxu0
    %v2652 = vadd.f32 0.0, %v2651
    %2653 = vdwg.mxu0
    %v2654 = vadd.f32 %v2625, %v2652
    %s2655 = scalar_lea.vmem %s67, 64
    %v2656 = vld [vmem:[%s2655] sm:$0xff]
    %v2657 = vld [vmem:[%s2655 + $0x8] sm:$0xff]
    %v2658 = vld [vmem:[%s2655 + $0x10] sm:$0xff]
    %v2659 = vld [vmem:[%s2655 + $0x18] sm:$0xff]
    %v2660 = vrot.slane %v2595, 2
    %v2661 = vsel %vm182, %v2660, 0
    %2663 = vmatpush.msra.mxu0 0.0
    %2664 = vmatpush.msra.mxu0 0.0
    %2665 = vmatpush.msra.mxu0 0.0
    %2666 = vmatpush.msra.mxu0 0.0
    %2667 = vmatpush.msra.mxu0 0.0
    %2668 = vmatpush.msra.mxu0 0.0
    %2669 = vmatpush.msra.mxu0 0.0
    %2670 = vmatpush.msra.mxu0 0.0
    %2671 = vmatpush.msra.mxu0 0.0
    %2672 = vmatpush.msra.mxu0 0.0
    %2673 = vmatpush.msra.mxu0 0.0
    %2674 = vmatpush.msra.mxu0 0.0
    %2675 = vmatpush.msra.mxu0 %v2659
    %2676 = vmatpush.msra.mxu0 %v2658
    %2677 = vmatpush.msra.mxu0 %v2657
    %2678 = vmatpush.msra.mxu0 %v2656
    %2679 = vmatmul.f32.gmra.mxu0 %v2661
    %v2680 = vpop.f32.mrf.mxu0
    %v2681 = vadd.f32 0.0, %v2680
    %2682 = vdwg.mxu0
    %v2683 = vadd.f32 %v2654, %v2681
    %s2684 = scalar_lea.vmem %s67, 96
    %v2685 = vld [vmem:[%s2684] sm:$0xff]
    %v2686 = vld [vmem:[%s2684 + $0x8] sm:$0xff]
    %v2687 = vld [vmem:[%s2684 + $0x10] sm:$0xff]
    %v2688 = vld [vmem:[%s2684 + $0x18] sm:$0xff]
    %v2689 = vrot.slane %v2595, 3
    %v2690 = vsel %vm182, %v2689, 0
    %2692 = vmatpush.msra.mxu0 0.0
    %2693 = vmatpush.msra.mxu0 0.0
    %2694 = vmatpush.msra.mxu0 0.0
    %2695 = vmatpush.msra.mxu0 0.0
    %2696 = vmatpush.msra.mxu0 0.0
    %2697 = vmatpush.msra.mxu0 0.0
    %2698 = vmatpush.msra.mxu0 0.0
    %2699 = vmatpush.msra.mxu0 0.0
    %2700 = vmatpush.msra.mxu0 0.0
    %2701 = vmatpush.msra.mxu0 0.0
    %2702 = vmatpush.msra.mxu0 0.0
    %2703 = vmatpush.msra.mxu0 0.0
    %2704 = vmatpush.msra.mxu0 %v2688
    %2705 = vmatpush.msra.mxu0 %v2687
    %2706 = vmatpush.msra.mxu0 %v2686
    %2707 = vmatpush.msra.mxu0 %v2685
    %2708 = vmatmul.f32.gmra.mxu0 %v2690
    %v2709 = vpop.f32.mrf.mxu0
    %v2710 = vadd.f32 0.0, %v2709
    %2711 = vdwg.mxu0
    %v2712 = vadd.f32 %v2683, %v2710
    %s2713 = scalar_lea.vmem %s67, 128
    %v2714 = vld [vmem:[%s2713] sm:$0xff]
    %v2715 = vld [vmem:[%s2713 + $0x8] sm:$0xff]
    %v2716 = vld [vmem:[%s2713 + $0x10] sm:$0xff]
    %v2717 = vld [vmem:[%s2713 + $0x18] sm:$0xff]
    %v2718 = vrot.slane %v2595, 4
    %v2719 = vsel %vm182, %v2718, 0
    %2721 = vmatpush.msra.mxu0 0.0
    %2722 = vmatpush.msra.mxu0 0.0
    %2723 = vmatpush.msra.mxu0 0.0
    %2724 = vmatpush.msra.mxu0 0.0
    %2725 = vmatpush.msra.mxu0 0.0
    %2726 = vmatpush.msra.mxu0 0.0
    %2727 = vmatpush.msra.mxu0 0.0
    %2728 = vmatpush.msra.mxu0 0.0
    %2729 = vmatpush.msra.mxu0 0.0
    %2730 = vmatpush.msra.mxu0 0.0
    %2731 = vmatpush.msra.mxu0 0.0
    %2732 = vmatpush.msra.mxu0 0.0
    %2733 = vmatpush.msra.mxu0 %v2717
    %2734 = vmatpush.msra.mxu0 %v2716
    %2735 = vmatpush.msra.mxu0 %v2715
    %2736 = vmatpush.msra.mxu0 %v2714
    %2737 = vmatmul.f32.gmra.mxu0 %v2719
    %v2738 = vpop.f32.mrf.mxu0
    %v2739 = vadd.f32 0.0, %v2738
    %2740 = vdwg.mxu0
    %v2741 = vadd.f32 %v2712, %v2739
    %s2742 = scalar_lea.vmem %s67, 160
    %v2743 = vld [vmem:[%s2742] sm:$0xff]
    %v2744 = vld [vmem:[%s2742 + $0x8] sm:$0xff]
    %v2745 = vld [vmem:[%s2742 + $0x10] sm:$0xff]
    %v2746 = vld [vmem:[%s2742 + $0x18] sm:$0xff]
    %v2747 = vrot.slane %v2595, 5
    %v2748 = vsel %vm182, %v2747, 0
    %2750 = vmatpush.msra.mxu0 0.0
    %2751 = vmatpush.msra.mxu0 0.0
    %2752 = vmatpush.msra.mxu0 0.0
    %2753 = vmatpush.msra.mxu0 0.0
    %2754 = vmatpush.msra.mxu0 0.0
    %2755 = vmatpush.msra.mxu0 0.0
    %2756 = vmatpush.msra.mxu0 0.0
    %2757 = vmatpush.msra.mxu0 0.0
    %2758 = vmatpush.msra.mxu0 0.0
    %2759 = vmatpush.msra.mxu0 0.0
    %2760 = vmatpush.msra.mxu0 0.0
    %2761 = vmatpush.msra.mxu0 0.0
    %2762 = vmatpush.msra.mxu0 %v2746
    %2763 = vmatpush.msra.mxu0 %v2745
    %2764 = vmatpush.msra.mxu0 %v2744
    %2765 = vmatpush.msra.mxu0 %v2743
    %2766 = vmatmul.f32.gmra.mxu0 %v2748
    %v2767 = vpop.f32.mrf.mxu0
    %v2768 = vadd.f32 0.0, %v2767
    %2769 = vdwg.mxu0
    %v2770 = vadd.f32 %v2741, %v2768
    %s2771 = scalar_lea.vmem %s67, 192
    %v2772 = vld [vmem:[%s2771] sm:$0xff]
    %v2773 = vld [vmem:[%s2771 + $0x8] sm:$0xff]
    %v2774 = vld [vmem:[%s2771 + $0x10] sm:$0xff]
    %v2775 = vld [vmem:[%s2771 + $0x18] sm:$0xff]
    %v2776 = vrot.slane %v2595, 6
    %v2777 = vsel %vm182, %v2776, 0
    %2779 = vmatpush.msra.mxu0 0.0
    %2780 = vmatpush.msra.mxu0 0.0
    %2781 = vmatpush.msra.mxu0 0.0
    %2782 = vmatpush.msra.mxu0 0.0
    %2783 = vmatpush.msra.mxu0 0.0
    %2784 = vmatpush.msra.mxu0 0.0
    %2785 = vmatpush.msra.mxu0 0.0
    %2786 = vmatpush.msra.mxu0 0.0
    %2787 = vmatpush.msra.mxu0 0.0
    %2788 = vmatpush.msra.mxu0 0.0
    %2789 = vmatpush.msra.mxu0 0.0
    %2790 = vmatpush.msra.mxu0 0.0
    %2791 = vmatpush.msra.mxu0 %v2775
    %2792 = vmatpush.msra.mxu0 %v2774
    %2793 = vmatpush.msra.mxu0 %v2773
    %2794 = vmatpush.msra.mxu0 %v2772
    %2795 = vmatmul.f32.gmra.mxu0 %v2777
    %v2796 = vpop.f32.mrf.mxu0
    %v2797 = vadd.f32 0.0, %v2796
    %2798 = vdwg.mxu0
    %v2799 = vadd.f32 %v2770, %v2797
    %s2800 = scalar_lea.vmem %s67, 224
    %v2801 = vld [vmem:[%s2800] sm:$0xff]
    %v2802 = vld [vmem:[%s2800 + $0x8] sm:$0xff]
    %v2803 = vld [vmem:[%s2800 + $0x10] sm:$0xff]
    %v2804 = vld [vmem:[%s2800 + $0x18] sm:$0xff]
    %v2805 = vrot.slane %v2595, 7
    %v2806 = vsel %vm182, %v2805, 0
    %2808 = vmatpush.msra.mxu0 0.0
    %2809 = vmatpush.msra.mxu0 0.0
    %2810 = vmatpush.msra.mxu0 0.0
    %2811 = vmatpush.msra.mxu0 0.0
    %2812 = vmatpush.msra.mxu0 0.0
    %2813 = vmatpush.msra.mxu0 0.0
    %2814 = vmatpush.msra.mxu0 0.0
    %2815 = vmatpush.msra.mxu0 0.0
    %2816 = vmatpush.msra.mxu0 0.0
    %2817 = vmatpush.msra.mxu0 0.0
    %2818 = vmatpush.msra.mxu0 0.0
    %2819 = vmatpush.msra.mxu0 0.0
    %2820 = vmatpush.msra.mxu0 %v2804
    %2821 = vmatpush.msra.mxu0 %v2803
    %2822 = vmatpush.msra.mxu0 %v2802
    %2823 = vmatpush.msra.mxu0 %v2801
    %2824 = vmatmul.f32.gmra.mxu0 %v2806
    %v2825 = vpop.f32.mrf.mxu0
    %v2826 = vadd.f32 0.0, %v2825
    %2827 = vdwg.mxu0
    %v2828 = vadd.f32 %v2799, %v2826
    %v2830 = vsel %vm182, %v2596, 0
    %2832 = vmatpush.msra.mxu0 0.0
    %2833 = vmatpush.msra.mxu0 0.0
    %2834 = vmatpush.msra.mxu0 0.0
    %2835 = vmatpush.msra.mxu0 0.0
    %2836 = vmatpush.msra.mxu0 0.0
    %2837 = vmatpush.msra.mxu0 0.0
    %2838 = vmatpush.msra.mxu0 0.0
    %2839 = vmatpush.msra.mxu0 0.0
    %2840 = vmatpush.msra.mxu0 0.0
    %2841 = vmatpush.msra.mxu0 0.0
    %2842 = vmatpush.msra.mxu0 0.0
    %2843 = vmatpush.msra.mxu0 0.0
    %2844 = vmatpush.msra.mxu0 %v2601
    %2845 = vmatpush.msra.mxu0 %v2600
    %2846 = vmatpush.msra.mxu0 %v2599
    %2847 = vmatpush.msra.mxu0 %v2598
    %2848 = vmatmul.f32.gmra.mxu0 %v2830
    %v2849 = vpop.f32.mrf.mxu0
    %v2850 = vadd.f32 0.0, %v2849
    %2851 = vdwg.mxu0
    %v2852 = vadd.f32 %v2597, %v2850
    %v2853 = vrot.slane %v2596, 1
    %v2854 = vsel %vm182, %v2853, 0
    %2856 = vmatpush.msra.mxu0 0.0
    %2857 = vmatpush.msra.mxu0 0.0
    %2858 = vmatpush.msra.mxu0 0.0
    %2859 = vmatpush.msra.mxu0 0.0
    %2860 = vmatpush.msra.mxu0 0.0
    %2861 = vmatpush.msra.mxu0 0.0
    %2862 = vmatpush.msra.mxu0 0.0
    %2863 = vmatpush.msra.mxu0 0.0
    %2864 = vmatpush.msra.mxu0 0.0
    %2865 = vmatpush.msra.mxu0 0.0
    %2866 = vmatpush.msra.mxu0 0.0
    %2867 = vmatpush.msra.mxu0 0.0
    %2868 = vmatpush.msra.mxu0 %v2630
    %2869 = vmatpush.msra.mxu0 %v2629
    %2870 = vmatpush.msra.mxu0 %v2628
    %2871 = vmatpush.msra.mxu0 %v2627
    %2872 = vmatmul.f32.gmra.mxu0 %v2854
    %v2873 = vpop.f32.mrf.mxu0
    %v2874 = vadd.f32 0.0, %v2873
    %2875 = vdwg.mxu0
    %v2876 = vadd.f32 %v2852, %v2874
    %v2877 = vrot.slane %v2596, 2
    %v2878 = vsel %vm182, %v2877, 0
    %2880 = vmatpush.msra.mxu0 0.0
    %2881 = vmatpush.msra.mxu0 0.0
    %2882 = vmatpush.msra.mxu0 0.0
    %2883 = vmatpush.msra.mxu0 0.0
    %2884 = vmatpush.msra.mxu0 0.0
    %2885 = vmatpush.msra.mxu0 0.0
    %2886 = vmatpush.msra.mxu0 0.0
    %2887 = vmatpush.msra.mxu0 0.0
    %2888 = vmatpush.msra.mxu0 0.0
    %2889 = vmatpush.msra.mxu0 0.0
    %2890 = vmatpush.msra.mxu0 0.0
    %2891 = vmatpush.msra.mxu0 0.0
    %2892 = vmatpush.msra.mxu0 %v2659
    %2893 = vmatpush.msra.mxu0 %v2658
    %2894 = vmatpush.msra.mxu0 %v2657
    %2895 = vmatpush.msra.mxu0 %v2656
    %2896 = vmatmul.f32.gmra.mxu0 %v2878
    %v2897 = vpop.f32.mrf.mxu0
    %v2898 = vadd.f32 0.0, %v2897
    %2899 = vdwg.mxu0
    %v2900 = vadd.f32 %v2876, %v2898
    %v2901 = vrot.slane %v2596, 3
    %v2902 = vsel %vm182, %v2901, 0
    %2904 = vmatpush.msra.mxu0 0.0
    %2905 = vmatpush.msra.mxu0 0.0
    %2906 = vmatpush.msra.mxu0 0.0
    %2907 = vmatpush.msra.mxu0 0.0
    %2908 = vmatpush.msra.mxu0 0.0
    %2909 = vmatpush.msra.mxu0 0.0
    %2910 = vmatpush.msra.mxu0 0.0
    %2911 = vmatpush.msra.mxu0 0.0
    %2912 = vmatpush.msra.mxu0 0.0
    %2913 = vmatpush.msra.mxu0 0.0
    %2914 = vmatpush.msra.mxu0 0.0
    %2915 = vmatpush.msra.mxu0 0.0
    %2916 = vmatpush.msra.mxu0 %v2688
    %2917 = vmatpush.msra.mxu0 %v2687
    %2918 = vmatpush.msra.mxu0 %v2686
    %2919 = vmatpush.msra.mxu0 %v2685
    %2920 = vmatmul.f32.gmra.mxu0 %v2902
    %v2921 = vpop.f32.mrf.mxu0
    %v2922 = vadd.f32 0.0, %v2921
    %2923 = vdwg.mxu0
    %v2924 = vadd.f32 %v2900, %v2922
    %v2925 = vrot.slane %v2596, 4
    %v2926 = vsel %vm182, %v2925, 0
    %2928 = vmatpush.msra.mxu0 0.0
    %2929 = vmatpush.msra.mxu0 0.0
    %2930 = vmatpush.msra.mxu0 0.0
    %2931 = vmatpush.msra.mxu0 0.0
    %2932 = vmatpush.msra.mxu0 0.0
    %2933 = vmatpush.msra.mxu0 0.0
    %2934 = vmatpush.msra.mxu0 0.0
    %2935 = vmatpush.msra.mxu0 0.0
    %2936 = vmatpush.msra.mxu0 0.0
    %2937 = vmatpush.msra.mxu0 0.0
    %2938 = vmatpush.msra.mxu0 0.0
    %2939 = vmatpush.msra.mxu0 0.0
    %2940 = vmatpush.msra.mxu0 %v2717
    %2941 = vmatpush.msra.mxu0 %v2716
    %2942 = vmatpush.msra.mxu0 %v2715
    %2943 = vmatpush.msra.mxu0 %v2714
    %2944 = vmatmul.f32.gmra.mxu0 %v2926
    %v2945 = vpop.f32.mrf.mxu0
    %v2946 = vadd.f32 0.0, %v2945
    %2947 = vdwg.mxu0
    %v2948 = vadd.f32 %v2924, %v2946
    %v2949 = vrot.slane %v2596, 5
    %v2950 = vsel %vm182, %v2949, 0
    %2952 = vmatpush.msra.mxu0 0.0
    %2953 = vmatpush.msra.mxu0 0.0
    %2954 = vmatpush.msra.mxu0 0.0
    %2955 = vmatpush.msra.mxu0 0.0
    %2956 = vmatpush.msra.mxu0 0.0
    %2957 = vmatpush.msra.mxu0 0.0
    %2958 = vmatpush.msra.mxu0 0.0
    %2959 = vmatpush.msra.mxu0 0.0
    %2960 = vmatpush.msra.mxu0 0.0
    %2961 = vmatpush.msra.mxu0 0.0
    %2962 = vmatpush.msra.mxu0 0.0
    %2963 = vmatpush.msra.mxu0 0.0
    %2964 = vmatpush.msra.mxu0 %v2746
    %2965 = vmatpush.msra.mxu0 %v2745
    %2966 = vmatpush.msra.mxu0 %v2744
    %2967 = vmatpush.msra.mxu0 %v2743
    %2968 = vmatmul.f32.gmra.mxu0 %v2950
    %v2969 = vpop.f32.mrf.mxu0
    %v2970 = vadd.f32 0.0, %v2969
    %2971 = vdwg.mxu0
    %v2972 = vadd.f32 %v2948, %v2970
    %v2973 = vrot.slane %v2596, 6
    %v2974 = vsel %vm182, %v2973, 0
    %2976 = vmatpush.msra.mxu0 0.0
    %2977 = vmatpush.msra.mxu0 0.0
    %2978 = vmatpush.msra.mxu0 0.0
    %2979 = vmatpush.msra.mxu0 0.0
    %2980 = vmatpush.msra.mxu0 0.0
    %2981 = vmatpush.msra.mxu0 0.0
    %2982 = vmatpush.msra.mxu0 0.0
    %2983 = vmatpush.msra.mxu0 0.0
    %2984 = vmatpush.msra.mxu0 0.0
    %2985 = vmatpush.msra.mxu0 0.0
    %2986 = vmatpush.msra.mxu0 0.0
    %2987 = vmatpush.msra.mxu0 0.0
    %2988 = vmatpush.msra.mxu0 %v2775
    %2989 = vmatpush.msra.mxu0 %v2774
    %2990 = vmatpush.msra.mxu0 %v2773
    %2991 = vmatpush.msra.mxu0 %v2772
    %2992 = vmatmul.f32.gmra.mxu0 %v2974
    %v2993 = vpop.f32.mrf.mxu0
    %v2994 = vadd.f32 0.0, %v2993
    %2995 = vdwg.mxu0
    %v2996 = vadd.f32 %v2972, %v2994
    %v2997 = vrot.slane %v2596, 7
    %v2998 = vsel %vm182, %v2997, 0
    %3000 = vmatpush.msra.mxu0 0.0
    %3001 = vmatpush.msra.mxu0 0.0
    %3002 = vmatpush.msra.mxu0 0.0
    %3003 = vmatpush.msra.mxu0 0.0
    %3004 = vmatpush.msra.mxu0 0.0
    %3005 = vmatpush.msra.mxu0 0.0
    %3006 = vmatpush.msra.mxu0 0.0
    %3007 = vmatpush.msra.mxu0 0.0
    %3008 = vmatpush.msra.mxu0 0.0
    %3009 = vmatpush.msra.mxu0 0.0
    %3010 = vmatpush.msra.mxu0 0.0
    %3011 = vmatpush.msra.mxu0 0.0
    %3012 = vmatpush.msra.mxu0 %v2804
    %3013 = vmatpush.msra.mxu0 %v2803
    %3014 = vmatpush.msra.mxu0 %v2802
    %3015 = vmatpush.msra.mxu0 %v2801
    %3016 = vmatmul.f32.gmra.mxu0 %v2998
    %v3017 = vpop.f32.mrf.mxu0
    %v3018 = vadd.f32 0.0, %v3017
    %3019 = vdwg.mxu0
    %v3020 = vadd.f32 %v2996, %v3018
    %v3022 = vperm.slane %v3020, 0
    %vm3024 = vcmask 1040384
    %v3025 = vsel %vm3024, %v2828, %v3022
    %v3026 = vmax.f32 %v3025, 0.0
    %v3027 = vld [vmem:[%s71] sm:$0xff]
    %v3028 = vld [vmem:[%s71 + $0x8] sm:$0xff]
    %v3029 = vld [vmem:[%s71 + $0x10] sm:$0xff]
    %v3030 = vld [vmem:[%s71 + $0x18] sm:$0xff]
    %v3031 = vld [vmem:[%s71 + $0x20] sm:$0xff]
    %v3032 = vld [vmem:[%s71 + $0x28] sm:$0xff]
    %v3033 = vld [vmem:[%s71 + $0x30] sm:$0xff]
    %v3034 = vld [vmem:[%s71 + $0x38] sm:$0xff]
    %v3035 = vld [vmem:[%s73] sm:$0x1]
    %v3037 = vperm.slane %v3035, 0
    %v3040 = vsel %vm1302, %v3026, 0
    %3042 = vmatpush.msra.mxu0 0.0
    %3043 = vmatpush.msra.mxu0 0.0
    %3044 = vmatpush.msra.mxu0 0.0
    %3045 = vmatpush.msra.mxu0 0.0
    %3046 = vmatpush.msra.mxu0 0.0
    %3047 = vmatpush.msra.mxu0 0.0
    %3048 = vmatpush.msra.mxu0 0.0
    %3049 = vmatpush.msra.mxu0 0.0
    %3050 = vmatpush.msra.mxu0 %v3034
    %3051 = vmatpush.msra.mxu0 %v3033
    %3052 = vmatpush.msra.mxu0 %v3032
    %3053 = vmatpush.msra.mxu0 %v3031
    %3054 = vmatpush.msra.mxu0 %v3030
    %3055 = vmatpush.msra.mxu0 %v3029
    %3056 = vmatpush.msra.mxu0 %v3028
    %3057 = vmatpush.msra.mxu0 %v3027
    %3058 = vmatmul.f32.gmra.mxu0 %v3040
    %v3059 = vpop.f32.mrf.mxu0
    %v3060 = vadd.f32 %v3037, %v3059
    %3061 = vdwg.mxu0
    %v3062 = vmax.f32 %v3060, 0.0
    %v3063 = vld [vmem:[%s75] sm:$0xff]
    %v3064 = vld [vmem:[%s75 + $0x8] sm:$0xff]
    %v3065 = vld [vmem:[%s75 + $0x10] sm:$0xff]
    %v3066 = vld [vmem:[%s75 + $0x18] sm:$0xff]
    %v3067 = vld [vmem:[%s77] sm:$0x1]
    %v3069 = vperm.slane %v3067, 0
    %v3072 = vsel %vm182, %v3062, 0
    %3074 = vmatpush.msra.mxu0 0.0
    %3075 = vmatpush.msra.mxu0 0.0
    %3076 = vmatpush.msra.mxu0 0.0
    %3077 = vmatpush.msra.mxu0 0.0
    %3078 = vmatpush.msra.mxu0 0.0
    %3079 = vmatpush.msra.mxu0 0.0
    %3080 = vmatpush.msra.mxu0 0.0
    %3081 = vmatpush.msra.mxu0 0.0
    %3082 = vmatpush.msra.mxu0 0.0
    %3083 = vmatpush.msra.mxu0 0.0
    %3084 = vmatpush.msra.mxu0 0.0
    %3085 = vmatpush.msra.mxu0 0.0
    %3086 = vmatpush.msra.mxu0 %v3066
    %3087 = vmatpush.msra.mxu0 %v3065
    %3088 = vmatpush.msra.mxu0 %v3064
    %3089 = vmatpush.msra.mxu0 %v3063
    %3090 = vmatmul.f32.gmra.mxu0 %v3072
    %v3091 = vpop.f32.mrf.mxu0
    %v3092 = vadd.f32 %v3069, %v3091
    %3093 = vdwg.mxu0
    %v3094 = vmax.f32 %v3092, 0.0
    %v3095 = vld [vmem:[%s79] sm:$0xff]
    %v3096 = vld [vmem:[%s79 + $0x8] sm:$0xff]
    %v3097 = vld [vmem:[%s79 + $0x10] sm:$0xff]
    %v3098 = vld [vmem:[%s79 + $0x18] sm:$0xff]
    %v3099 = vld [vmem:[%s81] sm:$0x1]
    %v3101 = vperm.slane %v3099, 0
    %v3104 = vsel %vm182, %v3094, 0
    %3106 = vmatpush.msra.mxu0 0.0
    %3107 = vmatpush.msra.mxu0 0.0
    %3108 = vmatpush.msra.mxu0 0.0
    %3109 = vmatpush.msra.mxu0 0.0
    %3110 = vmatpush.msra.mxu0 0.0
    %3111 = vmatpush.msra.mxu0 0.0
    %3112 = vmatpush.msra.mxu0 0.0
    %3113 = vmatpush.msra.mxu0 0.0
    %3114 = vmatpush.msra.mxu0 0.0
    %3115 = vmatpush.msra.mxu0 0.0
    %3116 = vmatpush.msra.mxu0 0.0
    %3117 = vmatpush.msra.mxu0 0.0
    %3118 = vmatpush.msra.mxu0 %v3098
    %3119 = vmatpush.msra.mxu0 %v3097
    %3120 = vmatpush.msra.mxu0 %v3096
    %3121 = vmatpush.msra.mxu0 %v3095
    %3122 = vmatmul.f32.gmra.mxu0 %v3104
    %v3123 = vpop.f32.mrf.mxu0
    %v3124 = vadd.f32 %v3101, %v3123
    %3125 = vdwg.mxu0
    %vm3126 = vcmask 123904
    %3127 = vst.msk [vmem:[#allocation2] sm:$0x3] %vm3126, %v3124
    // Predicated region
    $region166: #{transformer_encoder_v2_forward.1} parent=1 // pred_check
      _
    $region167: #{transformer_encoder_v2_forward.1} parent=1 // pred_check_branch
      %3129 = sbr.rel (0) target = $region169
    $region168: #{transformer_encoder_v2_forward.1} parent=1 // pred_region
      %3131 = vsyncadd [#allocation3], 0
      %s3133 = sshll.u32 [#allocation2], 4
      %s3134 = int_to_ptr.vmem [resolvable:$true] %s3133
      %s3135 = sshll.u32 %s83, 4
      %s3136 = int_to_ptr.hbm [resolvable:$true] %s3135
      %3138 = dma.vmem_to_hbm [thread:$0]  %s3134, 32, %s3136, [#allocation3]
    $region169: #{transformer_encoder_v2_forward.1} parent=1 // pred_fallthru
      _
    // Predicated region
    $region170: #{transformer_encoder_v2_forward.1} parent=1 // pred_check
      _
    $region171: #{transformer_encoder_v2_forward.1} parent=1 // pred_check_branch
      %3140 = sbr.rel (0) target = $region173
    $region172: #{transformer_encoder_v2_forward.1} parent=1 // pred_region
      %3142 = dma.done [#allocation3], 32
    $region173: #{transformer_encoder_v2_forward.1} parent=1 // pred_fallthru
      _
    %3143 = vsyncpa [#allocation3], 1

</llo_original>
